<compile_context>
chip_gen: v5e
topology: v5e:2x2
jax: 0.10.0
libtpu: 0.0.40
codegen_flags: <defaults>
</compile_context>

<pallas_src>
import functools

import jax
import jax.numpy as jnp
from jax.experimental import pallas as pl
from jax.experimental.pallas import tpu as pltpu

BN_EPS = 1e-5
LANE = 128
VMEM_LIMIT = 32 * 1024 * 1024   # fits the scoped-VMEM budget on v5e/v6e/v7x


def _round_up(v, m):
    return (v + m - 1) // m * m


# ---------------------------------------------------------------------------
# Kernel 1: 3x3 conv as 9 accumulating MXU matmuls over shifted slices of a
# padded NHWC slab, plus per-tile BN partial statistics (sum, sum_sq).
# ---------------------------------------------------------------------------
def _conv3x3_stats_kernel(x_ref, w_ref, conv_ref, stats_ref):
    hw, _ = conv_ref.shape
    hp, wp, cp = x_ref.shape
    h, w = hp - 2, wp - 2

    conv_ref[...] = jnp.zeros_like(conv_ref)
    for k in range(9):                       # static unroll: 9 shifted matmuls
        kh, kw = divmod(k, 3)
        slab = x_ref[kh:kh + h, kw:kw + w, :].reshape(hw, cp)
        conv_ref[...] += jnp.dot(slab, w_ref[k],
                                 preferred_element_type=jnp.float32)

    acc = conv_ref[...]
    stats_ref[...] = jnp.concatenate(
        [jnp.sum(acc, axis=0, keepdims=True),
         jnp.sum(acc * acc, axis=0, keepdims=True)], axis=0)


def _conv3x3_stats(x_pad, w_k, h, w):
    n, hp, wp, cp = x_pad.shape
    pp = w_k.shape[-1]
    hw = h * w
    flops = 2 * n * hw * 9 * cp * pp
    bytes_accessed = (x_pad.size * x_pad.dtype.itemsize
                      + w_k.size * w_k.dtype.itemsize
                      + n * hw * pp * 4 + n * 2 * pp * 4)
    return pl.pallas_call(
        _conv3x3_stats_kernel,
        out_shape=(jax.ShapeDtypeStruct((n, hw, pp), jnp.float32),
                   jax.ShapeDtypeStruct((n, 2, pp), jnp.float32)),
        grid_spec=pltpu.PrefetchScalarGridSpec(
            num_scalar_prefetch=0,
            grid=(n,),
            in_specs=[
                pl.BlockSpec((None, hp, wp, cp), lambda i: (i, 0, 0, 0)),
                pl.BlockSpec((9, cp, pp), lambda i: (0, 0, 0)),   # resident
            ],
            out_specs=(
                pl.BlockSpec((None, hw, pp), lambda i: (i, 0, 0)),
                pl.BlockSpec((None, 2, pp), lambda i: (i, 0, 0)),
            )),
        compiler_params=pltpu.CompilerParams(
            dimension_semantics=("parallel",),
            vmem_limit_bytes=VMEM_LIMIT),
        cost_estimate=pl.CostEstimate(flops=flops, transcendentals=0,
                                      bytes_accessed=bytes_accessed),
    )(x_pad, w_k)


# ---------------------------------------------------------------------------
# Kernel 2: elementwise BN-apply (+ optional residual) + ReLU6.
# ---------------------------------------------------------------------------
def _bn_relu6_kernel(conv_ref, scale_ref, shift_ref, out_ref):
    y = conv_ref[...] * scale_ref[...] + shift_ref[...]
    out_ref[...] = jnp.clip(y, 0.0, 6.0).astype(out_ref.dtype)


def _bn_add_relu6_kernel(conv_ref, res_ref, scale_ref, shift_ref, out_ref):
    y = conv_ref[...] * scale_ref[...] + shift_ref[...] + res_ref[...]
    out_ref[...] = jnp.clip(y, 0.0, 6.0).astype(out_ref.dtype)


def _bn_relu6(conv_raw, scale, shift, out_dtype):
    n, hw, pp = conv_raw.shape
    return pl.pallas_call(
        _bn_relu6_kernel,
        out_shape=jax.ShapeDtypeStruct((n, hw, pp), out_dtype),
        grid_spec=pltpu.PrefetchScalarGridSpec(
            num_scalar_prefetch=0, grid=(n,),
            in_specs=[pl.BlockSpec((None, hw, pp), lambda i: (i, 0, 0)),
                      pl.BlockSpec((1, pp), lambda i: (0, 0)),
                      pl.BlockSpec((1, pp), lambda i: (0, 0))],
            out_specs=pl.BlockSpec((None, hw, pp), lambda i: (i, 0, 0))),
        compiler_params=pltpu.CompilerParams(
            dimension_semantics=("parallel",),
            vmem_limit_bytes=VMEM_LIMIT),
    )(conv_raw, scale, shift)


def _bn_add_relu6(conv_raw, res, scale, shift, out_dtype):
    n, hw, pp = conv_raw.shape
    return pl.pallas_call(
        _bn_add_relu6_kernel,
        out_shape=jax.ShapeDtypeStruct((n, hw, pp), out_dtype),
        grid_spec=pltpu.PrefetchScalarGridSpec(
            num_scalar_prefetch=0, grid=(n,),
            in_specs=[pl.BlockSpec((None, hw, pp), lambda i: (i, 0, 0)),
                      pl.BlockSpec((None, hw, pp), lambda i: (i, 0, 0)),
                      pl.BlockSpec((1, pp), lambda i: (0, 0)),
                      pl.BlockSpec((1, pp), lambda i: (0, 0))],
            out_specs=pl.BlockSpec((None, hw, pp), lambda i: (i, 0, 0))),
        compiler_params=pltpu.CompilerParams(
            dimension_semantics=("parallel",),
            vmem_limit_bytes=VMEM_LIMIT),
    )(conv_raw, res, scale, shift)


# ---------------------------------------------------------------------------
# Tiny JAX glue: fold partial (sum, sum_sq) into per-channel scale/shift.
# ---------------------------------------------------------------------------
def _finalize_bn(stats, count, gamma_p, beta_p):
    s = jnp.sum(stats[:, 0, :], axis=0)
    ss = jnp.sum(stats[:, 1, :], axis=0)
    mean = s / count
    var = jnp.maximum(ss / count - mean * mean, 0.0)   # biased var (training BN)
    scale = gamma_p * jax.lax.rsqrt(var + BN_EPS)
    shift = beta_p - mean * scale
    return scale.reshape(1, -1), shift.reshape(1, -1)


def _prep_weight(w_oihw, cp, pp, dtype):
    # OIHW (P, C, 3, 3) -> (9, Cp, Pp) with [k=kh*3+kw, c, p] = w[p, c, kh, kw]
    p, c, kh, kw = w_oihw.shape
    wk = jnp.transpose(w_oihw, (2, 3, 1, 0)).reshape(kh * kw, c, p)
    wk = jnp.pad(wk, ((0, 0), (0, cp - c), (0, pp - p)))
    return wk.astype(dtype)


# ---------------------------------------------------------------------------
# BasicBlock forward
# ---------------------------------------------------------------------------
@functools.partial(jax.jit, static_argnames=("stride", "mxu_dtype"))
def basic_block_forward(x, params, temp=1.0, stride=1, mxu_dtype=jnp.bfloat16):
    """BasicBlock.forward(x, temp).  x: (N, C, H, W) NCHW float32."""
    del temp   # TODO(synk): BitConv2d Nbits quantization not in the reference.
    if stride != 1:
        # TODO(synk): stride>1 / downsample path not implemented (spec uses None).
        raise NotImplementedError("stride != 1 requires a downsample module")
    n, c, h, w = x.shape
    planes = params["w1"].shape[0]
    assert params["w1"].shape[1] == c
    assert params["w2"].shape == (planes, planes, 3, 3)
    assert planes == c, "downsample=None requires inplanes == planes"

    cp = _round_up(c, LANE)        # lane-dense contraction axis
    pp = _round_up(planes, LANE)   # lane-dense output-channel (lane) axis
    hw = h * w

    x_nhwc = jnp.transpose(x, (0, 2, 3, 1))
    # residual, channel-padded, rows flattened the same way as the conv output
    res = jnp.pad(x_nhwc, ((0, 0), (0, 0), (0, 0), (0, pp - c)))
    res = res.reshape(n, hw, pp).astype(jnp.float32)
    # conv1 input: +1 spatial halo, channel pad, bf16 for the MXU
    x_pad = jnp.pad(x_nhwc, ((0, 0), (1, 1), (1, 1), (0, cp - c))).astype(mxu_dtype)

    w1k = _prep_weight(params["w1"], cp, pp, mxu_dtype)
    w2k = _prep_weight(params["w2"], pp, pp, mxu_dtype)
    g1 = jnp.pad(params["gamma1"].astype(jnp.float32), (0, pp - planes))
    b1 = jnp.pad(params["beta1"].astype(jnp.float32), (0, pp - planes))
    g2 = jnp.pad(params["gamma2"].astype(jnp.float32), (0, pp - planes))
    b2 = jnp.pad(params["beta2"].astype(jnp.float32), (0, pp - planes))

    # stage 1: conv1 -> bn1 (batch stats) -> relu6
    conv1, stats1 = _conv3x3_stats(x_pad, w1k, h, w)
    scale1, shift1 = _finalize_bn(stats1, float(n * hw), g1, b1)
    act1 = _bn_relu6(conv1, scale1, shift1, out_dtype=mxu_dtype)       # (n, hw, pp)

    # stage 2: conv2 -> bn2 -> + residual -> relu6   (stays NHWC, no transposes)
    act1_pad = jnp.pad(act1.reshape(n, h, w, pp), ((0, 0), (1, 1), (1, 1), (0, 0)))
    conv2, stats2 = _conv3x3_stats(act1_pad, w2k, h, w)
    scale2, shift2 = _finalize_bn(stats2, float(n * hw), g2, b2)
    out = _bn_add_relu6(conv2, res, scale2, shift2, out_dtype=x.dtype)  # (n, hw, pp)

    out = out.reshape(n, h, w, pp)[..., :planes]
    return jnp.transpose(out, (0, 3, 1, 2))


# ---------------------------------------------------------------------------
# Pure-JAX reference. `mxu_dtype` mimics the kernel's reduced-precision matmul
# inputs and bf16 inter-stage activation storage; BN/ReLU6 math is f32 in both.
# ---------------------------------------------------------------------------
def _reference_forward(x, params, mxu_dtype=jnp.float32):
    def conv(a, w_):
        return jax.lax.conv_general_dilated(
            a.astype(mxu_dtype), w_.astype(mxu_dtype),
            window_strides=(1, 1), padding=((1, 1), (1, 1)),
            dimension_numbers=("NCHW", "OIHW", "NCHW"),
            preferred_element_type=jnp.float32)

    def bn(y, g, b):
        mean = jnp.mean(y, axis=(0, 2, 3), keepdims=True)
        var = jnp.mean((y - mean) ** 2, axis=(0, 2, 3), keepdims=True)
        return (g[None, :, None, None] * (y - mean) * jax.lax.rsqrt(var + BN_EPS)
                + b[None, :, None, None])

    relu6 = lambda v: jnp.clip(v, 0.0, 6.0)
    a1 = relu6(bn(conv(x, params["w1"]), params["gamma1"], params["beta1"]))
    a1 = a1.astype(mxu_dtype).astype(jnp.float32)
    out = bn(conv(a1, params["w2"]), params["gamma2"], params["beta2"])
    return relu6(out + x)


# ---------------------------------------------------------------------------
if __name__ == "__main__":
    # Small shapes: batch=2, inplanes=planes=8, spatial=16x16, stride=1.
    n, c, h, w = 2, 8, 16, 16
    planes = c   # downsample=None => planes must equal inplanes

    key = jax.random.PRNGKey(0)
    kx, kw1, kw2 = jax.random.split(key, 3)
    x = jax.random.normal(kx, (n, c, h, w), dtype=jnp.float32)
    params = {
        "w1": jax.random.normal(kw1, (planes, c, 3, 3), jnp.float32)
              * (2.0 / (c * 9)) ** 0.5,
        "w2": jax.random.normal(kw2, (planes, planes, 3, 3), jnp.float32)
              * (2.0 / (planes * 9)) ** 0.5,
        "gamma1": jnp.ones((planes,), jnp.float32),
        "beta1": jnp.zeros((planes,), jnp.float32),
        "gamma2": jnp.ones((planes,), jnp.float32),
        "beta2": jnp.zeros((planes,), jnp.float32),
    }

    out = basic_block_forward(x, params, temp=1.0, stride=1)
    out = jax.block_until_ready(out)
    assert out.shape == (n, planes, h, w), out.shape

    ref = jax.block_until_ready(
        _reference_forward(x, params, mxu_dtype=jnp.bfloat16))
    max_err = float(jnp.max(jnp.abs(out - ref)))
    assert jnp.allclose(out, ref, atol=3e-2, rtol=3e-2), max_err

    print("KERNEL_OK")
</pallas_src>

<mosaic_0001>
module attributes {stable_mosaic.version = 11 : i64} {
  func.func @_conv3x3_stats_kernel(%arg0: i32, %arg1: memref<1x18x18x128xbf16, #tpu.memory_space<vmem>>, %arg2: memref<9x128x128xbf16, #tpu.memory_space<vmem>>, %arg3: memref<1x256x128xf32, #tpu.memory_space<vmem>>, %arg4: memref<1x2x128xf32, #tpu.memory_space<vmem>>) attributes {dimension_semantics = [#tpu.dimension_semantics<parallel>], iteration_bounds = array<i64: 2>, scalar_prefetch = 0 : i64, scratch_operands = 0 : i64, tpu.core_type = #tpu.core_type<tc>, window_params = [{transform_indices = @transform_0, window_bounds = array<i64: 1, 18, 18, 128>}, {pipeline_mode = #tpu.pipeline_mode<synchronous>, transform_indices = @transform_1, window_bounds = array<i64: 9, 128, 128>}, {transform_indices = @transform_2, window_bounds = array<i64: 1, 256, 128>}, {transform_indices = @transform_3, window_bounds = array<i64: 1, 2, 128>}]} {
    %cst = arith.constant 0.000000e+00 : f32
    %0 = vector.broadcast %cst : f32 to vector<256x128xf32>
    %c0 = arith.constant 0 : index
    %c0_0 = arith.constant 0 : index
    %c0_1 = arith.constant 0 : index
    %1 = vector.load %arg3[%c0, %c0_0, %c0_1] : memref<1x256x128xf32, #tpu.memory_space<vmem>>, vector<1x256x128xf32>
    %2 = vector.shape_cast %1 : vector<1x256x128xf32> to vector<256x128xf32>
    %3 = vector.shape_cast %0 : vector<256x128xf32> to vector<1x256x128xf32>
    tpu.vector_store %arg3[%c0, %c0_0, %c0_1], %3 {strides = array<i32>} : memref<1x256x128xf32, #tpu.memory_space<vmem>>, vector<1x256x128xf32>,
    %c0_2 = arith.constant 0 : index
    %c0_3 = arith.constant 0 : index
    %c0_4 = arith.constant 0 : index
    %c0_5 = arith.constant 0 : index
    %4 = vector.load %arg1[%c0_2, %c0_3, %c0_4, %c0_5] : memref<1x18x18x128xbf16, #tpu.memory_space<vmem>>, vector<1x16x16x128xbf16>
    %5 = vector.shape_cast %4 : vector<1x16x16x128xbf16> to vector<16x16x128xbf16>
    %6 = vector.shape_cast %5 : vector<16x16x128xbf16> to vector<256x128xbf16>
    %c0_6 = arith.constant 0 : index
    %c0_7 = arith.constant 0 : index
    %c0_8 = arith.constant 0 : index
    %7 = vector.load %arg3[%c0_6, %c0_7, %c0_8] : memref<1x256x128xf32, #tpu.memory_space<vmem>>, vector<1x256x128xf32>
    %8 = vector.shape_cast %7 : vector<1x256x128xf32> to vector<256x128xf32>
    %c0_9 = arith.constant 0 : index
    %c0_10 = arith.constant 0 : index
    %c0_11 = arith.constant 0 : index
    %9 = vector.load %arg2[%c0_9, %c0_10, %c0_11] : memref<9x128x128xbf16, #tpu.memory_space<vmem>>, vector<1x128x128xbf16>
    %10 = vector.shape_cast %9 : vector<1x128x128xbf16> to vector<128x128xbf16>
    %cst_12 = arith.constant dense<0.000000e+00> : vector<256x128xf32>
    %11 = tpu.matmul %6, %10, %cst_12 {dimension_numbers = #tpu.dot_dimension_numbers<[1], [0], [0], [1], [0, 0, 1, 1], [], []>} : vector<256x128xbf16>, vector<128x128xbf16>, vector<256x128xf32> -> vector<256x128xf32>
    %12 = arith.addf %8, %11 : vector<256x128xf32>
    %c0_13 = arith.constant 0 : index
    %c0_14 = arith.constant 0 : index
    %c0_15 = arith.constant 0 : index
    %13 = vector.load %arg3[%c0_13, %c0_14, %c0_15] : memref<1x256x128xf32, #tpu.memory_space<vmem>>, vector<1x256x128xf32>
    %14 = vector.shape_cast %13 : vector<1x256x128xf32> to vector<256x128xf32>
    %15 = vector.shape_cast %12 : vector<256x128xf32> to vector<1x256x128xf32>
    tpu.vector_store %arg3[%c0_13, %c0_14, %c0_15], %15 {strides = array<i32>} : memref<1x256x128xf32, #tpu.memory_space<vmem>>, vector<1x256x128xf32>,
    %c0_16 = arith.constant 0 : index
    %c0_17 = arith.constant 0 : index
    %c1 = arith.constant 1 : index
    %c0_18 = arith.constant 0 : index
    %16 = vector.load %arg1[%c0_16, %c0_17, %c1, %c0_18] : memref<1x18x18x128xbf16, #tpu.memory_space<vmem>>, vector<1x16x16x128xbf16>
    %17 = vector.shape_cast %16 : vector<1x16x16x128xbf16> to vector<16x16x128xbf16>
    %18 = vector.shape_cast %17 : vector<16x16x128xbf16> to vector<256x128xbf16>
    %c0_19 = arith.constant 0 : index
    %c0_20 = arith.constant 0 : index
    %c0_21 = arith.constant 0 : index
    %19 = vector.load %arg3[%c0_19, %c0_20, %c0_21] : memref<1x256x128xf32, #tpu.memory_space<vmem>>, vector<1x256x128xf32>
    %20 = vector.shape_cast %19 : vector<1x256x128xf32> to vector<256x128xf32>
    %c1_22 = arith.constant 1 : index
    %c0_23 = arith.constant 0 : index
    %c0_24 = arith.constant 0 : index
    %21 = vector.load %arg2[%c1_22, %c0_23, %c0_24] : memref<9x128x128xbf16, #tpu.memory_space<vmem>>, vector<1x128x128xbf16>
    %22 = vector.shape_cast %21 : vector<1x128x128xbf16> to vector<128x128xbf16>
    %cst_25 = arith.constant dense<0.000000e+00> : vector<256x128xf32>
    %23 = tpu.matmul %18, %22, %cst_25 {dimension_numbers = #tpu.dot_dimension_numbers<[1], [0], [0], [1], [0, 0, 1, 1], [], []>} : vector<256x128xbf16>, vector<128x128xbf16>, vector<256x128xf32> -> vector<256x128xf32>
    %24 = arith.addf %20, %23 : vector<256x128xf32>
    %c0_26 = arith.constant 0 : index
    %c0_27 = arith.constant 0 : index
    %c0_28 = arith.constant 0 : index
    %25 = vector.load %arg3[%c0_26, %c0_27, %c0_28] : memref<1x256x128xf32, #tpu.memory_space<vmem>>, vector<1x256x128xf32>
    %26 = vector.shape_cast %25 : vector<1x256x128xf32> to vector<256x128xf32>
    %27 = vector.shape_cast %24 : vector<256x128xf32> to vector<1x256x128xf32>
    tpu.vector_store %arg3[%c0_26, %c0_27, %c0_28], %27 {strides = array<i32>} : memref<1x256x128xf32, #tpu.memory_space<vmem>>, vector<1x256x128xf32>,
    %c0_29 = arith.constant 0 : index
    %c0_30 = arith.constant 0 : index
    %c2 = arith.constant 2 : index
    %c0_31 = arith.constant 0 : index
    %28 = vector.load %arg1[%c0_29, %c0_30, %c2, %c0_31] : memref<1x18x18x128xbf16, #tpu.memory_space<vmem>>, vector<1x16x16x128xbf16>
    %29 = vector.shape_cast %28 : vector<1x16x16x128xbf16> to vector<16x16x128xbf16>
    %30 = vector.shape_cast %29 : vector<16x16x128xbf16> to vector<256x128xbf16>
    %c0_32 = arith.constant 0 : index
    %c0_33 = arith.constant 0 : index
    %c0_34 = arith.constant 0 : index
    %31 = vector.load %arg3[%c0_32, %c0_33, %c0_34] : memref<1x256x128xf32, #tpu.memory_space<vmem>>, vector<1x256x128xf32>
    %32 = vector.shape_cast %31 : vector<1x256x128xf32> to vector<256x128xf32>
    %c2_35 = arith.constant 2 : index
    %c0_36 = arith.constant 0 : index
    %c0_37 = arith.constant 0 : index
    %33 = vector.load %arg2[%c2_35, %c0_36, %c0_37] : memref<9x128x128xbf16, #tpu.memory_space<vmem>>, vector<1x128x128xbf16>
    %34 = vector.shape_cast %33 : vector<1x128x128xbf16> to vector<128x128xbf16>
    %cst_38 = arith.constant dense<0.000000e+00> : vector<256x128xf32>
    %35 = tpu.matmul %30, %34, %cst_38 {dimension_numbers = #tpu.dot_dimension_numbers<[1], [0], [0], [1], [0, 0, 1, 1], [], []>} : vector<256x128xbf16>, vector<128x128xbf16>, vector<256x128xf32> -> vector<256x128xf32>
    %36 = arith.addf %32, %35 : vector<256x128xf32>
    %c0_39 = arith.constant 0 : index
    %c0_40 = arith.constant 0 : index
    %c0_41 = arith.constant 0 : index
    %37 = vector.load %arg3[%c0_39, %c0_40, %c0_41] : memref<1x256x128xf32, #tpu.memory_space<vmem>>, vector<1x256x128xf32>
    %38 = vector.shape_cast %37 : vector<1x256x128xf32> to vector<256x128xf32>
    %39 = vector.shape_cast %36 : vector<256x128xf32> to vector<1x256x128xf32>
    tpu.vector_store %arg3[%c0_39, %c0_40, %c0_41], %39 {strides = array<i32>} : memref<1x256x128xf32, #tpu.memory_space<vmem>>, vector<1x256x128xf32>,
    %c0_42 = arith.constant 0 : index
    %c1_43 = arith.constant 1 : index
    %c0_44 = arith.constant 0 : index
    %c0_45 = arith.constant 0 : index
    %40 = vector.load %arg1[%c0_42, %c1_43, %c0_44, %c0_45] : memref<1x18x18x128xbf16, #tpu.memory_space<vmem>>, vector<1x16x16x128xbf16>
    %41 = vector.shape_cast %40 : vector<1x16x16x128xbf16> to vector<16x16x128xbf16>
    %42 = vector.shape_cast %41 : vector<16x16x128xbf16> to vector<256x128xbf16>
    %c0_46 = arith.constant 0 : index
    %c0_47 = arith.constant 0 : index
    %c0_48 = arith.constant 0 : index
    %43 = vector.load %arg3[%c0_46, %c0_47, %c0_48] : memref<1x256x128xf32, #tpu.memory_space<vmem>>, vector<1x256x128xf32>
    %44 = vector.shape_cast %43 : vector<1x256x128xf32> to vector<256x128xf32>
    %c3 = arith.constant 3 : index
    %c0_49 = arith.constant 0 : index
    %c0_50 = arith.constant 0 : index
    %45 = vector.load %arg2[%c3, %c0_49, %c0_50] : memref<9x128x128xbf16, #tpu.memory_space<vmem>>, vector<1x128x128xbf16>
    %46 = vector.shape_cast %45 : vector<1x128x128xbf16> to vector<128x128xbf16>
    %cst_51 = arith.constant dense<0.000000e+00> : vector<256x128xf32>
    %47 = tpu.matmul %42, %46, %cst_51 {dimension_numbers = #tpu.dot_dimension_numbers<[1], [0], [0], [1], [0, 0, 1, 1], [], []>} : vector<256x128xbf16>, vector<128x128xbf16>, vector<256x128xf32> -> vector<256x128xf32>
    %48 = arith.addf %44, %47 : vector<256x128xf32>
    %c0_52 = arith.constant 0 : index
    %c0_53 = arith.constant 0 : index
    %c0_54 = arith.constant 0 : index
    %49 = vector.load %arg3[%c0_52, %c0_53, %c0_54] : memref<1x256x128xf32, #tpu.memory_space<vmem>>, vector<1x256x128xf32>
    %50 = vector.shape_cast %49 : vector<1x256x128xf32> to vector<256x128xf32>
    %51 = vector.shape_cast %48 : vector<256x128xf32> to vector<1x256x128xf32>
    tpu.vector_store %arg3[%c0_52, %c0_53, %c0_54], %51 {strides = array<i32>} : memref<1x256x128xf32, #tpu.memory_space<vmem>>, vector<1x256x128xf32>,
    %c0_55 = arith.constant 0 : index
    %c1_56 = arith.constant 1 : index
    %c1_57 = arith.constant 1 : index
    %c0_58 = arith.constant 0 : index
    %52 = vector.load %arg1[%c0_55, %c1_56, %c1_57, %c0_58] : memref<1x18x18x128xbf16, #tpu.memory_space<vmem>>, vector<1x16x16x128xbf16>
    %53 = vector.shape_cast %52 : vector<1x16x16x128xbf16> to vector<16x16x128xbf16>
    %54 = vector.shape_cast %53 : vector<16x16x128xbf16> to vector<256x128xbf16>
    %c0_59 = arith.constant 0 : index
    %c0_60 = arith.constant 0 : index
    %c0_61 = arith.constant 0 : index
    %55 = vector.load %arg3[%c0_59, %c0_60, %c0_61] : memref<1x256x128xf32, #tpu.memory_space<vmem>>, vector<1x256x128xf32>
    %56 = vector.shape_cast %55 : vector<1x256x128xf32> to vector<256x128xf32>
    %c4 = arith.constant 4 : index
    %c0_62 = arith.constant 0 : index
    %c0_63 = arith.constant 0 : index
    %57 = vector.load %arg2[%c4, %c0_62, %c0_63] : memref<9x128x128xbf16, #tpu.memory_space<vmem>>, vector<1x128x128xbf16>
    %58 = vector.shape_cast %57 : vector<1x128x128xbf16> to vector<128x128xbf16>
    %cst_64 = arith.constant dense<0.000000e+00> : vector<256x128xf32>
    %59 = tpu.matmul %54, %58, %cst_64 {dimension_numbers = #tpu.dot_dimension_numbers<[1], [0], [0], [1], [0, 0, 1, 1], [], []>} : vector<256x128xbf16>, vector<128x128xbf16>, vector<256x128xf32> -> vector<256x128xf32>
    %60 = arith.addf %56, %59 : vector<256x128xf32>
    %c0_65 = arith.constant 0 : index
    %c0_66 = arith.constant 0 : index
    %c0_67 = arith.constant 0 : index
    %61 = vector.load %arg3[%c0_65, %c0_66, %c0_67] : memref<1x256x128xf32, #tpu.memory_space<vmem>>, vector<1x256x128xf32>
    %62 = vector.shape_cast %61 : vector<1x256x128xf32> to vector<256x128xf32>
    %63 = vector.shape_cast %60 : vector<256x128xf32> to vector<1x256x128xf32>
    tpu.vector_store %arg3[%c0_65, %c0_66, %c0_67], %63 {strides = array<i32>} : memref<1x256x128xf32, #tpu.memory_space<vmem>>, vector<1x256x128xf32>,
    %c0_68 = arith.constant 0 : index
    %c1_69 = arith.constant 1 : index
    %c2_70 = arith.constant 2 : index
    %c0_71 = arith.constant 0 : index
    %64 = vector.load %arg1[%c0_68, %c1_69, %c2_70, %c0_71] : memref<1x18x18x128xbf16, #tpu.memory_space<vmem>>, vector<1x16x16x128xbf16>
    %65 = vector.shape_cast %64 : vector<1x16x16x128xbf16> to vector<16x16x128xbf16>
    %66 = vector.shape_cast %65 : vector<16x16x128xbf16> to vector<256x128xbf16>
    %c0_72 = arith.constant 0 : index
    %c0_73 = arith.constant 0 : index
    %c0_74 = arith.constant 0 : index
    %67 = vector.load %arg3[%c0_72, %c0_73, %c0_74] : memref<1x256x128xf32, #tpu.memory_space<vmem>>, vector<1x256x128xf32>
    %68 = vector.shape_cast %67 : vector<1x256x128xf32> to vector<256x128xf32>
    %c5 = arith.constant 5 : index
    %c0_75 = arith.constant 0 : index
    %c0_76 = arith.constant 0 : index
    %69 = vector.load %arg2[%c5, %c0_75, %c0_76] : memref<9x128x128xbf16, #tpu.memory_space<vmem>>, vector<1x128x128xbf16>
    %70 = vector.shape_cast %69 : vector<1x128x128xbf16> to vector<128x128xbf16>
    %cst_77 = arith.constant dense<0.000000e+00> : vector<256x128xf32>
    %71 = tpu.matmul %66, %70, %cst_77 {dimension_numbers = #tpu.dot_dimension_numbers<[1], [0], [0], [1], [0, 0, 1, 1], [], []>} : vector<256x128xbf16>, vector<128x128xbf16>, vector<256x128xf32> -> vector<256x128xf32>
    %72 = arith.addf %68, %71 : vector<256x128xf32>
    %c0_78 = arith.constant 0 : index
    %c0_79 = arith.constant 0 : index
    %c0_80 = arith.constant 0 : index
    %73 = vector.load %arg3[%c0_78, %c0_79, %c0_80] : memref<1x256x128xf32, #tpu.memory_space<vmem>>, vector<1x256x128xf32>
    %74 = vector.shape_cast %73 : vector<1x256x128xf32> to vector<256x128xf32>
    %75 = vector.shape_cast %72 : vector<256x128xf32> to vector<1x256x128xf32>
    tpu.vector_store %arg3[%c0_78, %c0_79, %c0_80], %75 {strides = array<i32>} : memref<1x256x128xf32, #tpu.memory_space<vmem>>, vector<1x256x128xf32>,
    %c0_81 = arith.constant 0 : index
    %c2_82 = arith.constant 2 : index
    %c0_83 = arith.constant 0 : index
    %c0_84 = arith.constant 0 : index
    %76 = vector.load %arg1[%c0_81, %c2_82, %c0_83, %c0_84] : memref<1x18x18x128xbf16, #tpu.memory_space<vmem>>, vector<1x16x16x128xbf16>
    %77 = vector.shape_cast %76 : vector<1x16x16x128xbf16> to vector<16x16x128xbf16>
    %78 = vector.shape_cast %77 : vector<16x16x128xbf16> to vector<256x128xbf16>
    %c0_85 = arith.constant 0 : index
    %c0_86 = arith.constant 0 : index
    %c0_87 = arith.constant 0 : index
    %79 = vector.load %arg3[%c0_85, %c0_86, %c0_87] : memref<1x256x128xf32, #tpu.memory_space<vmem>>, vector<1x256x128xf32>
    %80 = vector.shape_cast %79 : vector<1x256x128xf32> to vector<256x128xf32>
    %c6 = arith.constant 6 : index
    %c0_88 = arith.constant 0 : index
    %c0_89 = arith.constant 0 : index
    %81 = vector.load %arg2[%c6, %c0_88, %c0_89] : memref<9x128x128xbf16, #tpu.memory_space<vmem>>, vector<1x128x128xbf16>
    %82 = vector.shape_cast %81 : vector<1x128x128xbf16> to vector<128x128xbf16>
    %cst_90 = arith.constant dense<0.000000e+00> : vector<256x128xf32>
    %83 = tpu.matmul %78, %82, %cst_90 {dimension_numbers = #tpu.dot_dimension_numbers<[1], [0], [0], [1], [0, 0, 1, 1], [], []>} : vector<256x128xbf16>, vector<128x128xbf16>, vector<256x128xf32> -> vector<256x128xf32>
    %84 = arith.addf %80, %83 : vector<256x128xf32>
    %c0_91 = arith.constant 0 : index
    %c0_92 = arith.constant 0 : index
    %c0_93 = arith.constant 0 : index
    %85 = vector.load %arg3[%c0_91, %c0_92, %c0_93] : memref<1x256x128xf32, #tpu.memory_space<vmem>>, vector<1x256x128xf32>
    %86 = vector.shape_cast %85 : vector<1x256x128xf32> to vector<256x128xf32>
    %87 = vector.shape_cast %84 : vector<256x128xf32> to vector<1x256x128xf32>
    tpu.vector_store %arg3[%c0_91, %c0_92, %c0_93], %87 {strides = array<i32>} : memref<1x256x128xf32, #tpu.memory_space<vmem>>, vector<1x256x128xf32>,
    %c0_94 = arith.constant 0 : index
    %c2_95 = arith.constant 2 : index
    %c1_96 = arith.constant 1 : index
    %c0_97 = arith.constant 0 : index
    %88 = vector.load %arg1[%c0_94, %c2_95, %c1_96, %c0_97] : memref<1x18x18x128xbf16, #tpu.memory_space<vmem>>, vector<1x16x16x128xbf16>
    %89 = vector.shape_cast %88 : vector<1x16x16x128xbf16> to vector<16x16x128xbf16>
    %90 = vector.shape_cast %89 : vector<16x16x128xbf16> to vector<256x128xbf16>
    %c0_98 = arith.constant 0 : index
    %c0_99 = arith.constant 0 : index
    %c0_100 = arith.constant 0 : index
    %91 = vector.load %arg3[%c0_98, %c0_99, %c0_100] : memref<1x256x128xf32, #tpu.memory_space<vmem>>, vector<1x256x128xf32>
    %92 = vector.shape_cast %91 : vector<1x256x128xf32> to vector<256x128xf32>
    %c7 = arith.constant 7 : index
    %c0_101 = arith.constant 0 : index
    %c0_102 = arith.constant 0 : index
    %93 = vector.load %arg2[%c7, %c0_101, %c0_102] : memref<9x128x128xbf16, #tpu.memory_space<vmem>>, vector<1x128x128xbf16>
    %94 = vector.shape_cast %93 : vector<1x128x128xbf16> to vector<128x128xbf16>
    %cst_103 = arith.constant dense<0.000000e+00> : vector<256x128xf32>
    %95 = tpu.matmul %90, %94, %cst_103 {dimension_numbers = #tpu.dot_dimension_numbers<[1], [0], [0], [1], [0, 0, 1, 1], [], []>} : vector<256x128xbf16>, vector<128x128xbf16>, vector<256x128xf32> -> vector<256x128xf32>
    %96 = arith.addf %92, %95 : vector<256x128xf32>
    %c0_104 = arith.constant 0 : index
    %c0_105 = arith.constant 0 : index
    %c0_106 = arith.constant 0 : index
    %97 = vector.load %arg3[%c0_104, %c0_105, %c0_106] : memref<1x256x128xf32, #tpu.memory_space<vmem>>, vector<1x256x128xf32>
    %98 = vector.shape_cast %97 : vector<1x256x128xf32> to vector<256x128xf32>
    %99 = vector.shape_cast %96 : vector<256x128xf32> to vector<1x256x128xf32>
    tpu.vector_store %arg3[%c0_104, %c0_105, %c0_106], %99 {strides = array<i32>} : memref<1x256x128xf32, #tpu.memory_space<vmem>>, vector<1x256x128xf32>,
    %c0_107 = arith.constant 0 : index
    %c2_108 = arith.constant 2 : index
    %c2_109 = arith.constant 2 : index
    %c0_110 = arith.constant 0 : index
    %100 = vector.load %arg1[%c0_107, %c2_108, %c2_109, %c0_110] : memref<1x18x18x128xbf16, #tpu.memory_space<vmem>>, vector<1x16x16x128xbf16>
    %101 = vector.shape_cast %100 : vector<1x16x16x128xbf16> to vector<16x16x128xbf16>
    %102 = vector.shape_cast %101 : vector<16x16x128xbf16> to vector<256x128xbf16>
    %c0_111 = arith.constant 0 : index
    %c0_112 = arith.constant 0 : index
    %c0_113 = arith.constant 0 : index
    %103 = vector.load %arg3[%c0_111, %c0_112, %c0_113] : memref<1x256x128xf32, #tpu.memory_space<vmem>>, vector<1x256x128xf32>
    %104 = vector.shape_cast %103 : vector<1x256x128xf32> to vector<256x128xf32>
    %c8 = arith.constant 8 : index
    %c0_114 = arith.constant 0 : index
    %c0_115 = arith.constant 0 : index
    %105 = vector.load %arg2[%c8, %c0_114, %c0_115] : memref<9x128x128xbf16, #tpu.memory_space<vmem>>, vector<1x128x128xbf16>
    %106 = vector.shape_cast %105 : vector<1x128x128xbf16> to vector<128x128xbf16>
    %cst_116 = arith.constant dense<0.000000e+00> : vector<256x128xf32>
    %107 = tpu.matmul %102, %106, %cst_116 {dimension_numbers = #tpu.dot_dimension_numbers<[1], [0], [0], [1], [0, 0, 1, 1], [], []>} : vector<256x128xbf16>, vector<128x128xbf16>, vector<256x128xf32> -> vector<256x128xf32>
    %108 = arith.addf %104, %107 : vector<256x128xf32>
    %c0_117 = arith.constant 0 : index
    %c0_118 = arith.constant 0 : index
    %c0_119 = arith.constant 0 : index
    %109 = vector.load %arg3[%c0_117, %c0_118, %c0_119] : memref<1x256x128xf32, #tpu.memory_space<vmem>>, vector<1x256x128xf32>
    %110 = vector.shape_cast %109 : vector<1x256x128xf32> to vector<256x128xf32>
    %111 = vector.shape_cast %108 : vector<256x128xf32> to vector<1x256x128xf32>
    tpu.vector_store %arg3[%c0_117, %c0_118, %c0_119], %111 {strides = array<i32>} : memref<1x256x128xf32, #tpu.memory_space<vmem>>, vector<1x256x128xf32>,
    %c0_120 = arith.constant 0 : index
    %c0_121 = arith.constant 0 : index
    %c0_122 = arith.constant 0 : index
    %112 = vector.load %arg3[%c0_120, %c0_121, %c0_122] : memref<1x256x128xf32, #tpu.memory_space<vmem>>, vector<1x256x128xf32>
    %113 = vector.shape_cast %112 : vector<1x256x128xf32> to vector<256x128xf32>
    %cst_123 = arith.constant dense<0.000000e+00> : vector<128xf32>
    %114 = vector.multi_reduction <add>, %113, %cst_123 [0] : vector<256x128xf32> to vector<128xf32>
    %115 = vector.shape_cast %114 : vector<128xf32> to vector<1x128xf32>
    %116 = arith.mulf %113, %113 : vector<256x128xf32>
    %cst_124 = arith.constant dense<0.000000e+00> : vector<128xf32>
    %117 = vector.multi_reduction <add>, %116, %cst_124 [0] : vector<256x128xf32> to vector<128xf32>
    %118 = vector.shape_cast %117 : vector<128xf32> to vector<1x128xf32>
    %119 = tpu.concatenate %115, %118 in 0 : vector<1x128xf32>, vector<1x128xf32> -> vector<2x128xf32>
    %c0_125 = arith.constant 0 : index
    %c0_126 = arith.constant 0 : index
    %c0_127 = arith.constant 0 : index
    %120 = vector.load %arg4[%c0_125, %c0_126, %c0_127] : memref<1x2x128xf32, #tpu.memory_space<vmem>>, vector<1x2x128xf32>
    %121 = vector.shape_cast %120 : vector<1x2x128xf32> to vector<2x128xf32>
    %122 = vector.shape_cast %119 : vector<2x128xf32> to vector<1x2x128xf32>
    tpu.vector_store %arg4[%c0_125, %c0_126, %c0_127], %122 {strides = array<i32>} : memref<1x2x128xf32, #tpu.memory_space<vmem>>, vector<1x2x128xf32>,
    return
  }
  func.func @transform_0(%arg0: i32) -> (i32, i32, i32, i32) {
    %c0_i32 = arith.constant 0 : i32
    %c0_i32_0 = arith.constant 0 : i32
    %c0_i32_1 = arith.constant 0 : i32
    %c0_i32_2 = arith.constant 0 : i32
    return %arg0, %c0_i32, %c0_i32_0, %c0_i32_1 : i32, i32, i32, i32
  }
  func.func @transform_1(%arg0: i32) -> (i32, i32, i32) {
    %c0_i32 = arith.constant 0 : i32
    %c0_i32_0 = arith.constant 0 : i32
    %c0_i32_1 = arith.constant 0 : i32
    %c0_i32_2 = arith.constant 0 : i32
    return %c0_i32, %c0_i32_0, %c0_i32_1 : i32, i32, i32
  }
  func.func @transform_2(%arg0: i32) -> (i32, i32, i32) {
    %c0_i32 = arith.constant 0 : i32
    %c0_i32_0 = arith.constant 0 : i32
    %c0_i32_1 = arith.constant 0 : i32
    return %arg0, %c0_i32, %c0_i32_0 : i32, i32, i32
  }
  func.func @transform_3(%arg0: i32) -> (i32, i32, i32) {
    %c0_i32 = arith.constant 0 : i32
    %c0_i32_0 = arith.constant 0 : i32
    %c0_i32_1 = arith.constant 0 : i32
    return %arg0, %c0_i32, %c0_i32_0 : i32, i32, i32
  }
}

module attributes {stable_mosaic.version = 11 : i64} {
  func.func @_bn_relu6_kernel(%arg0: i32, %arg1: memref<1x256x128xf32, #tpu.memory_space<vmem>>, %arg2: memref<1x128xf32, #tpu.memory_space<vmem>>, %arg3: memref<1x128xf32, #tpu.memory_space<vmem>>, %arg4: memref<1x256x128xbf16, #tpu.memory_space<vmem>>) attributes {dimension_semantics = [#tpu.dimension_semantics<parallel>], iteration_bounds = array<i64: 2>, scalar_prefetch = 0 : i64, scratch_operands = 0 : i64, tpu.core_type = #tpu.core_type<tc>, window_params = [{transform_indices = @transform_0, window_bounds = array<i64: 1, 256, 128>}, {pipeline_mode = #tpu.pipeline_mode<synchronous>, transform_indices = @transform_1, window_bounds = array<i64: 1, 128>}, {pipeline_mode = #tpu.pipeline_mode<synchronous>, transform_indices = @transform_2, window_bounds = array<i64: 1, 128>}, {transform_indices = @transform_3, window_bounds = array<i64: 1, 256, 128>}]} {
    %c0 = arith.constant 0 : index
    %c0_0 = arith.constant 0 : index
    %c0_1 = arith.constant 0 : index
    %0 = vector.load %arg1[%c0, %c0_0, %c0_1] : memref<1x256x128xf32, #tpu.memory_space<vmem>>, vector<1x256x128xf32>
    %1 = vector.shape_cast %0 : vector<1x256x128xf32> to vector<256x128xf32>
    %c0_2 = arith.constant 0 : index
    %c0_3 = arith.constant 0 : index
    %2 = vector.load %arg2[%c0_2, %c0_3] : memref<1x128xf32, #tpu.memory_space<vmem>>, vector<1x128xf32>
    %3 = vector.broadcast %2 : vector<1x128xf32> to vector<256x128xf32>
    %4 = arith.mulf %1, %3 : vector<256x128xf32>
    %c0_4 = arith.constant 0 : index
    %c0_5 = arith.constant 0 : index
    %5 = vector.load %arg3[%c0_4, %c0_5] : memref<1x128xf32, #tpu.memory_space<vmem>>, vector<1x128xf32>
    %6 = vector.broadcast %5 : vector<1x128xf32> to vector<256x128xf32>
    %7 = arith.addf %4, %6 : vector<256x128xf32>
    %cst = arith.constant 0.000000e+00 : f32
    %cst_6 = arith.constant 6.000000e+00 : f32
    %8 = vector.broadcast %cst : f32 to vector<256x128xf32>
    %9 = arith.maximumf %8, %7 : vector<256x128xf32>
    %10 = vector.broadcast %cst_6 : f32 to vector<256x128xf32>
    %11 = arith.minimumf %10, %9 : vector<256x128xf32>
    %12 = arith.truncf %11 : vector<256x128xf32> to vector<256x128xbf16>
    %c0_7 = arith.constant 0 : index
    %c0_8 = arith.constant 0 : index
    %c0_9 = arith.constant 0 : index
    %13 = vector.load %arg4[%c0_7, %c0_8, %c0_9] : memref<1x256x128xbf16, #tpu.memory_space<vmem>>, vector<1x256x128xbf16>
    %14 = vector.shape_cast %13 : vector<1x256x128xbf16> to vector<256x128xbf16>
    %15 = vector.shape_cast %12 : vector<256x128xbf16> to vector<1x256x128xbf16>
    tpu.vector_store %arg4[%c0_7, %c0_8, %c0_9], %15 {strides = array<i32>} : memref<1x256x128xbf16, #tpu.memory_space<vmem>>, vector<1x256x128xbf16>,
    return
  }
  func.func @transform_0(%arg0: i32) -> (i32, i32, i32) {
    %c0_i32 = arith.constant 0 : i32
    %c0_i32_0 = arith.constant 0 : i32
    %c0_i32_1 = arith.constant 0 : i32
    return %arg0, %c0_i32, %c0_i32_0 : i32, i32, i32
  }
  func.func @transform_1(%arg0: i32) -> (i32, i32) {
    %c0_i32 = arith.constant 0 : i32
    %c0_i32_0 = arith.constant 0 : i32
    %c0_i32_1 = arith.constant 0 : i32
    return %c0_i32, %c0_i32_0 : i32, i32
  }
  func.func @transform_2(%arg0: i32) -> (i32, i32) {
    %c0_i32 = arith.constant 0 : i32
    %c0_i32_0 = arith.constant 0 : i32
    %c0_i32_1 = arith.constant 0 : i32
    return %c0_i32, %c0_i32_0 : i32, i32
  }
  func.func @transform_3(%arg0: i32) -> (i32, i32, i32) {
    %c0_i32 = arith.constant 0 : i32
    %c0_i32_0 = arith.constant 0 : i32
    %c0_i32_1 = arith.constant 0 : i32
    return %arg0, %c0_i32, %c0_i32_0 : i32, i32, i32
  }
}

module attributes {stable_mosaic.version = 11 : i64} {
  func.func @_bn_add_relu6_kernel(%arg0: i32, %arg1: memref<1x256x128xf32, #tpu.memory_space<vmem>>, %arg2: memref<1x256x128xf32, #tpu.memory_space<vmem>>, %arg3: memref<1x128xf32, #tpu.memory_space<vmem>>, %arg4: memref<1x128xf32, #tpu.memory_space<vmem>>, %arg5: memref<1x256x128xf32, #tpu.memory_space<vmem>>) attributes {dimension_semantics = [#tpu.dimension_semantics<parallel>], iteration_bounds = array<i64: 2>, scalar_prefetch = 0 : i64, scratch_operands = 0 : i64, tpu.core_type = #tpu.core_type<tc>, window_params = [{transform_indices = @transform_0, window_bounds = array<i64: 1, 256, 128>}, {transform_indices = @transform_1, window_bounds = array<i64: 1, 256, 128>}, {pipeline_mode = #tpu.pipeline_mode<synchronous>, transform_indices = @transform_2, window_bounds = array<i64: 1, 128>}, {pipeline_mode = #tpu.pipeline_mode<synchronous>, transform_indices = @transform_3, window_bounds = array<i64: 1, 128>}, {transform_indices = @transform_4, window_bounds = array<i64: 1, 256, 128>}]} {
    %c0 = arith.constant 0 : index
    %c0_0 = arith.constant 0 : index
    %c0_1 = arith.constant 0 : index
    %0 = vector.load %arg1[%c0, %c0_0, %c0_1] : memref<1x256x128xf32, #tpu.memory_space<vmem>>, vector<1x256x128xf32>
    %1 = vector.shape_cast %0 : vector<1x256x128xf32> to vector<256x128xf32>
    %c0_2 = arith.constant 0 : index
    %c0_3 = arith.constant 0 : index
    %2 = vector.load %arg3[%c0_2, %c0_3] : memref<1x128xf32, #tpu.memory_space<vmem>>, vector<1x128xf32>
    %3 = vector.broadcast %2 : vector<1x128xf32> to vector<256x128xf32>
    %4 = arith.mulf %1, %3 : vector<256x128xf32>
    %c0_4 = arith.constant 0 : index
    %c0_5 = arith.constant 0 : index
    %5 = vector.load %arg4[%c0_4, %c0_5] : memref<1x128xf32, #tpu.memory_space<vmem>>, vector<1x128xf32>
    %6 = vector.broadcast %5 : vector<1x128xf32> to vector<256x128xf32>
    %7 = arith.addf %4, %6 : vector<256x128xf32>
    %c0_6 = arith.constant 0 : index
    %c0_7 = arith.constant 0 : index
    %c0_8 = arith.constant 0 : index
    %8 = vector.load %arg2[%c0_6, %c0_7, %c0_8] : memref<1x256x128xf32, #tpu.memory_space<vmem>>, vector<1x256x128xf32>
    %9 = vector.shape_cast %8 : vector<1x256x128xf32> to vector<256x128xf32>
    %10 = arith.addf %7, %9 : vector<256x128xf32>
    %cst = arith.constant 0.000000e+00 : f32
    %cst_9 = arith.constant 6.000000e+00 : f32
    %11 = vector.broadcast %cst : f32 to vector<256x128xf32>
    %12 = arith.maximumf %11, %10 : vector<256x128xf32>
    %13 = vector.broadcast %cst_9 : f32 to vector<256x128xf32>
    %14 = arith.minimumf %13, %12 : vector<256x128xf32>
    %c0_10 = arith.constant 0 : index
    %c0_11 = arith.constant 0 : index
    %c0_12 = arith.constant 0 : index
    %15 = vector.load %arg5[%c0_10, %c0_11, %c0_12] : memref<1x256x128xf32, #tpu.memory_space<vmem>>, vector<1x256x128xf32>
    %16 = vector.shape_cast %15 : vector<1x256x128xf32> to vector<256x128xf32>
    %17 = vector.shape_cast %14 : vector<256x128xf32> to vector<1x256x128xf32>
    tpu.vector_store %arg5[%c0_10, %c0_11, %c0_12], %17 {strides = array<i32>} : memref<1x256x128xf32, #tpu.memory_space<vmem>>, vector<1x256x128xf32>,
    return
  }
  func.func @transform_0(%arg0: i32) -> (i32, i32, i32) {
    %c0_i32 = arith.constant 0 : i32
    %c0_i32_0 = arith.constant 0 : i32
    %c0_i32_1 = arith.constant 0 : i32
    return %arg0, %c0_i32, %c0_i32_0 : i32, i32, i32
  }
  func.func @transform_1(%arg0: i32) -> (i32, i32, i32) {
    %c0_i32 = arith.constant 0 : i32
    %c0_i32_0 = arith.constant 0 : i32
    %c0_i32_1 = arith.constant 0 : i32
    return %arg0, %c0_i32, %c0_i32_0 : i32, i32, i32
  }
  func.func @transform_2(%arg0: i32) -> (i32, i32) {
    %c0_i32 = arith.constant 0 : i32
    %c0_i32_0 = arith.constant 0 : i32
    %c0_i32_1 = arith.constant 0 : i32
    return %c0_i32, %c0_i32_0 : i32, i32
  }
  func.func @transform_3(%arg0: i32) -> (i32, i32) {
    %c0_i32 = arith.constant 0 : i32
    %c0_i32_0 = arith.constant 0 : i32
    %c0_i32_1 = arith.constant 0 : i32
    return %c0_i32, %c0_i32_0 : i32, i32
  }
  func.func @transform_4(%arg0: i32) -> (i32, i32, i32) {
    %c0_i32 = arith.constant 0 : i32
    %c0_i32_0 = arith.constant 0 : i32
    %c0_i32_1 = arith.constant 0 : i32
    return %arg0, %c0_i32, %c0_i32_0 : i32, i32, i32
  }
}

</mosaic_0001>

<llo_original>
// kernel: basic_block_forward.5
$region0: #{basic_block_forward.5}
  #allocation0 [shape = 'u32[]', space=smem, size = 0x4, offset = 0x4, fixed_abs, tag = 'smem constant byte address 0x4 - core index']
  #allocation1 [shape = 'u32[72,128]{1,0:T(1,128)}', space=vmem, size = 0x9000, scoped, tag = 'internal scratch']
  %s0 = inlined_call_operand.vmem [shape: f32[2,256,128], index: 0, kind: input, shape index: {}]
  %s1 = inlined_call_operand.vmem [shape: f32[1,128], index: 1, kind: input, shape index: {}]
  %s2 = inlined_call_operand.vmem [shape: f32[1,128], index: 2, kind: input, shape index: {}]
  %s3 = inlined_call_operand.vmem [shape: bf16[2,256,128], index: 3, kind: output, shape index: {}]
  %s4 = sld [smem:[#allocation0]]
  $region45: #{basic_block_forward.5} parent=0
    _
  %s6 = ssub.s32 1, %s4
  %s7 = scalar_select 0, %s6, %s4
  loop: start=0, step=1, limit=4
  $region2: #{basic_block_forward.5} parent=0 // loop_pre_header
    _
  $region3: #{basic_block_forward.5} parent=0 // loop_header
    %s9 = sphi 0, %s13
    %p10 = scmp.ge.s32.totalorder %s9, 4
    %s19 = sphi 0, %s21
    %s22 = sphi 0, %s19
    %s23 = sphi 0, %s22
    %s39 = sphi 0, %s23
    %s43 = sphi 0, %s43
    %s45 = sphi 0, %s43
    %s46 = sphi 0, %s45
    %s60 = sphi 0, %s46
    %s64 = sphi 0, %s64
    %s66 = sphi 0, %s64
    %s67 = sphi 0, %s66
    %s81 = sphi 0, %s67
    %s87 = sphi 0, %s89
    %s90 = sphi 0, %s87
    %s91 = sphi 0, %s90
    %s107 = sphi 0, %s91
  $region4: #{basic_block_forward.5} parent=0 // loop_header_branch
    %12 = sbr.rel (%p10) target = $region8
  $region5: #{basic_block_forward.5} parent=0 // loop_body
    %s14 = ssub.s32 %s9, 1
    %s15 = ssub.s32 %s9, 2
    %s16 = sadd.s32 %s9, 1
    %s17 = ssub.s32 %s9, %s16
    %p18 = scmp.eq.s32.totalorder %s17, 0
    %s20 = sadd.s32 %s19, 1
    %s21 = scalar_select %p18, %s19, %s20
    %p24 = pneg %p18
    %p25 = scmp.eq.s32.totalorder %s9, 1
    %p26 = por %p24, %p25
    %p27 = scmp.ne.s32.totalorder %s19, %s22
    %p28 = scmp.eq.s32.totalorder %s9, 0
    %p29 = por %p27, %p28
    %p30 = scmp.ne.s32.totalorder %s19, %s22
    %p31 = scmp.eq.s32.totalorder %s14, 1
    %p32 = por %p30, %p31
    %p33 = scmp.ne.s32.totalorder %s22, %s23
    %p34 = scmp.eq.s32.totalorder %s14, 0
    %p35 = por %p33, %p34
    %p36 = scmp.ne.s32.totalorder %s22, %s23
    %p37 = scmp.eq.s32.totalorder %s15, 1
    %p38 = por %p36, %p37
    %p40 = scmp.ne.s32.totalorder %s23, %s39
    %p41 = scmp.eq.s32.totalorder %s15, 0
    %p42 = por %p40, %p41
    %s44 = sadd.s32 %s43, 1
    %p47 = scmp.eq.s32.totalorder %s9, 1
    %p48 = scmp.ne.s32.totalorder %s43, %s45
    %p49 = scmp.eq.s32.totalorder %s9, 0
    %p50 = por %p48, %p49
    %p51 = scmp.ne.s32.totalorder %s43, %s45
    %p52 = scmp.eq.s32.totalorder %s14, 1
    %p53 = por %p51, %p52
    %p54 = scmp.ne.s32.totalorder %s45, %s46
    %p55 = scmp.eq.s32.totalorder %s14, 0
    %p56 = por %p54, %p55
    %p57 = scmp.ne.s32.totalorder %s45, %s46
    %p58 = scmp.eq.s32.totalorder %s15, 1
    %p59 = por %p57, %p58
    %p61 = scmp.ne.s32.totalorder %s46, %s60
    %p62 = scmp.eq.s32.totalorder %s15, 0
    %p63 = por %p61, %p62
    %s65 = sadd.s32 %s64, 1
    %p68 = scmp.eq.s32.totalorder %s9, 1
    %p69 = scmp.ne.s32.totalorder %s64, %s66
    %p70 = scmp.eq.s32.totalorder %s9, 0
    %p71 = por %p69, %p70
    %p72 = scmp.ne.s32.totalorder %s64, %s66
    %p73 = scmp.eq.s32.totalorder %s14, 1
    %p74 = por %p72, %p73
    %p75 = scmp.ne.s32.totalorder %s66, %s67
    %p76 = scmp.eq.s32.totalorder %s14, 0
    %p77 = por %p75, %p76
    %p78 = scmp.ne.s32.totalorder %s66, %s67
    %p79 = scmp.eq.s32.totalorder %s15, 1
    %p80 = por %p78, %p79
    %p82 = scmp.ne.s32.totalorder %s67, %s81
    %p83 = scmp.eq.s32.totalorder %s15, 0
    %p84 = por %p82, %p83
    %s85 = ssub.s32 %s9, %s16
    %p86 = scmp.eq.s32.totalorder %s85, 0
    %s88 = sadd.s32 %s87, 1
    %s89 = scalar_select %p86, %s87, %s88
    %p92 = pneg %p86
    %p93 = scmp.eq.s32.totalorder %s9, 1
    %p94 = por %p92, %p93
    %p95 = scmp.ne.s32.totalorder %s87, %s90
    %p96 = scmp.eq.s32.totalorder %s9, 0
    %p97 = por %p95, %p96
    %p98 = scmp.ne.s32.totalorder %s87, %s90
    %p99 = scmp.eq.s32.totalorder %s14, 1
    %p100 = por %p98, %p99
    %p101 = scmp.ne.s32.totalorder %s90, %s91
    %p102 = scmp.eq.s32.totalorder %s14, 0
    %p103 = por %p101, %p102
    %p104 = scmp.ne.s32.totalorder %s90, %s91
    %p105 = scmp.eq.s32.totalorder %s15, 1
    %p106 = por %p104, %p105
    %p108 = scmp.ne.s32.totalorder %s91, %s107
    %p109 = scmp.eq.s32.totalorder %s15, 0
    %p110 = por %p108, %p109
    %p111 = scmp.le.s32.totalorder 1, %s9
    %p112 = scmp.lt.s32.totalorder %s9, 3
    %p113 = pnand %p111, %p112
    %p114 = pneg %p113
    // Predicated region
    $region9: #{basic_block_forward.5} parent=5 // pred_check
      _
    $region10: #{basic_block_forward.5} parent=5 // pred_check_branch
      %116 = sbr.rel (%p113) target = $region12
    $region11: #{basic_block_forward.5} parent=5 // pred_region
      %s117 = ssub.s32 %s9, 1
      // Predicated region
      $region13: #{basic_block_forward.5} parent=11 // pred_check
        %p118 = pneg %p56
      $region14: #{basic_block_forward.5} parent=11 // pred_check_branch
        %120 = sbr.rel (%p118) target = $region16
      $region15: #{basic_block_forward.5} parent=11 // pred_region
        _
      $region16: #{basic_block_forward.5} parent=11 // pred_fallthru
        _
      // Predicated region
      $region17: #{basic_block_forward.5} parent=11 // pred_check
        %p121 = pneg %p77
      $region18: #{basic_block_forward.5} parent=11 // pred_check_branch
        %123 = sbr.rel (%p121) target = $region20
      $region19: #{basic_block_forward.5} parent=11 // pred_region
        _
      $region20: #{basic_block_forward.5} parent=11 // pred_fallthru
        _
    $region12: #{basic_block_forward.5} parent=5 // pred_fallthru
      _
    %p124 = scmp.lt.s32.totalorder %s9, 2
    // Predicated region
    $region21: #{basic_block_forward.5} parent=5 // pred_check
      %p125 = pneg %p124
    $region22: #{basic_block_forward.5} parent=5 // pred_check_branch
      %127 = sbr.rel (%p125) target = $region24
    $region23: #{basic_block_forward.5} parent=5 // pred_region
      // Predicated region
      $region25: #{basic_block_forward.5} parent=23 // pred_check
        %p128 = pneg %p29
      $region26: #{basic_block_forward.5} parent=23 // pred_check_branch
        %130 = sbr.rel (%p128) target = $region28
      $region27: #{basic_block_forward.5} parent=23 // pred_region
        %p131 = scmp.lt.s32.totalorder %s9, 1
        %s132 = scalar_select %p131, %s9, 1
        %s133 = smul.addr %s132, 32
        %s134 = smul.addr %s133, 8
        %s135 = scalar_lea.vmem %s0, %s134
      $region28: #{basic_block_forward.5} parent=23 // pred_fallthru
        _
    $region24: #{basic_block_forward.5} parent=5 // pred_fallthru
      _
    %p136 = scmp.le.s32.totalorder 1, %s9
    %p137 = scmp.lt.s32.totalorder %s9, 3
    %p138 = pnand %p136, %p137
    %p139 = pneg %p138
    // Predicated region
    $region29: #{basic_block_forward.5} parent=5 // pred_check
      _
    $region30: #{basic_block_forward.5} parent=5 // pred_check_branch
      %141 = sbr.rel (%p138) target = $region32
    $region31: #{basic_block_forward.5} parent=5 // pred_region
      %s142 = ssub.s32 %s9, 1
      %p143 = scmp.lt.s32.totalorder %s14, 1
      %s144 = scalar_select %p143, %s14, 1
      %s145 = smul.addr %s144, 32
      %s146 = smul.addr %s145, 8
      %s147 = scalar_lea.vmem %s0, %s146
      %p148 = pneg %p35
      %p149 = pneg %p32
      %p150 = pneg %p56
      %p151 = pneg %p53
      %p152 = pneg %p77
      %p153 = pneg %p74
      %p154 = pneg %p103
      %p155 = pneg %p100
      %p156 = scmp.lt.s32.totalorder %s14, 1
      %s157 = scalar_select %p156, %s14, 1
      %s158 = smul.addr %s157, 32
      %s159 = smul.addr %s158, 4
      %s160 = scalar_lea.vmem %s3, %s159
      %p161 = scmp.lt.s32.totalorder %s14, 1
      %s162 = scalar_select %p161, %s14, 1
      %s163 = smul.addr %s162, 32
      %s164 = smul.addr %s163, 8
      %s165 = scalar_lea.vmem %s0, %s164
      %p166 = scmp.lt.s32.totalorder %s14, 1
      %s167 = scalar_select %p166, %s14, 1
      %s168 = smul.addr %s167, 32
      %s169 = smul.addr %s168, 4
      %s170 = scalar_lea.vmem %s3, %s169
      %v171 = vld [vmem:[%s165] sm:$0xff]
      %v172 = vld [vmem:[%s165 + $0x8] sm:$0xff]
      %v173 = vld [vmem:[%s165 + $0x10] sm:$0xff]
      %v174 = vld [vmem:[%s165 + $0x18] sm:$0xff]
      %v175 = vld [vmem:[%s165 + $0x20] sm:$0xff]
      %v176 = vld [vmem:[%s165 + $0x28] sm:$0xff]
      %v177 = vld [vmem:[%s165 + $0x30] sm:$0xff]
      %v178 = vld [vmem:[%s165 + $0x38] sm:$0xff]
      %v179 = vld [vmem:[%s165 + $0x40] sm:$0xff]
      %v180 = vld [vmem:[%s165 + $0x48] sm:$0xff]
      %v181 = vld [vmem:[%s165 + $0x50] sm:$0xff]
      %v182 = vld [vmem:[%s165 + $0x58] sm:$0xff]
      %v183 = vld [vmem:[%s165 + $0x60] sm:$0xff]
      %v184 = vld [vmem:[%s165 + $0x68] sm:$0xff]
      %v185 = vld [vmem:[%s165 + $0x70] sm:$0xff]
      %v186 = vld [vmem:[%s165 + $0x78] sm:$0xff]
      %v187 = vld [vmem:[%s165 + $0x80] sm:$0xff]
      %v188 = vld [vmem:[%s165 + $0x88] sm:$0xff]
      %v189 = vld [vmem:[%s165 + $0x90] sm:$0xff]
      %v190 = vld [vmem:[%s165 + $0x98] sm:$0xff]
      %v191 = vld [vmem:[%s165 + $0xa0] sm:$0xff]
      %v192 = vld [vmem:[%s165 + $0xa8] sm:$0xff]
      %v193 = vld [vmem:[%s165 + $0xb0] sm:$0xff]
      %v194 = vld [vmem:[%s165 + $0xb8] sm:$0xff]
      %v195 = vld [vmem:[%s165 + $0xc0] sm:$0xff]
      %v196 = vld [vmem:[%s165 + $0xc8] sm:$0xff]
      %v197 = vld [vmem:[%s165 + $0xd0] sm:$0xff]
      %v198 = vld [vmem:[%s165 + $0xd8] sm:$0xff]
      %v199 = vld [vmem:[%s165 + $0xe0] sm:$0xff]
      %v200 = vld [vmem:[%s165 + $0xe8] sm:$0xff]
      %v201 = vld [vmem:[%s165 + $0xf0] sm:$0xff]
      %v202 = vld [vmem:[%s165 + $0xf8] sm:$0xff]
      %v203 = vld [vmem:[%s1] sm:$0x1]
      %v205 = vperm.slane %v203, 0
      %v207 = vmul.f32 %v171, %v205
      %v208 = vmul.f32 %v172, %v205
      %v209 = vmul.f32 %v173, %v205
      %v210 = vmul.f32 %v174, %v205
      %v211 = vmul.f32 %v175, %v205
      %v212 = vmul.f32 %v176, %v205
      %v213 = vmul.f32 %v177, %v205
      %v214 = vmul.f32 %v178, %v205
      %v215 = vmul.f32 %v179, %v205
      %v216 = vmul.f32 %v180, %v205
      %v217 = vmul.f32 %v181, %v205
      %v218 = vmul.f32 %v182, %v205
      %v219 = vmul.f32 %v183, %v205
      %v220 = vmul.f32 %v184, %v205
      %v221 = vmul.f32 %v185, %v205
      %v222 = vmul.f32 %v186, %v205
      %v223 = vmul.f32 %v187, %v205
      %v224 = vmul.f32 %v188, %v205
      %v225 = vmul.f32 %v189, %v205
      %v226 = vmul.f32 %v190, %v205
      %v227 = vmul.f32 %v191, %v205
      %v228 = vmul.f32 %v192, %v205
      %v229 = vmul.f32 %v193, %v205
      %v230 = vmul.f32 %v194, %v205
      %v231 = vmul.f32 %v195, %v205
      %v232 = vmul.f32 %v196, %v205
      %v233 = vmul.f32 %v197, %v205
      %v234 = vmul.f32 %v198, %v205
      %v235 = vmul.f32 %v199, %v205
      %v236 = vmul.f32 %v200, %v205
      %v237 = vmul.f32 %v201, %v205
      %v238 = vmul.f32 %v202, %v205
      %v239 = vld [vmem:[%s2] sm:$0x1]
      %v241 = vperm.slane %v239, 0
      %v243 = vadd.f32 %v207, %v241
      %v244 = vadd.f32 %v208, %v241
      %v245 = vadd.f32 %v209, %v241
      %v246 = vadd.f32 %v210, %v241
      %v247 = vadd.f32 %v211, %v241
      %v248 = vadd.f32 %v212, %v241
      %v249 = vadd.f32 %v213, %v241
      %v250 = vadd.f32 %v214, %v241
      %v251 = vadd.f32 %v215, %v241
      %v252 = vadd.f32 %v216, %v241
      %v253 = vadd.f32 %v217, %v241
      %v254 = vadd.f32 %v218, %v241
      %v255 = vadd.f32 %v219, %v241
      %v256 = vadd.f32 %v220, %v241
      %v257 = vadd.f32 %v221, %v241
      %v258 = vadd.f32 %v222, %v241
      %v259 = vadd.f32 %v223, %v241
      %v260 = vadd.f32 %v224, %v241
      %v261 = vadd.f32 %v225, %v241
      %v262 = vadd.f32 %v226, %v241
      %v263 = vadd.f32 %v227, %v241
      %v264 = vadd.f32 %v228, %v241
      %v265 = vadd.f32 %v229, %v241
      %v266 = vadd.f32 %v230, %v241
      %v267 = vadd.f32 %v231, %v241
      %v268 = vadd.f32 %v232, %v241
      %v269 = vadd.f32 %v233, %v241
      %v270 = vadd.f32 %v234, %v241
      %v271 = vadd.f32 %v235, %v241
      %v272 = vadd.f32 %v236, %v241
      %v273 = vadd.f32 %v237, %v241
      %v274 = vadd.f32 %v238, %v241
      %v275 = vmax.f32 %v243, 0.0
      %v276 = vmax.f32 %v244, 0.0
      %v277 = vmax.f32 %v245, 0.0
      %v278 = vmax.f32 %v246, 0.0
      %v279 = vmax.f32 %v247, 0.0
      %v280 = vmax.f32 %v248, 0.0
      %v281 = vmax.f32 %v249, 0.0
      %v282 = vmax.f32 %v250, 0.0
      %v283 = vmax.f32 %v251, 0.0
      %v284 = vmax.f32 %v252, 0.0
      %v285 = vmax.f32 %v253, 0.0
      %v286 = vmax.f32 %v254, 0.0
      %v287 = vmax.f32 %v255, 0.0
      %v288 = vmax.f32 %v256, 0.0
      %v289 = vmax.f32 %v257, 0.0
      %v290 = vmax.f32 %v258, 0.0
      %v291 = vmax.f32 %v259, 0.0
      %v292 = vmax.f32 %v260, 0.0
      %v293 = vmax.f32 %v261, 0.0
      %v294 = vmax.f32 %v262, 0.0
      %v295 = vmax.f32 %v263, 0.0
      %v296 = vmax.f32 %v264, 0.0
      %v297 = vmax.f32 %v265, 0.0
      %v298 = vmax.f32 %v266, 0.0
      %v299 = vmax.f32 %v267, 0.0
      %v300 = vmax.f32 %v268, 0.0
      %v301 = vmax.f32 %v269, 0.0
      %v302 = vmax.f32 %v270, 0.0
      %v303 = vmax.f32 %v271, 0.0
      %v304 = vmax.f32 %v272, 0.0
      %v305 = vmax.f32 %v273, 0.0
      %v306 = vmax.f32 %v274, 0.0
      %v307 = vmin.f32 %v275, 6.0
      %v308 = vmin.f32 %v276, 6.0
      %v309 = vmin.f32 %v277, 6.0
      %v310 = vmin.f32 %v278, 6.0
      %v311 = vmin.f32 %v279, 6.0
      %v312 = vmin.f32 %v280, 6.0
      %v313 = vmin.f32 %v281, 6.0
      %v314 = vmin.f32 %v282, 6.0
      %v315 = vmin.f32 %v283, 6.0
      %v316 = vmin.f32 %v284, 6.0
      %v317 = vmin.f32 %v285, 6.0
      %v318 = vmin.f32 %v286, 6.0
      %v319 = vmin.f32 %v287, 6.0
      %v320 = vmin.f32 %v288, 6.0
      %v321 = vmin.f32 %v289, 6.0
      %v322 = vmin.f32 %v290, 6.0
      %v323 = vmin.f32 %v291, 6.0
      %v324 = vmin.f32 %v292, 6.0
      %v325 = vmin.f32 %v293, 6.0
      %v326 = vmin.f32 %v294, 6.0
      %v327 = vmin.f32 %v295, 6.0
      %v328 = vmin.f32 %v296, 6.0
      %v329 = vmin.f32 %v297, 6.0
      %v330 = vmin.f32 %v298, 6.0
      %v331 = vmin.f32 %v299, 6.0
      %v332 = vmin.f32 %v300, 6.0
      %v333 = vmin.f32 %v301, 6.0
      %v334 = vmin.f32 %v302, 6.0
      %v335 = vmin.f32 %v303, 6.0
      %v336 = vmin.f32 %v304, 6.0
      %v337 = vmin.f32 %v305, 6.0
      %v338 = vmin.f32 %v306, 6.0
      %v339 = vpack.c.bf16 %v307, %v307
      %v340 = vpack.c.bf16 %v308, %v308
      %v341 = vpack.c.bf16 %v309, %v309
      %v342 = vpack.c.bf16 %v310, %v310
      %v343 = vpack.c.bf16 %v311, %v311
      %v344 = vpack.c.bf16 %v312, %v312
      %v345 = vpack.c.bf16 %v313, %v313
      %v346 = vpack.c.bf16 %v314, %v314
      %v347 = vpack.c.bf16 %v315, %v315
      %v348 = vpack.c.bf16 %v316, %v316
      %v349 = vpack.c.bf16 %v317, %v317
      %v350 = vpack.c.bf16 %v318, %v318
      %v351 = vpack.c.bf16 %v319, %v319
      %v352 = vpack.c.bf16 %v320, %v320
      %v353 = vpack.c.bf16 %v321, %v321
      %v354 = vpack.c.bf16 %v322, %v322
      %v355 = vpack.c.bf16 %v323, %v323
      %v356 = vpack.c.bf16 %v324, %v324
      %v357 = vpack.c.bf16 %v325, %v325
      %v358 = vpack.c.bf16 %v326, %v326
      %v359 = vpack.c.bf16 %v327, %v327
      %v360 = vpack.c.bf16 %v328, %v328
      %v361 = vpack.c.bf16 %v329, %v329
      %v362 = vpack.c.bf16 %v330, %v330
      %v363 = vpack.c.bf16 %v331, %v331
      %v364 = vpack.c.bf16 %v332, %v332
      %v365 = vpack.c.bf16 %v333, %v333
      %v366 = vpack.c.bf16 %v334, %v334
      %v367 = vpack.c.bf16 %v335, %v335
      %v368 = vpack.c.bf16 %v336, %v336
      %v369 = vpack.c.bf16 %v337, %v337
      %v370 = vpack.c.bf16 %v338, %v338
      %371 = vst [vmem:[%s170] sm:$0xf] %v339
      %372 = vst [vmem:[%s170 + $0x4] sm:$0xf] %v340
      %373 = vst [vmem:[%s170 + $0x8] sm:$0xf] %v341
      %374 = vst [vmem:[%s170 + $0xc] sm:$0xf] %v342
      %375 = vst [vmem:[%s170 + $0x10] sm:$0xf] %v343
      %376 = vst [vmem:[%s170 + $0x14] sm:$0xf] %v344
      %377 = vst [vmem:[%s170 + $0x18] sm:$0xf] %v345
      %378 = vst [vmem:[%s170 + $0x1c] sm:$0xf] %v346
      %379 = vst [vmem:[%s170 + $0x20] sm:$0xf] %v347
      %380 = vst [vmem:[%s170 + $0x24] sm:$0xf] %v348
      %381 = vst [vmem:[%s170 + $0x28] sm:$0xf] %v349
      %382 = vst [vmem:[%s170 + $0x2c] sm:$0xf] %v350
      %383 = vst [vmem:[%s170 + $0x30] sm:$0xf] %v351
      %384 = vst [vmem:[%s170 + $0x34] sm:$0xf] %v352
      %385 = vst [vmem:[%s170 + $0x38] sm:$0xf] %v353
      %386 = vst [vmem:[%s170 + $0x3c] sm:$0xf] %v354
      %387 = vst [vmem:[%s170 + $0x40] sm:$0xf] %v355
      %388 = vst [vmem:[%s170 + $0x44] sm:$0xf] %v356
      %389 = vst [vmem:[%s170 + $0x48] sm:$0xf] %v357
      %390 = vst [vmem:[%s170 + $0x4c] sm:$0xf] %v358
      %391 = vst [vmem:[%s170 + $0x50] sm:$0xf] %v359
      %392 = vst [vmem:[%s170 + $0x54] sm:$0xf] %v360
      %393 = vst [vmem:[%s170 + $0x58] sm:$0xf] %v361
      %394 = vst [vmem:[%s170 + $0x5c] sm:$0xf] %v362
      %395 = vst [vmem:[%s170 + $0x60] sm:$0xf] %v363
      %396 = vst [vmem:[%s170 + $0x64] sm:$0xf] %v364
      %397 = vst [vmem:[%s170 + $0x68] sm:$0xf] %v365
      %398 = vst [vmem:[%s170 + $0x6c] sm:$0xf] %v366
      %399 = vst [vmem:[%s170 + $0x70] sm:$0xf] %v367
      %400 = vst [vmem:[%s170 + $0x74] sm:$0xf] %v368
      %401 = vst [vmem:[%s170 + $0x78] sm:$0xf] %v369
      %402 = vst [vmem:[%s170 + $0x7c] sm:$0xf] %v370
      %p403 = scmp.lt.s32.totalorder %s14, 1
      %s404 = scalar_select %p403, %s14, 1
      %s405 = smul.addr %s404, 32
      %s406 = smul.addr %s405, 4
      %s407 = scalar_lea.vmem %s3, %s406
      // Predicated region
      $region33: #{basic_block_forward.5} parent=31 // pred_check
        %p408 = pneg %p100
      $region34: #{basic_block_forward.5} parent=31 // pred_check_branch
        %410 = sbr.rel (%p408) target = $region36
      $region35: #{basic_block_forward.5} parent=31 // pred_region
        _
      $region36: #{basic_block_forward.5} parent=31 // pred_fallthru
        _
    $region32: #{basic_block_forward.5} parent=5 // pred_fallthru
      _
    %p411 = scmp.le.s32.totalorder 2, %s9
    // Predicated region
    $region37: #{basic_block_forward.5} parent=5 // pred_check
      %p412 = pneg %p411
    $region38: #{basic_block_forward.5} parent=5 // pred_check_branch
      %414 = sbr.rel (%p412) target = $region40
    $region39: #{basic_block_forward.5} parent=5 // pred_region
      %s415 = ssub.s32 %s9, 2
      // Predicated region
      $region41: #{basic_block_forward.5} parent=39 // pred_check
        %p416 = pneg %p106
      $region42: #{basic_block_forward.5} parent=39 // pred_check_branch
        %418 = sbr.rel (%p416) target = $region44
      $region43: #{basic_block_forward.5} parent=39 // pred_region
        %p419 = scmp.lt.s32.totalorder %s15, 1
        %s420 = scalar_select %p419, %s15, 1
        %s421 = smul.addr %s420, 32
        %s422 = smul.addr %s421, 4
        %s423 = scalar_lea.vmem %s3, %s422
      $region44: #{basic_block_forward.5} parent=39 // pred_fallthru
        _
    $region40: #{basic_block_forward.5} parent=5 // pred_fallthru
      _
  $region6: #{basic_block_forward.5} parent=0 // loop_footer
    %s13 = sadd.s32 1, %s9
  $region7: #{basic_block_forward.5} parent=0 // loop_footer_branch
    %8 = sbr.rel target = $region3
  $region8: #{basic_block_forward.5} parent=0 // loop_exit
    _

// kernel: basic_block_forward.7
$region0: #{basic_block_forward.7}
  #allocation0 [shape = 'u32[]', space=smem, size = 0x4, offset = 0x4, fixed_abs, tag = 'smem constant byte address 0x4 - core index']
  #allocation1 [shape = 'u32[72,128]{1,0:T(1,128)}', space=vmem, size = 0x9000, scoped, tag = 'internal scratch']
  %s0 = inlined_call_operand.vmem [shape: f32[2,256,128], index: 0, kind: input, shape index: {}]
  %s1 = inlined_call_operand.vmem [shape: f32[2,256,128], index: 1, kind: input, shape index: {}]
  %s2 = inlined_call_operand.vmem [shape: f32[1,128], index: 2, kind: input, shape index: {}]
  %s3 = inlined_call_operand.vmem [shape: f32[1,128], index: 3, kind: input, shape index: {}]
  %s4 = inlined_call_operand.vmem [shape: f32[2,256,128], index: 4, kind: output, shape index: {}]
  %s5 = sld [smem:[#allocation0]]
  $region49: #{basic_block_forward.7} parent=0
    _
  %s7 = ssub.s32 1, %s5
  %s8 = scalar_select 0, %s7, %s5
  loop: start=0, step=1, limit=4
  $region2: #{basic_block_forward.7} parent=0 // loop_pre_header
    _
  $region3: #{basic_block_forward.7} parent=0 // loop_header
    %s10 = sphi 0, %s14
    %p11 = scmp.ge.s32.totalorder %s10, 4
    %s20 = sphi 0, %s22
    %s23 = sphi 0, %s20
    %s24 = sphi 0, %s23
    %s40 = sphi 0, %s24
    %s46 = sphi 0, %s48
    %s49 = sphi 0, %s46
    %s50 = sphi 0, %s49
    %s66 = sphi 0, %s50
    %s70 = sphi 0, %s70
    %s72 = sphi 0, %s70
    %s73 = sphi 0, %s72
    %s87 = sphi 0, %s73
    %s91 = sphi 0, %s91
    %s93 = sphi 0, %s91
    %s94 = sphi 0, %s93
    %s108 = sphi 0, %s94
    %s114 = sphi 0, %s116
    %s117 = sphi 0, %s114
    %s118 = sphi 0, %s117
    %s134 = sphi 0, %s118
  $region4: #{basic_block_forward.7} parent=0 // loop_header_branch
    %13 = sbr.rel (%p11) target = $region8
  $region5: #{basic_block_forward.7} parent=0 // loop_body
    %s15 = ssub.s32 %s10, 1
    %s16 = ssub.s32 %s10, 2
    %s17 = sadd.s32 %s10, 1
    %s18 = ssub.s32 %s10, %s17
    %p19 = scmp.eq.s32.totalorder %s18, 0
    %s21 = sadd.s32 %s20, 1
    %s22 = scalar_select %p19, %s20, %s21
    %p25 = pneg %p19
    %p26 = scmp.eq.s32.totalorder %s10, 1
    %p27 = por %p25, %p26
    %p28 = scmp.ne.s32.totalorder %s20, %s23
    %p29 = scmp.eq.s32.totalorder %s10, 0
    %p30 = por %p28, %p29
    %p31 = scmp.ne.s32.totalorder %s20, %s23
    %p32 = scmp.eq.s32.totalorder %s15, 1
    %p33 = por %p31, %p32
    %p34 = scmp.ne.s32.totalorder %s23, %s24
    %p35 = scmp.eq.s32.totalorder %s15, 0
    %p36 = por %p34, %p35
    %p37 = scmp.ne.s32.totalorder %s23, %s24
    %p38 = scmp.eq.s32.totalorder %s16, 1
    %p39 = por %p37, %p38
    %p41 = scmp.ne.s32.totalorder %s24, %s40
    %p42 = scmp.eq.s32.totalorder %s16, 0
    %p43 = por %p41, %p42
    %s44 = ssub.s32 %s10, %s17
    %p45 = scmp.eq.s32.totalorder %s44, 0
    %s47 = sadd.s32 %s46, 1
    %s48 = scalar_select %p45, %s46, %s47
    %p51 = pneg %p45
    %p52 = scmp.eq.s32.totalorder %s10, 1
    %p53 = por %p51, %p52
    %p54 = scmp.ne.s32.totalorder %s46, %s49
    %p55 = scmp.eq.s32.totalorder %s10, 0
    %p56 = por %p54, %p55
    %p57 = scmp.ne.s32.totalorder %s46, %s49
    %p58 = scmp.eq.s32.totalorder %s15, 1
    %p59 = por %p57, %p58
    %p60 = scmp.ne.s32.totalorder %s49, %s50
    %p61 = scmp.eq.s32.totalorder %s15, 0
    %p62 = por %p60, %p61
    %p63 = scmp.ne.s32.totalorder %s49, %s50
    %p64 = scmp.eq.s32.totalorder %s16, 1
    %p65 = por %p63, %p64
    %p67 = scmp.ne.s32.totalorder %s50, %s66
    %p68 = scmp.eq.s32.totalorder %s16, 0
    %p69 = por %p67, %p68
    %s71 = sadd.s32 %s70, 1
    %p74 = scmp.eq.s32.totalorder %s10, 1
    %p75 = scmp.ne.s32.totalorder %s70, %s72
    %p76 = scmp.eq.s32.totalorder %s10, 0
    %p77 = por %p75, %p76
    %p78 = scmp.ne.s32.totalorder %s70, %s72
    %p79 = scmp.eq.s32.totalorder %s15, 1
    %p80 = por %p78, %p79
    %p81 = scmp.ne.s32.totalorder %s72, %s73
    %p82 = scmp.eq.s32.totalorder %s15, 0
    %p83 = por %p81, %p82
    %p84 = scmp.ne.s32.totalorder %s72, %s73
    %p85 = scmp.eq.s32.totalorder %s16, 1
    %p86 = por %p84, %p85
    %p88 = scmp.ne.s32.totalorder %s73, %s87
    %p89 = scmp.eq.s32.totalorder %s16, 0
    %p90 = por %p88, %p89
    %s92 = sadd.s32 %s91, 1
    %p95 = scmp.eq.s32.totalorder %s10, 1
    %p96 = scmp.ne.s32.totalorder %s91, %s93
    %p97 = scmp.eq.s32.totalorder %s10, 0
    %p98 = por %p96, %p97
    %p99 = scmp.ne.s32.totalorder %s91, %s93
    %p100 = scmp.eq.s32.totalorder %s15, 1
    %p101 = por %p99, %p100
    %p102 = scmp.ne.s32.totalorder %s93, %s94
    %p103 = scmp.eq.s32.totalorder %s15, 0
    %p104 = por %p102, %p103
    %p105 = scmp.ne.s32.totalorder %s93, %s94
    %p106 = scmp.eq.s32.totalorder %s16, 1
    %p107 = por %p105, %p106
    %p109 = scmp.ne.s32.totalorder %s94, %s108
    %p110 = scmp.eq.s32.totalorder %s16, 0
    %p111 = por %p109, %p110
    %s112 = ssub.s32 %s10, %s17
    %p113 = scmp.eq.s32.totalorder %s112, 0
    %s115 = sadd.s32 %s114, 1
    %s116 = scalar_select %p113, %s114, %s115
    %p119 = pneg %p113
    %p120 = scmp.eq.s32.totalorder %s10, 1
    %p121 = por %p119, %p120
    %p122 = scmp.ne.s32.totalorder %s114, %s117
    %p123 = scmp.eq.s32.totalorder %s10, 0
    %p124 = por %p122, %p123
    %p125 = scmp.ne.s32.totalorder %s114, %s117
    %p126 = scmp.eq.s32.totalorder %s15, 1
    %p127 = por %p125, %p126
    %p128 = scmp.ne.s32.totalorder %s117, %s118
    %p129 = scmp.eq.s32.totalorder %s15, 0
    %p130 = por %p128, %p129
    %p131 = scmp.ne.s32.totalorder %s117, %s118
    %p132 = scmp.eq.s32.totalorder %s16, 1
    %p133 = por %p131, %p132
    %p135 = scmp.ne.s32.totalorder %s118, %s134
    %p136 = scmp.eq.s32.totalorder %s16, 0
    %p137 = por %p135, %p136
    %p138 = scmp.le.s32.totalorder 1, %s10
    %p139 = scmp.lt.s32.totalorder %s10, 3
    %p140 = pnand %p138, %p139
    %p141 = pneg %p140
    // Predicated region
    $region9: #{basic_block_forward.7} parent=5 // pred_check
      _
    $region10: #{basic_block_forward.7} parent=5 // pred_check_branch
      %143 = sbr.rel (%p140) target = $region12
    $region11: #{basic_block_forward.7} parent=5 // pred_region
      %s144 = ssub.s32 %s10, 1
      // Predicated region
      $region13: #{basic_block_forward.7} parent=11 // pred_check
        %p145 = pneg %p83
      $region14: #{basic_block_forward.7} parent=11 // pred_check_branch
        %147 = sbr.rel (%p145) target = $region16
      $region15: #{basic_block_forward.7} parent=11 // pred_region
        _
      $region16: #{basic_block_forward.7} parent=11 // pred_fallthru
        _
      // Predicated region
      $region17: #{basic_block_forward.7} parent=11 // pred_check
        %p148 = pneg %p104
      $region18: #{basic_block_forward.7} parent=11 // pred_check_branch
        %150 = sbr.rel (%p148) target = $region20
      $region19: #{basic_block_forward.7} parent=11 // pred_region
        _
      $region20: #{basic_block_forward.7} parent=11 // pred_fallthru
        _
    $region12: #{basic_block_forward.7} parent=5 // pred_fallthru
      _
    %p151 = scmp.lt.s32.totalorder %s10, 2
    // Predicated region
    $region21: #{basic_block_forward.7} parent=5 // pred_check
      %p152 = pneg %p151
    $region22: #{basic_block_forward.7} parent=5 // pred_check_branch
      %154 = sbr.rel (%p152) target = $region24
    $region23: #{basic_block_forward.7} parent=5 // pred_region
      // Predicated region
      $region25: #{basic_block_forward.7} parent=23 // pred_check
        %p155 = pneg %p30
      $region26: #{basic_block_forward.7} parent=23 // pred_check_branch
        %157 = sbr.rel (%p155) target = $region28
      $region27: #{basic_block_forward.7} parent=23 // pred_region
        %p158 = scmp.lt.s32.totalorder %s10, 1
        %s159 = scalar_select %p158, %s10, 1
        %s160 = smul.addr %s159, 32
        %s161 = smul.addr %s160, 8
        %s162 = scalar_lea.vmem %s0, %s161
      $region28: #{basic_block_forward.7} parent=23 // pred_fallthru
        _
      // Predicated region
      $region29: #{basic_block_forward.7} parent=23 // pred_check
        %p163 = pneg %p56
      $region30: #{basic_block_forward.7} parent=23 // pred_check_branch
        %165 = sbr.rel (%p163) target = $region32
      $region31: #{basic_block_forward.7} parent=23 // pred_region
        %p166 = scmp.lt.s32.totalorder %s10, 1
        %s167 = scalar_select %p166, %s10, 1
        %s168 = smul.addr %s167, 32
        %s169 = smul.addr %s168, 8
        %s170 = scalar_lea.vmem %s1, %s169
      $region32: #{basic_block_forward.7} parent=23 // pred_fallthru
        _
    $region24: #{basic_block_forward.7} parent=5 // pred_fallthru
      _
    %p171 = scmp.le.s32.totalorder 1, %s10
    %p172 = scmp.lt.s32.totalorder %s10, 3
    %p173 = pnand %p171, %p172
    %p174 = pneg %p173
    // Predicated region
    $region33: #{basic_block_forward.7} parent=5 // pred_check
      _
    $region34: #{basic_block_forward.7} parent=5 // pred_check_branch
      %176 = sbr.rel (%p173) target = $region36
    $region35: #{basic_block_forward.7} parent=5 // pred_region
      %s177 = ssub.s32 %s10, 1
      %p178 = scmp.lt.s32.totalorder %s15, 1
      %s179 = scalar_select %p178, %s15, 1
      %s180 = smul.addr %s179, 32
      %s181 = smul.addr %s180, 8
      %s182 = scalar_lea.vmem %s0, %s181
      %p183 = pneg %p36
      %p184 = pneg %p33
      %p185 = scmp.lt.s32.totalorder %s15, 1
      %s186 = scalar_select %p185, %s15, 1
      %s187 = smul.addr %s186, 32
      %s188 = smul.addr %s187, 8
      %s189 = scalar_lea.vmem %s1, %s188
      %p190 = pneg %p62
      %p191 = pneg %p59
      %p192 = pneg %p83
      %p193 = pneg %p80
      %p194 = pneg %p104
      %p195 = pneg %p101
      %p196 = pneg %p130
      %p197 = pneg %p127
      %p198 = scmp.lt.s32.totalorder %s15, 1
      %s199 = scalar_select %p198, %s15, 1
      %s200 = smul.addr %s199, 32
      %s201 = smul.addr %s200, 8
      %s202 = scalar_lea.vmem %s4, %s201
      %p203 = scmp.lt.s32.totalorder %s15, 1
      %s204 = scalar_select %p203, %s15, 1
      %s205 = smul.addr %s204, 32
      %s206 = smul.addr %s205, 8
      %s207 = scalar_lea.vmem %s0, %s206
      %p208 = scmp.lt.s32.totalorder %s15, 1
      %s209 = scalar_select %p208, %s15, 1
      %s210 = smul.addr %s209, 32
      %s211 = smul.addr %s210, 8
      %s212 = scalar_lea.vmem %s1, %s211
      %p213 = scmp.lt.s32.totalorder %s15, 1
      %s214 = scalar_select %p213, %s15, 1
      %s215 = smul.addr %s214, 32
      %s216 = smul.addr %s215, 8
      %s217 = scalar_lea.vmem %s4, %s216
      %v218 = vld [vmem:[%s207] sm:$0xff]
      %v219 = vld [vmem:[%s207 + $0x8] sm:$0xff]
      %v220 = vld [vmem:[%s207 + $0x10] sm:$0xff]
      %v221 = vld [vmem:[%s207 + $0x18] sm:$0xff]
      %v222 = vld [vmem:[%s207 + $0x20] sm:$0xff]
      %v223 = vld [vmem:[%s207 + $0x28] sm:$0xff]
      %v224 = vld [vmem:[%s207 + $0x30] sm:$0xff]
      %v225 = vld [vmem:[%s207 + $0x38] sm:$0xff]
      %v226 = vld [vmem:[%s207 + $0x40] sm:$0xff]
      %v227 = vld [vmem:[%s207 + $0x48] sm:$0xff]
      %v228 = vld [vmem:[%s207 + $0x50] sm:$0xff]
      %v229 = vld [vmem:[%s207 + $0x58] sm:$0xff]
      %v230 = vld [vmem:[%s207 + $0x60] sm:$0xff]
      %v231 = vld [vmem:[%s207 + $0x68] sm:$0xff]
      %v232 = vld [vmem:[%s207 + $0x70] sm:$0xff]
      %v233 = vld [vmem:[%s207 + $0x78] sm:$0xff]
      %v234 = vld [vmem:[%s207 + $0x80] sm:$0xff]
      %v235 = vld [vmem:[%s207 + $0x88] sm:$0xff]
      %v236 = vld [vmem:[%s207 + $0x90] sm:$0xff]
      %v237 = vld [vmem:[%s207 + $0x98] sm:$0xff]
      %v238 = vld [vmem:[%s207 + $0xa0] sm:$0xff]
      %v239 = vld [vmem:[%s207 + $0xa8] sm:$0xff]
      %v240 = vld [vmem:[%s207 + $0xb0] sm:$0xff]
      %v241 = vld [vmem:[%s207 + $0xb8] sm:$0xff]
      %v242 = vld [vmem:[%s207 + $0xc0] sm:$0xff]
      %v243 = vld [vmem:[%s207 + $0xc8] sm:$0xff]
      %v244 = vld [vmem:[%s207 + $0xd0] sm:$0xff]
      %v245 = vld [vmem:[%s207 + $0xd8] sm:$0xff]
      %v246 = vld [vmem:[%s207 + $0xe0] sm:$0xff]
      %v247 = vld [vmem:[%s207 + $0xe8] sm:$0xff]
      %v248 = vld [vmem:[%s207 + $0xf0] sm:$0xff]
      %v249 = vld [vmem:[%s207 + $0xf8] sm:$0xff]
      %v250 = vld [vmem:[%s2] sm:$0x1]
      %v252 = vperm.slane %v250, 0
      %v254 = vmul.f32 %v218, %v252
      %v255 = vmul.f32 %v219, %v252
      %v256 = vmul.f32 %v220, %v252
      %v257 = vmul.f32 %v221, %v252
      %v258 = vmul.f32 %v222, %v252
      %v259 = vmul.f32 %v223, %v252
      %v260 = vmul.f32 %v224, %v252
      %v261 = vmul.f32 %v225, %v252
      %v262 = vmul.f32 %v226, %v252
      %v263 = vmul.f32 %v227, %v252
      %v264 = vmul.f32 %v228, %v252
      %v265 = vmul.f32 %v229, %v252
      %v266 = vmul.f32 %v230, %v252
      %v267 = vmul.f32 %v231, %v252
      %v268 = vmul.f32 %v232, %v252
      %v269 = vmul.f32 %v233, %v252
      %v270 = vmul.f32 %v234, %v252
      %v271 = vmul.f32 %v235, %v252
      %v272 = vmul.f32 %v236, %v252
      %v273 = vmul.f32 %v237, %v252
      %v274 = vmul.f32 %v238, %v252
      %v275 = vmul.f32 %v239, %v252
      %v276 = vmul.f32 %v240, %v252
      %v277 = vmul.f32 %v241, %v252
      %v278 = vmul.f32 %v242, %v252
      %v279 = vmul.f32 %v243, %v252
      %v280 = vmul.f32 %v244, %v252
      %v281 = vmul.f32 %v245, %v252
      %v282 = vmul.f32 %v246, %v252
      %v283 = vmul.f32 %v247, %v252
      %v284 = vmul.f32 %v248, %v252
      %v285 = vmul.f32 %v249, %v252
      %v286 = vld [vmem:[%s3] sm:$0x1]
      %v288 = vperm.slane %v286, 0
      %v290 = vadd.f32 %v254, %v288
      %v291 = vadd.f32 %v255, %v288
      %v292 = vadd.f32 %v256, %v288
      %v293 = vadd.f32 %v257, %v288
      %v294 = vadd.f32 %v258, %v288
      %v295 = vadd.f32 %v259, %v288
      %v296 = vadd.f32 %v260, %v288
      %v297 = vadd.f32 %v261, %v288
      %v298 = vadd.f32 %v262, %v288
      %v299 = vadd.f32 %v263, %v288
      %v300 = vadd.f32 %v264, %v288
      %v301 = vadd.f32 %v265, %v288
      %v302 = vadd.f32 %v266, %v288
      %v303 = vadd.f32 %v267, %v288
      %v304 = vadd.f32 %v268, %v288
      %v305 = vadd.f32 %v269, %v288
      %v306 = vadd.f32 %v270, %v288
      %v307 = vadd.f32 %v271, %v288
      %v308 = vadd.f32 %v272, %v288
      %v309 = vadd.f32 %v273, %v288
      %v310 = vadd.f32 %v274, %v288
      %v311 = vadd.f32 %v275, %v288
      %v312 = vadd.f32 %v276, %v288
      %v313 = vadd.f32 %v277, %v288
      %v314 = vadd.f32 %v278, %v288
      %v315 = vadd.f32 %v279, %v288
      %v316 = vadd.f32 %v280, %v288
      %v317 = vadd.f32 %v281, %v288
      %v318 = vadd.f32 %v282, %v288
      %v319 = vadd.f32 %v283, %v288
      %v320 = vadd.f32 %v284, %v288
      %v321 = vadd.f32 %v285, %v288
      %v322 = vld [vmem:[%s212] sm:$0xff]
      %v323 = vld [vmem:[%s212 + $0x8] sm:$0xff]
      %v324 = vld [vmem:[%s212 + $0x10] sm:$0xff]
      %v325 = vld [vmem:[%s212 + $0x18] sm:$0xff]
      %v326 = vld [vmem:[%s212 + $0x20] sm:$0xff]
      %v327 = vld [vmem:[%s212 + $0x28] sm:$0xff]
      %v328 = vld [vmem:[%s212 + $0x30] sm:$0xff]
      %v329 = vld [vmem:[%s212 + $0x38] sm:$0xff]
      %v330 = vld [vmem:[%s212 + $0x40] sm:$0xff]
      %v331 = vld [vmem:[%s212 + $0x48] sm:$0xff]
      %v332 = vld [vmem:[%s212 + $0x50] sm:$0xff]
      %v333 = vld [vmem:[%s212 + $0x58] sm:$0xff]
      %v334 = vld [vmem:[%s212 + $0x60] sm:$0xff]
      %v335 = vld [vmem:[%s212 + $0x68] sm:$0xff]
      %v336 = vld [vmem:[%s212 + $0x70] sm:$0xff]
      %v337 = vld [vmem:[%s212 + $0x78] sm:$0xff]
      %v338 = vld [vmem:[%s212 + $0x80] sm:$0xff]
      %v339 = vld [vmem:[%s212 + $0x88] sm:$0xff]
      %v340 = vld [vmem:[%s212 + $0x90] sm:$0xff]
      %v341 = vld [vmem:[%s212 + $0x98] sm:$0xff]
      %v342 = vld [vmem:[%s212 + $0xa0] sm:$0xff]
      %v343 = vld [vmem:[%s212 + $0xa8] sm:$0xff]
      %v344 = vld [vmem:[%s212 + $0xb0] sm:$0xff]
      %v345 = vld [vmem:[%s212 + $0xb8] sm:$0xff]
      %v346 = vld [vmem:[%s212 + $0xc0] sm:$0xff]
      %v347 = vld [vmem:[%s212 + $0xc8] sm:$0xff]
      %v348 = vld [vmem:[%s212 + $0xd0] sm:$0xff]
      %v349 = vld [vmem:[%s212 + $0xd8] sm:$0xff]
      %v350 = vld [vmem:[%s212 + $0xe0] sm:$0xff]
      %v351 = vld [vmem:[%s212 + $0xe8] sm:$0xff]
      %v352 = vld [vmem:[%s212 + $0xf0] sm:$0xff]
      %v353 = vld [vmem:[%s212 + $0xf8] sm:$0xff]
      %v354 = vadd.f32 %v290, %v322
      %v355 = vadd.f32 %v291, %v323
      %v356 = vadd.f32 %v292, %v324
      %v357 = vadd.f32 %v293, %v325
      %v358 = vadd.f32 %v294, %v326
      %v359 = vadd.f32 %v295, %v327
      %v360 = vadd.f32 %v296, %v328
      %v361 = vadd.f32 %v297, %v329
      %v362 = vadd.f32 %v298, %v330
      %v363 = vadd.f32 %v299, %v331
      %v364 = vadd.f32 %v300, %v332
      %v365 = vadd.f32 %v301, %v333
      %v366 = vadd.f32 %v302, %v334
      %v367 = vadd.f32 %v303, %v335
      %v368 = vadd.f32 %v304, %v336
      %v369 = vadd.f32 %v305, %v337
      %v370 = vadd.f32 %v306, %v338
      %v371 = vadd.f32 %v307, %v339
      %v372 = vadd.f32 %v308, %v340
      %v373 = vadd.f32 %v309, %v341
      %v374 = vadd.f32 %v310, %v342
      %v375 = vadd.f32 %v311, %v343
      %v376 = vadd.f32 %v312, %v344
      %v377 = vadd.f32 %v313, %v345
      %v378 = vadd.f32 %v314, %v346
      %v379 = vadd.f32 %v315, %v347
      %v380 = vadd.f32 %v316, %v348
      %v381 = vadd.f32 %v317, %v349
      %v382 = vadd.f32 %v318, %v350
      %v383 = vadd.f32 %v319, %v351
      %v384 = vadd.f32 %v320, %v352
      %v385 = vadd.f32 %v321, %v353
      %v386 = vmax.f32 %v354, 0.0
      %v387 = vmax.f32 %v355, 0.0
      %v388 = vmax.f32 %v356, 0.0
      %v389 = vmax.f32 %v357, 0.0
      %v390 = vmax.f32 %v358, 0.0
      %v391 = vmax.f32 %v359, 0.0
      %v392 = vmax.f32 %v360, 0.0
      %v393 = vmax.f32 %v361, 0.0
      %v394 = vmax.f32 %v362, 0.0
      %v395 = vmax.f32 %v363, 0.0
      %v396 = vmax.f32 %v364, 0.0
      %v397 = vmax.f32 %v365, 0.0
      %v398 = vmax.f32 %v366, 0.0
      %v399 = vmax.f32 %v367, 0.0
      %v400 = vmax.f32 %v368, 0.0
      %v401 = vmax.f32 %v369, 0.0
      %v402 = vmax.f32 %v370, 0.0
      %v403 = vmax.f32 %v371, 0.0
      %v404 = vmax.f32 %v372, 0.0
      %v405 = vmax.f32 %v373, 0.0
      %v406 = vmax.f32 %v374, 0.0
      %v407 = vmax.f32 %v375, 0.0
      %v408 = vmax.f32 %v376, 0.0
      %v409 = vmax.f32 %v377, 0.0
      %v410 = vmax.f32 %v378, 0.0
      %v411 = vmax.f32 %v379, 0.0
      %v412 = vmax.f32 %v380, 0.0
      %v413 = vmax.f32 %v381, 0.0
      %v414 = vmax.f32 %v382, 0.0
      %v415 = vmax.f32 %v383, 0.0
      %v416 = vmax.f32 %v384, 0.0
      %v417 = vmax.f32 %v385, 0.0
      %v418 = vmin.f32 %v386, 6.0
      %v419 = vmin.f32 %v387, 6.0
      %v420 = vmin.f32 %v388, 6.0
      %v421 = vmin.f32 %v389, 6.0
      %v422 = vmin.f32 %v390, 6.0
      %v423 = vmin.f32 %v391, 6.0
      %v424 = vmin.f32 %v392, 6.0
      %v425 = vmin.f32 %v393, 6.0
      %v426 = vmin.f32 %v394, 6.0
      %v427 = vmin.f32 %v395, 6.0
      %v428 = vmin.f32 %v396, 6.0
      %v429 = vmin.f32 %v397, 6.0
      %v430 = vmin.f32 %v398, 6.0
      %v431 = vmin.f32 %v399, 6.0
      %v432 = vmin.f32 %v400, 6.0
      %v433 = vmin.f32 %v401, 6.0
      %v434 = vmin.f32 %v402, 6.0
      %v435 = vmin.f32 %v403, 6.0
      %v436 = vmin.f32 %v404, 6.0
      %v437 = vmin.f32 %v405, 6.0
      %v438 = vmin.f32 %v406, 6.0
      %v439 = vmin.f32 %v407, 6.0
      %v440 = vmin.f32 %v408, 6.0
      %v441 = vmin.f32 %v409, 6.0
      %v442 = vmin.f32 %v410, 6.0
      %v443 = vmin.f32 %v411, 6.0
      %v444 = vmin.f32 %v412, 6.0
      %v445 = vmin.f32 %v413, 6.0
      %v446 = vmin.f32 %v414, 6.0
      %v447 = vmin.f32 %v415, 6.0
      %v448 = vmin.f32 %v416, 6.0
      %v449 = vmin.f32 %v417, 6.0
      %450 = vst [vmem:[%s217] sm:$0xff] %v418
      %451 = vst [vmem:[%s217 + $0x8] sm:$0xff] %v419
      %452 = vst [vmem:[%s217 + $0x10] sm:$0xff] %v420
      %453 = vst [vmem:[%s217 + $0x18] sm:$0xff] %v421
      %454 = vst [vmem:[%s217 + $0x20] sm:$0xff] %v422
      %455 = vst [vmem:[%s217 + $0x28] sm:$0xff] %v423
      %456 = vst [vmem:[%s217 + $0x30] sm:$0xff] %v424
      %457 = vst [vmem:[%s217 + $0x38] sm:$0xff] %v425
      %458 = vst [vmem:[%s217 + $0x40] sm:$0xff] %v426
      %459 = vst [vmem:[%s217 + $0x48] sm:$0xff] %v427
      %460 = vst [vmem:[%s217 + $0x50] sm:$0xff] %v428
      %461 = vst [vmem:[%s217 + $0x58] sm:$0xff] %v429
      %462 = vst [vmem:[%s217 + $0x60] sm:$0xff] %v430
      %463 = vst [vmem:[%s217 + $0x68] sm:$0xff] %v431
      %464 = vst [vmem:[%s217 + $0x70] sm:$0xff] %v432
      %465 = vst [vmem:[%s217 + $0x78] sm:$0xff] %v433
      %466 = vst [vmem:[%s217 + $0x80] sm:$0xff] %v434
      %467 = vst [vmem:[%s217 + $0x88] sm:$0xff] %v435
      %468 = vst [vmem:[%s217 + $0x90] sm:$0xff] %v436
      %469 = vst [vmem:[%s217 + $0x98] sm:$0xff] %v437
      %470 = vst [vmem:[%s217 + $0xa0] sm:$0xff] %v438
      %471 = vst [vmem:[%s217 + $0xa8] sm:$0xff] %v439
      %472 = vst [vmem:[%s217 + $0xb0] sm:$0xff] %v440
      %473 = vst [vmem:[%s217 + $0xb8] sm:$0xff] %v441
      %474 = vst [vmem:[%s217 + $0xc0] sm:$0xff] %v442
      %475 = vst [vmem:[%s217 + $0xc8] sm:$0xff] %v443
      %476 = vst [vmem:[%s217 + $0xd0] sm:$0xff] %v444
      %477 = vst [vmem:[%s217 + $0xd8] sm:$0xff] %v445
      %478 = vst [vmem:[%s217 + $0xe0] sm:$0xff] %v446
      %479 = vst [vmem:[%s217 + $0xe8] sm:$0xff] %v447
      %480 = vst [vmem:[%s217 + $0xf0] sm:$0xff] %v448
      %481 = vst [vmem:[%s217 + $0xf8] sm:$0xff] %v449
      %p482 = scmp.lt.s32.totalorder %s15, 1
      %s483 = scalar_select %p482, %s15, 1
      %s484 = smul.addr %s483, 32
      %s485 = smul.addr %s484, 8
      %s486 = scalar_lea.vmem %s4, %s485
      // Predicated region
      $region37: #{basic_block_forward.7} parent=35 // pred_check
        %p487 = pneg %p127
      $region38: #{basic_block_forward.7} parent=35 // pred_check_branch
        %489 = sbr.rel (%p487) target = $region40
      $region39: #{basic_block_forward.7} parent=35 // pred_region
        _
      $region40: #{basic_block_forward.7} parent=35 // pred_fallthru
        _
    $region36: #{basic_block_forward.7} parent=5 // pred_fallthru
      _
    %p490 = scmp.le.s32.totalorder 2, %s10
    // Predicated region
    $region41: #{basic_block_forward.7} parent=5 // pred_check
      %p491 = pneg %p490
    $region42: #{basic_block_forward.7} parent=5 // pred_check_branch
      %493 = sbr.rel (%p491) target = $region44
    $region43: #{basic_block_forward.7} parent=5 // pred_region
      %s494 = ssub.s32 %s10, 2
      // Predicated region
      $region45: #{basic_block_forward.7} parent=43 // pred_check
        %p495 = pneg %p133
      $region46: #{basic_block_forward.7} parent=43 // pred_check_branch
        %497 = sbr.rel (%p495) target = $region48
      $region47: #{basic_block_forward.7} parent=43 // pred_region
        %p498 = scmp.lt.s32.totalorder %s16, 1
        %s499 = scalar_select %p498, %s16, 1
        %s500 = smul.addr %s499, 32
        %s501 = smul.addr %s500, 8
        %s502 = scalar_lea.vmem %s4, %s501
      $region48: #{basic_block_forward.7} parent=43 // pred_fallthru
        _
    $region44: #{basic_block_forward.7} parent=5 // pred_fallthru
      _
  $region6: #{basic_block_forward.7} parent=0 // loop_footer
    %s14 = sadd.s32 1, %s10
  $region7: #{basic_block_forward.7} parent=0 // loop_footer_branch
    %9 = sbr.rel target = $region3
  $region8: #{basic_block_forward.7} parent=0 // loop_exit
    _

// kernel: basic_block_forward.4
$region0: #{basic_block_forward.4}
  #allocation0 [shape = 'u32[]', space=smem, size = 0x4, offset = 0x4, fixed_abs, tag = 'smem constant byte address 0x4 - core index']
  #allocation1 [shape = 'u32[72,128]{1,0:T(1,128)}', space=vmem, size = 0x9000, scoped, tag = 'internal scratch']
  %s0 = inlined_call_operand.vmem [shape: bf16[2,18,18,128], index: 0, kind: input, shape index: {}]
  %s1 = inlined_call_operand.vmem [shape: bf16[9,128,128], index: 1, kind: input, shape index: {}]
  %s2 = inlined_call_operand.vmem [shape: f32[2,256,128], index: 2, kind: output, shape index: {0}]
  %s3 = inlined_call_operand.vmem [shape: f32[2,2,128], index: 3, kind: output, shape index: {1}]
  %4 = xla_tuple %s2, %s3
  %s5 = sld [smem:[#allocation0]]
  $region49: #{basic_block_forward.4} parent=0
    _
  %s7 = ssub.s32 1, %s5
  %s8 = scalar_select 0, %s7, %s5
  loop: start=0, step=1, limit=4
  $region2: #{basic_block_forward.4} parent=0 // loop_pre_header
    _
  $region3: #{basic_block_forward.4} parent=0 // loop_header
    %s10 = sphi 0, %s14
    %p11 = scmp.ge.s32.totalorder %s10, 4
    %s20 = sphi 0, %s22
    %s23 = sphi 0, %s20
    %s24 = sphi 0, %s23
    %s40 = sphi 0, %s24
    %s44 = sphi 0, %s44
    %s46 = sphi 0, %s44
    %s47 = sphi 0, %s46
    %s61 = sphi 0, %s47
    %s67 = sphi 0, %s69
    %s70 = sphi 0, %s67
    %s71 = sphi 0, %s70
    %s87 = sphi 0, %s71
    %s93 = sphi 0, %s95
    %s96 = sphi 0, %s93
    %s97 = sphi 0, %s96
    %s113 = sphi 0, %s97
  $region4: #{basic_block_forward.4} parent=0 // loop_header_branch
    %13 = sbr.rel (%p11) target = $region8
  $region5: #{basic_block_forward.4} parent=0 // loop_body
    %s15 = ssub.s32 %s10, 1
    %s16 = ssub.s32 %s10, 2
    %s17 = sadd.s32 %s10, 1
    %s18 = ssub.s32 %s10, %s17
    %p19 = scmp.eq.s32.totalorder %s18, 0
    %s21 = sadd.s32 %s20, 1
    %s22 = scalar_select %p19, %s20, %s21
    %p25 = pneg %p19
    %p26 = scmp.eq.s32.totalorder %s10, 1
    %p27 = por %p25, %p26
    %p28 = scmp.ne.s32.totalorder %s20, %s23
    %p29 = scmp.eq.s32.totalorder %s10, 0
    %p30 = por %p28, %p29
    %p31 = scmp.ne.s32.totalorder %s20, %s23
    %p32 = scmp.eq.s32.totalorder %s15, 1
    %p33 = por %p31, %p32
    %p34 = scmp.ne.s32.totalorder %s23, %s24
    %p35 = scmp.eq.s32.totalorder %s15, 0
    %p36 = por %p34, %p35
    %p37 = scmp.ne.s32.totalorder %s23, %s24
    %p38 = scmp.eq.s32.totalorder %s16, 1
    %p39 = por %p37, %p38
    %p41 = scmp.ne.s32.totalorder %s24, %s40
    %p42 = scmp.eq.s32.totalorder %s16, 0
    %p43 = por %p41, %p42
    %s45 = sadd.s32 %s44, 1
    %p48 = scmp.eq.s32.totalorder %s10, 1
    %p49 = scmp.ne.s32.totalorder %s44, %s46
    %p50 = scmp.eq.s32.totalorder %s10, 0
    %p51 = por %p49, %p50
    %p52 = scmp.ne.s32.totalorder %s44, %s46
    %p53 = scmp.eq.s32.totalorder %s15, 1
    %p54 = por %p52, %p53
    %p55 = scmp.ne.s32.totalorder %s46, %s47
    %p56 = scmp.eq.s32.totalorder %s15, 0
    %p57 = por %p55, %p56
    %p58 = scmp.ne.s32.totalorder %s46, %s47
    %p59 = scmp.eq.s32.totalorder %s16, 1
    %p60 = por %p58, %p59
    %p62 = scmp.ne.s32.totalorder %s47, %s61
    %p63 = scmp.eq.s32.totalorder %s16, 0
    %p64 = por %p62, %p63
    %s65 = ssub.s32 %s10, %s17
    %p66 = scmp.eq.s32.totalorder %s65, 0
    %s68 = sadd.s32 %s67, 1
    %s69 = scalar_select %p66, %s67, %s68
    %p72 = pneg %p66
    %p73 = scmp.eq.s32.totalorder %s10, 1
    %p74 = por %p72, %p73
    %p75 = scmp.ne.s32.totalorder %s67, %s70
    %p76 = scmp.eq.s32.totalorder %s10, 0
    %p77 = por %p75, %p76
    %p78 = scmp.ne.s32.totalorder %s67, %s70
    %p79 = scmp.eq.s32.totalorder %s15, 1
    %p80 = por %p78, %p79
    %p81 = scmp.ne.s32.totalorder %s70, %s71
    %p82 = scmp.eq.s32.totalorder %s15, 0
    %p83 = por %p81, %p82
    %p84 = scmp.ne.s32.totalorder %s70, %s71
    %p85 = scmp.eq.s32.totalorder %s16, 1
    %p86 = por %p84, %p85
    %p88 = scmp.ne.s32.totalorder %s71, %s87
    %p89 = scmp.eq.s32.totalorder %s16, 0
    %p90 = por %p88, %p89
    %s91 = ssub.s32 %s10, %s17
    %p92 = scmp.eq.s32.totalorder %s91, 0
    %s94 = sadd.s32 %s93, 1
    %s95 = scalar_select %p92, %s93, %s94
    %p98 = pneg %p92
    %p99 = scmp.eq.s32.totalorder %s10, 1
    %p100 = por %p98, %p99
    %p101 = scmp.ne.s32.totalorder %s93, %s96
    %p102 = scmp.eq.s32.totalorder %s10, 0
    %p103 = por %p101, %p102
    %p104 = scmp.ne.s32.totalorder %s93, %s96
    %p105 = scmp.eq.s32.totalorder %s15, 1
    %p106 = por %p104, %p105
    %p107 = scmp.ne.s32.totalorder %s96, %s97
    %p108 = scmp.eq.s32.totalorder %s15, 0
    %p109 = por %p107, %p108
    %p110 = scmp.ne.s32.totalorder %s96, %s97
    %p111 = scmp.eq.s32.totalorder %s16, 1
    %p112 = por %p110, %p111
    %p114 = scmp.ne.s32.totalorder %s97, %s113
    %p115 = scmp.eq.s32.totalorder %s16, 0
    %p116 = por %p114, %p115
    %p117 = scmp.le.s32.totalorder 1, %s10
    %p118 = scmp.lt.s32.totalorder %s10, 3
    %p119 = pnand %p117, %p118
    %p120 = pneg %p119
    // Predicated region
    $region9: #{basic_block_forward.4} parent=5 // pred_check
      _
    $region10: #{basic_block_forward.4} parent=5 // pred_check_branch
      %122 = sbr.rel (%p119) target = $region12
    $region11: #{basic_block_forward.4} parent=5 // pred_region
      %s123 = ssub.s32 %s10, 1
      // Predicated region
      $region13: #{basic_block_forward.4} parent=11 // pred_check
        %p124 = pneg %p57
      $region14: #{basic_block_forward.4} parent=11 // pred_check_branch
        %126 = sbr.rel (%p124) target = $region16
      $region15: #{basic_block_forward.4} parent=11 // pred_region
        _
      $region16: #{basic_block_forward.4} parent=11 // pred_fallthru
        _
    $region12: #{basic_block_forward.4} parent=5 // pred_fallthru
      _
    %p127 = scmp.lt.s32.totalorder %s10, 2
    // Predicated region
    $region17: #{basic_block_forward.4} parent=5 // pred_check
      %p128 = pneg %p127
    $region18: #{basic_block_forward.4} parent=5 // pred_check_branch
      %130 = sbr.rel (%p128) target = $region20
    $region19: #{basic_block_forward.4} parent=5 // pred_region
      // Predicated region
      $region21: #{basic_block_forward.4} parent=19 // pred_check
        %p131 = pneg %p30
      $region22: #{basic_block_forward.4} parent=19 // pred_check_branch
        %133 = sbr.rel (%p131) target = $region24
      $region23: #{basic_block_forward.4} parent=19 // pred_region
        %p134 = scmp.lt.s32.totalorder %s10, 1
        %s135 = scalar_select %p134, %s10, 1
        %s136 = smul.addr %s135, 54
        %s137 = smul.addr %s136, 4
        %s138 = scalar_lea.vmem %s0, %s137
      $region24: #{basic_block_forward.4} parent=19 // pred_fallthru
        _
    $region20: #{basic_block_forward.4} parent=5 // pred_fallthru
      _
    %p139 = scmp.le.s32.totalorder 1, %s10
    %p140 = scmp.lt.s32.totalorder %s10, 3
    %p141 = pnand %p139, %p140
    %p142 = pneg %p141
    // Predicated region
    $region25: #{basic_block_forward.4} parent=5 // pred_check
      _
    $region26: #{basic_block_forward.4} parent=5 // pred_check_branch
      %144 = sbr.rel (%p141) target = $region28
    $region27: #{basic_block_forward.4} parent=5 // pred_region
      %s145 = ssub.s32 %s10, 1
      %p146 = scmp.lt.s32.totalorder %s15, 1
      %s147 = scalar_select %p146, %s15, 1
      %s148 = smul.addr %s147, 54
      %s149 = smul.addr %s148, 4
      %s150 = scalar_lea.vmem %s0, %s149
      %p151 = pneg %p36
      %p152 = pneg %p33
      %p153 = pneg %p57
      %p154 = pneg %p54
      %p155 = pneg %p83
      %p156 = pneg %p80
      %p157 = scmp.lt.s32.totalorder %s15, 1
      %s158 = scalar_select %p157, %s15, 1
      %s159 = smul.addr %s158, 32
      %s160 = smul.addr %s159, 8
      %s161 = scalar_lea.vmem %s2, %s160
      %p162 = pneg %p109
      %p163 = pneg %p106
      %p164 = scmp.lt.s32.totalorder %s15, 1
      %s165 = scalar_select %p164, %s15, 1
      %s166 = smul.addr %s165, 2
      %s167 = scalar_lea.vmem %s3, %s166
      %p168 = scmp.lt.s32.totalorder %s15, 1
      %s169 = scalar_select %p168, %s15, 1
      %s170 = smul.addr %s169, 54
      %s171 = smul.addr %s170, 4
      %s172 = scalar_lea.vmem %s0, %s171
      %p173 = scmp.lt.s32.totalorder %s15, 1
      %s174 = scalar_select %p173, %s15, 1
      %s175 = smul.addr %s174, 32
      %s176 = smul.addr %s175, 8
      %s177 = scalar_lea.vmem %s2, %s176
      %p178 = scmp.lt.s32.totalorder %s15, 1
      %s179 = scalar_select %p178, %s15, 1
      %s180 = smul.addr %s179, 2
      %s181 = scalar_lea.vmem %s3, %s180
      %182 = vst [vmem:[%s177] sm:$0xff] 0.0
      %183 = vst [vmem:[%s177 + $0x8] sm:$0xff] 0.0
      %184 = vst [vmem:[%s177 + $0x10] sm:$0xff] 0.0
      %185 = vst [vmem:[%s177 + $0x18] sm:$0xff] 0.0
      %186 = vst [vmem:[%s177 + $0x20] sm:$0xff] 0.0
      %187 = vst [vmem:[%s177 + $0x28] sm:$0xff] 0.0
      %188 = vst [vmem:[%s177 + $0x30] sm:$0xff] 0.0
      %189 = vst [vmem:[%s177 + $0x38] sm:$0xff] 0.0
      %190 = vst [vmem:[%s177 + $0x40] sm:$0xff] 0.0
      %191 = vst [vmem:[%s177 + $0x48] sm:$0xff] 0.0
      %192 = vst [vmem:[%s177 + $0x50] sm:$0xff] 0.0
      %193 = vst [vmem:[%s177 + $0x58] sm:$0xff] 0.0
      %194 = vst [vmem:[%s177 + $0x60] sm:$0xff] 0.0
      %195 = vst [vmem:[%s177 + $0x68] sm:$0xff] 0.0
      %196 = vst [vmem:[%s177 + $0x70] sm:$0xff] 0.0
      %197 = vst [vmem:[%s177 + $0x78] sm:$0xff] 0.0
      %198 = vst [vmem:[%s177 + $0x80] sm:$0xff] 0.0
      %199 = vst [vmem:[%s177 + $0x88] sm:$0xff] 0.0
      %200 = vst [vmem:[%s177 + $0x90] sm:$0xff] 0.0
      %201 = vst [vmem:[%s177 + $0x98] sm:$0xff] 0.0
      %202 = vst [vmem:[%s177 + $0xa0] sm:$0xff] 0.0
      %203 = vst [vmem:[%s177 + $0xa8] sm:$0xff] 0.0
      %204 = vst [vmem:[%s177 + $0xb0] sm:$0xff] 0.0
      %205 = vst [vmem:[%s177 + $0xb8] sm:$0xff] 0.0
      %206 = vst [vmem:[%s177 + $0xc0] sm:$0xff] 0.0
      %207 = vst [vmem:[%s177 + $0xc8] sm:$0xff] 0.0
      %208 = vst [vmem:[%s177 + $0xd0] sm:$0xff] 0.0
      %209 = vst [vmem:[%s177 + $0xd8] sm:$0xff] 0.0
      %210 = vst [vmem:[%s177 + $0xe0] sm:$0xff] 0.0
      %211 = vst [vmem:[%s177 + $0xe8] sm:$0xff] 0.0
      %212 = vst [vmem:[%s177 + $0xf0] sm:$0xff] 0.0
      %213 = vst [vmem:[%s177 + $0xf8] sm:$0xff] 0.0
      %v214 = vld [vmem:[%s172] sm:$0xf]
      %v215 = vld [vmem:[%s172 + $0x4] sm:$0xf]
      %v216 = vld [vmem:[%s172 + $0xc] sm:$0xf]
      %v217 = vld [vmem:[%s172 + $0x10] sm:$0xf]
      %v218 = vld [vmem:[%s172 + $0x18] sm:$0xf]
      %v219 = vld [vmem:[%s172 + $0x1c] sm:$0xf]
      %v220 = vld [vmem:[%s172 + $0x24] sm:$0xf]
      %v221 = vld [vmem:[%s172 + $0x28] sm:$0xf]
      %v222 = vld [vmem:[%s172 + $0x30] sm:$0xf]
      %v223 = vld [vmem:[%s172 + $0x34] sm:$0xf]
      %v224 = vld [vmem:[%s172 + $0x3c] sm:$0xf]
      %v225 = vld [vmem:[%s172 + $0x40] sm:$0xf]
      %v226 = vld [vmem:[%s172 + $0x48] sm:$0xf]
      %v227 = vld [vmem:[%s172 + $0x4c] sm:$0xf]
      %v228 = vld [vmem:[%s172 + $0x54] sm:$0xf]
      %v229 = vld [vmem:[%s172 + $0x58] sm:$0xf]
      %v230 = vld [vmem:[%s172 + $0x60] sm:$0xf]
      %v231 = vld [vmem:[%s172 + $0x64] sm:$0xf]
      %v232 = vld [vmem:[%s172 + $0x6c] sm:$0xf]
      %v233 = vld [vmem:[%s172 + $0x70] sm:$0xf]
      %v234 = vld [vmem:[%s172 + $0x78] sm:$0xf]
      %v235 = vld [vmem:[%s172 + $0x7c] sm:$0xf]
      %v236 = vld [vmem:[%s172 + $0x84] sm:$0xf]
      %v237 = vld [vmem:[%s172 + $0x88] sm:$0xf]
      %v238 = vld [vmem:[%s172 + $0x90] sm:$0xf]
      %v239 = vld [vmem:[%s172 + $0x94] sm:$0xf]
      %v240 = vld [vmem:[%s172 + $0x9c] sm:$0xf]
      %v241 = vld [vmem:[%s172 + $0xa0] sm:$0xf]
      %v242 = vld [vmem:[%s172 + $0xa8] sm:$0xf]
      %v243 = vld [vmem:[%s172 + $0xac] sm:$0xf]
      %v244 = vld [vmem:[%s172 + $0xb4] sm:$0xf]
      %v245 = vld [vmem:[%s172 + $0xb8] sm:$0xf]
      %v246 = vld [vmem:[%s177] sm:$0xff]
      %v247 = vld [vmem:[%s177 + $0x8] sm:$0xff]
      %v248 = vld [vmem:[%s177 + $0x10] sm:$0xff]
      %v249 = vld [vmem:[%s177 + $0x18] sm:$0xff]
      %v250 = vld [vmem:[%s177 + $0x20] sm:$0xff]
      %v251 = vld [vmem:[%s177 + $0x28] sm:$0xff]
      %v252 = vld [vmem:[%s177 + $0x30] sm:$0xff]
      %v253 = vld [vmem:[%s177 + $0x38] sm:$0xff]
      %v254 = vld [vmem:[%s177 + $0x40] sm:$0xff]
      %v255 = vld [vmem:[%s177 + $0x48] sm:$0xff]
      %v256 = vld [vmem:[%s177 + $0x50] sm:$0xff]
      %v257 = vld [vmem:[%s177 + $0x58] sm:$0xff]
      %v258 = vld [vmem:[%s177 + $0x60] sm:$0xff]
      %v259 = vld [vmem:[%s177 + $0x68] sm:$0xff]
      %v260 = vld [vmem:[%s177 + $0x70] sm:$0xff]
      %v261 = vld [vmem:[%s177 + $0x78] sm:$0xff]
      %v262 = vld [vmem:[%s177 + $0x80] sm:$0xff]
      %v263 = vld [vmem:[%s177 + $0x88] sm:$0xff]
      %v264 = vld [vmem:[%s177 + $0x90] sm:$0xff]
      %v265 = vld [vmem:[%s177 + $0x98] sm:$0xff]
      %v266 = vld [vmem:[%s177 + $0xa0] sm:$0xff]
      %v267 = vld [vmem:[%s177 + $0xa8] sm:$0xff]
      %v268 = vld [vmem:[%s177 + $0xb0] sm:$0xff]
      %v269 = vld [vmem:[%s177 + $0xb8] sm:$0xff]
      %v270 = vld [vmem:[%s177 + $0xc0] sm:$0xff]
      %v271 = vld [vmem:[%s177 + $0xc8] sm:$0xff]
      %v272 = vld [vmem:[%s177 + $0xd0] sm:$0xff]
      %v273 = vld [vmem:[%s177 + $0xd8] sm:$0xff]
      %v274 = vld [vmem:[%s177 + $0xe0] sm:$0xff]
      %v275 = vld [vmem:[%s177 + $0xe8] sm:$0xff]
      %v276 = vld [vmem:[%s177 + $0xf0] sm:$0xff]
      %v277 = vld [vmem:[%s177 + $0xf8] sm:$0xff]
      %v278 = vld [vmem:[%s1] sm:$0xf]
      %v279 = vld [vmem:[%s1 + $0x4] sm:$0xf]
      %v280 = vld [vmem:[%s1 + $0x8] sm:$0xf]
      %v281 = vld [vmem:[%s1 + $0xc] sm:$0xf]
      %v282 = vld [vmem:[%s1 + $0x10] sm:$0xf]
      %v283 = vld [vmem:[%s1 + $0x14] sm:$0xf]
      %v284 = vld [vmem:[%s1 + $0x18] sm:$0xf]
      %v285 = vld [vmem:[%s1 + $0x1c] sm:$0xf]
      %v286 = vld [vmem:[%s1 + $0x20] sm:$0xf]
      %v287 = vld [vmem:[%s1 + $0x24] sm:$0xf]
      %v288 = vld [vmem:[%s1 + $0x28] sm:$0xf]
      %v289 = vld [vmem:[%s1 + $0x2c] sm:$0xf]
      %v290 = vld [vmem:[%s1 + $0x30] sm:$0xf]
      %v291 = vld [vmem:[%s1 + $0x34] sm:$0xf]
      %v292 = vld [vmem:[%s1 + $0x38] sm:$0xf]
      %v293 = vld [vmem:[%s1 + $0x3c] sm:$0xf]
      %v326 = vunpack.c.l.b16 %v214
      %v327 = vunpack.c.l.b16 %v215
      %v328 = vunpack.c.l.b16 %v216
      %v329 = vunpack.c.l.b16 %v217
      %v330 = vunpack.c.l.b16 %v218
      %v331 = vunpack.c.l.b16 %v219
      %v332 = vunpack.c.l.b16 %v220
      %v333 = vunpack.c.l.b16 %v221
      %v334 = vunpack.c.l.b16 %v222
      %v335 = vunpack.c.l.b16 %v223
      %v336 = vunpack.c.l.b16 %v224
      %v337 = vunpack.c.l.b16 %v225
      %v338 = vunpack.c.l.b16 %v226
      %v339 = vunpack.c.l.b16 %v227
      %v340 = vunpack.c.l.b16 %v228
      %v341 = vunpack.c.l.b16 %v229
      %v342 = vunpack.c.l.b16 %v230
      %v343 = vunpack.c.l.b16 %v231
      %v344 = vunpack.c.l.b16 %v232
      %v345 = vunpack.c.l.b16 %v233
      %v346 = vunpack.c.l.b16 %v234
      %v347 = vunpack.c.l.b16 %v235
      %v348 = vunpack.c.l.b16 %v236
      %v349 = vunpack.c.l.b16 %v237
      %v350 = vunpack.c.l.b16 %v238
      %v351 = vunpack.c.l.b16 %v239
      %v352 = vunpack.c.l.b16 %v240
      %v353 = vunpack.c.l.b16 %v241
      %v354 = vunpack.c.l.b16 %v242
      %v355 = vunpack.c.l.b16 %v243
      %v356 = vunpack.c.l.b16 %v244
      %v357 = vunpack.c.l.b16 %v245
      %v358 = vpack.c.b16 %v327, %v326
      %v359 = vpack.c.b16 %v329, %v328
      %v360 = vpack.c.b16 %v331, %v330
      %v361 = vpack.c.b16 %v333, %v332
      %v362 = vpack.c.b16 %v335, %v334
      %v363 = vpack.c.b16 %v337, %v336
      %v364 = vpack.c.b16 %v339, %v338
      %v365 = vpack.c.b16 %v341, %v340
      %v366 = vpack.c.b16 %v343, %v342
      %v367 = vpack.c.b16 %v345, %v344
      %v368 = vpack.c.b16 %v347, %v346
      %v369 = vpack.c.b16 %v349, %v348
      %v370 = vpack.c.b16 %v351, %v350
      %v371 = vpack.c.b16 %v353, %v352
      %v372 = vpack.c.b16 %v355, %v354
      %v373 = vpack.c.b16 %v357, %v356
      %v406 = vunpack.c.l.b16 %v278
      %v407 = vunpack.c.l.b16 %v279
      %v408 = vunpack.c.l.b16 %v280
      %v409 = vunpack.c.l.b16 %v281
      %v410 = vunpack.c.l.b16 %v282
      %v411 = vunpack.c.l.b16 %v283
      %v412 = vunpack.c.l.b16 %v284
      %v413 = vunpack.c.l.b16 %v285
      %v414 = vunpack.c.l.b16 %v286
      %v415 = vunpack.c.l.b16 %v287
      %v416 = vunpack.c.l.b16 %v288
      %v417 = vunpack.c.l.b16 %v289
      %v418 = vunpack.c.l.b16 %v290
      %v419 = vunpack.c.l.b16 %v291
      %v420 = vunpack.c.l.b16 %v292
      %v421 = vunpack.c.l.b16 %v293
      %v422 = vpack.c.b16 %v407, %v406
      %v423 = vpack.c.b16 %v409, %v408
      %v424 = vpack.c.b16 %v411, %v410
      %v425 = vpack.c.b16 %v413, %v412
      %v426 = vpack.c.b16 %v415, %v414
      %v427 = vpack.c.b16 %v417, %v416
      %v428 = vpack.c.b16 %v419, %v418
      %v429 = vpack.c.b16 %v421, %v420
      %438 = vmatpush.bf16.msra.mxu0 %v429
      %439 = vmatpush.bf16.msra.mxu0 %v428
      %440 = vmatpush.bf16.msra.mxu0 %v427
      %441 = vmatpush.bf16.msra.mxu0 %v426
      %442 = vmatpush.bf16.msra.mxu0 %v425
      %443 = vmatpush.bf16.msra.mxu0 %v424
      %444 = vmatpush.bf16.msra.mxu0 %v423
      %445 = vmatpush.bf16.msra.mxu0 %v422
      %446 = vmatmul.bf16.gmra.mxu0 %v358
      %v447 = vpop.f32.mrf.mxu0
      %v448 = vadd.f32 0.0, %v447
      %v449 = vpop.f32.mrf.mxu0
      %v450 = vadd.f32 0.0, %v449
      %451 = vmatmul.bf16.gmra.mxu0 %v359
      %v452 = vpop.f32.mrf.mxu0
      %v453 = vadd.f32 0.0, %v452
      %v454 = vpop.f32.mrf.mxu0
      %v455 = vadd.f32 0.0, %v454
      %456 = vmatmul.bf16.gmra.mxu0 %v360
      %v457 = vpop.f32.mrf.mxu0
      %v458 = vadd.f32 0.0, %v457
      %v459 = vpop.f32.mrf.mxu0
      %v460 = vadd.f32 0.0, %v459
      %461 = vmatmul.bf16.gmra.mxu0 %v361
      %v462 = vpop.f32.mrf.mxu0
      %v463 = vadd.f32 0.0, %v462
      %v464 = vpop.f32.mrf.mxu0
      %v465 = vadd.f32 0.0, %v464
      %466 = vmatmul.bf16.gmra.mxu0 %v362
      %v467 = vpop.f32.mrf.mxu0
      %v468 = vadd.f32 0.0, %v467
      %v469 = vpop.f32.mrf.mxu0
      %v470 = vadd.f32 0.0, %v469
      %471 = vmatmul.bf16.gmra.mxu0 %v363
      %v472 = vpop.f32.mrf.mxu0
      %v473 = vadd.f32 0.0, %v472
      %v474 = vpop.f32.mrf.mxu0
      %v475 = vadd.f32 0.0, %v474
      %476 = vmatmul.bf16.gmra.mxu0 %v364
      %v477 = vpop.f32.mrf.mxu0
      %v478 = vadd.f32 0.0, %v477
      %v479 = vpop.f32.mrf.mxu0
      %v480 = vadd.f32 0.0, %v479
      %481 = vmatmul.bf16.gmra.mxu0 %v365
      %v482 = vpop.f32.mrf.mxu0
      %v483 = vadd.f32 0.0, %v482
      %v484 = vpop.f32.mrf.mxu0
      %v485 = vadd.f32 0.0, %v484
      %486 = vmatmul.bf16.gmra.mxu0 %v366
      %v487 = vpop.f32.mrf.mxu0
      %v488 = vadd.f32 0.0, %v487
      %v489 = vpop.f32.mrf.mxu0
      %v490 = vadd.f32 0.0, %v489
      %491 = vmatmul.bf16.gmra.mxu0 %v367
      %v492 = vpop.f32.mrf.mxu0
      %v493 = vadd.f32 0.0, %v492
      %v494 = vpop.f32.mrf.mxu0
      %v495 = vadd.f32 0.0, %v494
      %496 = vmatmul.bf16.gmra.mxu0 %v368
      %v497 = vpop.f32.mrf.mxu0
      %v498 = vadd.f32 0.0, %v497
      %v499 = vpop.f32.mrf.mxu0
      %v500 = vadd.f32 0.0, %v499
      %501 = vmatmul.bf16.gmra.mxu0 %v369
      %v502 = vpop.f32.mrf.mxu0
      %v503 = vadd.f32 0.0, %v502
      %v504 = vpop.f32.mrf.mxu0
      %v505 = vadd.f32 0.0, %v504
      %506 = vmatmul.bf16.gmra.mxu0 %v370
      %v507 = vpop.f32.mrf.mxu0
      %v508 = vadd.f32 0.0, %v507
      %v509 = vpop.f32.mrf.mxu0
      %v510 = vadd.f32 0.0, %v509
      %511 = vmatmul.bf16.gmra.mxu0 %v371
      %v512 = vpop.f32.mrf.mxu0
      %v513 = vadd.f32 0.0, %v512
      %v514 = vpop.f32.mrf.mxu0
      %v515 = vadd.f32 0.0, %v514
      %516 = vmatmul.bf16.gmra.mxu0 %v372
      %v517 = vpop.f32.mrf.mxu0
      %v518 = vadd.f32 0.0, %v517
      %v519 = vpop.f32.mrf.mxu0
      %v520 = vadd.f32 0.0, %v519
      %521 = vmatmul.bf16.gmra.mxu0 %v373
      %v522 = vpop.f32.mrf.mxu0
      %v523 = vadd.f32 0.0, %v522
      %v524 = vpop.f32.mrf.mxu0
      %v525 = vadd.f32 0.0, %v524
      %526 = vdwg.mxu0
      %v527 = vadd.f32 %v246, %v448
      %v528 = vadd.f32 %v247, %v450
      %v529 = vadd.f32 %v248, %v453
      %v530 = vadd.f32 %v249, %v455
      %v531 = vadd.f32 %v250, %v458
      %v532 = vadd.f32 %v251, %v460
      %v533 = vadd.f32 %v252, %v463
      %v534 = vadd.f32 %v253, %v465
      %v535 = vadd.f32 %v254, %v468
      %v536 = vadd.f32 %v255, %v470
      %v537 = vadd.f32 %v256, %v473
      %v538 = vadd.f32 %v257, %v475
      %v539 = vadd.f32 %v258, %v478
      %v540 = vadd.f32 %v259, %v480
      %v541 = vadd.f32 %v260, %v483
      %v542 = vadd.f32 %v261, %v485
      %v543 = vadd.f32 %v262, %v488
      %v544 = vadd.f32 %v263, %v490
      %v545 = vadd.f32 %v264, %v493
      %v546 = vadd.f32 %v265, %v495
      %v547 = vadd.f32 %v266, %v498
      %v548 = vadd.f32 %v267, %v500
      %v549 = vadd.f32 %v268, %v503
      %v550 = vadd.f32 %v269, %v505
      %v551 = vadd.f32 %v270, %v508
      %v552 = vadd.f32 %v271, %v510
      %v553 = vadd.f32 %v272, %v513
      %v554 = vadd.f32 %v273, %v515
      %v555 = vadd.f32 %v274, %v518
      %v556 = vadd.f32 %v275, %v520
      %v557 = vadd.f32 %v276, %v523
      %v558 = vadd.f32 %v277, %v525
      %559 = vst [vmem:[%s177] sm:$0xff] %v527
      %560 = vst [vmem:[%s177 + $0x8] sm:$0xff] %v528
      %561 = vst [vmem:[%s177 + $0x10] sm:$0xff] %v529
      %562 = vst [vmem:[%s177 + $0x18] sm:$0xff] %v530
      %563 = vst [vmem:[%s177 + $0x20] sm:$0xff] %v531
      %564 = vst [vmem:[%s177 + $0x28] sm:$0xff] %v532
      %565 = vst [vmem:[%s177 + $0x30] sm:$0xff] %v533
      %566 = vst [vmem:[%s177 + $0x38] sm:$0xff] %v534
      %567 = vst [vmem:[%s177 + $0x40] sm:$0xff] %v535
      %568 = vst [vmem:[%s177 + $0x48] sm:$0xff] %v536
      %569 = vst [vmem:[%s177 + $0x50] sm:$0xff] %v537
      %570 = vst [vmem:[%s177 + $0x58] sm:$0xff] %v538
      %571 = vst [vmem:[%s177 + $0x60] sm:$0xff] %v539
      %572 = vst [vmem:[%s177 + $0x68] sm:$0xff] %v540
      %573 = vst [vmem:[%s177 + $0x70] sm:$0xff] %v541
      %574 = vst [vmem:[%s177 + $0x78] sm:$0xff] %v542
      %575 = vst [vmem:[%s177 + $0x80] sm:$0xff] %v543
      %576 = vst [vmem:[%s177 + $0x88] sm:$0xff] %v544
      %577 = vst [vmem:[%s177 + $0x90] sm:$0xff] %v545
      %578 = vst [vmem:[%s177 + $0x98] sm:$0xff] %v546
      %579 = vst [vmem:[%s177 + $0xa0] sm:$0xff] %v547
      %580 = vst [vmem:[%s177 + $0xa8] sm:$0xff] %v548
      %581 = vst [vmem:[%s177 + $0xb0] sm:$0xff] %v549
      %582 = vst [vmem:[%s177 + $0xb8] sm:$0xff] %v550
      %583 = vst [vmem:[%s177 + $0xc0] sm:$0xff] %v551
      %584 = vst [vmem:[%s177 + $0xc8] sm:$0xff] %v552
      %585 = vst [vmem:[%s177 + $0xd0] sm:$0xff] %v553
      %586 = vst [vmem:[%s177 + $0xd8] sm:$0xff] %v554
      %587 = vst [vmem:[%s177 + $0xe0] sm:$0xff] %v555
      %588 = vst [vmem:[%s177 + $0xe8] sm:$0xff] %v556
      %589 = vst [vmem:[%s177 + $0xf0] sm:$0xff] %v557
      %590 = vst [vmem:[%s177 + $0xf8] sm:$0xff] %v558
      %v591 = vld [vmem:[%s172] sm:$0xf]
      %v592 = vld [vmem:[%s172 + $0x4] sm:$0xf]
      %v593 = vld [vmem:[%s172 + $0x8] sm:$0x1]
      %v594 = vld [vmem:[%s172 + $0xc] sm:$0xf]
      %v595 = vld [vmem:[%s172 + $0x10] sm:$0xf]
      %v596 = vld [vmem:[%s172 + $0x14] sm:$0x1]
      %v597 = vld [vmem:[%s172 + $0x18] sm:$0xf]
      %v598 = vld [vmem:[%s172 + $0x1c] sm:$0xf]
      %v599 = vld [vmem:[%s172 + $0x20] sm:$0x1]
      %v600 = vld [vmem:[%s172 + $0x24] sm:$0xf]
      %v601 = vld [vmem:[%s172 + $0x28] sm:$0xf]
      %v602 = vld [vmem:[%s172 + $0x2c] sm:$0x1]
      %v603 = vld [vmem:[%s172 + $0x30] sm:$0xf]
      %v604 = vld [vmem:[%s172 + $0x34] sm:$0xf]
      %v605 = vld [vmem:[%s172 + $0x38] sm:$0x1]
      %v606 = vld [vmem:[%s172 + $0x3c] sm:$0xf]
      %v607 = vld [vmem:[%s172 + $0x40] sm:$0xf]
      %v608 = vld [vmem:[%s172 + $0x44] sm:$0x1]
      %v609 = vld [vmem:[%s172 + $0x48] sm:$0xf]
      %v610 = vld [vmem:[%s172 + $0x4c] sm:$0xf]
      %v611 = vld [vmem:[%s172 + $0x50] sm:$0x1]
      %v612 = vld [vmem:[%s172 + $0x54] sm:$0xf]
      %v613 = vld [vmem:[%s172 + $0x58] sm:$0xf]
      %v614 = vld [vmem:[%s172 + $0x5c] sm:$0x1]
      %v615 = vld [vmem:[%s172 + $0x60] sm:$0xf]
      %v616 = vld [vmem:[%s172 + $0x64] sm:$0xf]
      %v617 = vld [vmem:[%s172 + $0x68] sm:$0x1]
      %v618 = vld [vmem:[%s172 + $0x6c] sm:$0xf]
      %v619 = vld [vmem:[%s172 + $0x70] sm:$0xf]
      %v620 = vld [vmem:[%s172 + $0x74] sm:$0x1]
      %v621 = vld [vmem:[%s172 + $0x78] sm:$0xf]
      %v622 = vld [vmem:[%s172 + $0x7c] sm:$0xf]
      %v623 = vld [vmem:[%s172 + $0x80] sm:$0x1]
      %v624 = vld [vmem:[%s172 + $0x84] sm:$0xf]
      %v625 = vld [vmem:[%s172 + $0x88] sm:$0xf]
      %v626 = vld [vmem:[%s172 + $0x8c] sm:$0x1]
      %v627 = vld [vmem:[%s172 + $0x90] sm:$0xf]
      %v628 = vld [vmem:[%s172 + $0x94] sm:$0xf]
      %v629 = vld [vmem:[%s172 + $0x98] sm:$0x1]
      %v630 = vld [vmem:[%s172 + $0x9c] sm:$0xf]
      %v631 = vld [vmem:[%s172 + $0xa0] sm:$0xf]
      %v632 = vld [vmem:[%s172 + $0xa4] sm:$0x1]
      %v633 = vld [vmem:[%s172 + $0xa8] sm:$0xf]
      %v634 = vld [vmem:[%s172 + $0xac] sm:$0xf]
      %v635 = vld [vmem:[%s172 + $0xb0] sm:$0x1]
      %v636 = vld [vmem:[%s172 + $0xb4] sm:$0xf]
      %v637 = vld [vmem:[%s172 + $0xb8] sm:$0xf]
      %v638 = vld [vmem:[%s172 + $0xbc] sm:$0x1]
      %vm639 = vsmask.f32 3328
      %vm640 = vsmask.f32 7440
      %vm641 = vmor %vm639, %vm640
      %v643 = vshrl.u32 %v591, 16
      %v645 = vrot.slane %v643, 4
      %v646 = vshll.u32 %v591, 16
      %v648 = vrot.slane %v646, 5
      %v649 = vor.u32 %v645, %v648
      %v650 = vrot.slane %v649, 4
      %v652 = vshll.u32 %v592, 16
      %v654 = vrot.slane %v652, 5
      %v655 = vsel %vm641, %v650, %v654
      %v656 = vshrl.u32 %v592, 16
      %v658 = vrot.slane %v656, 4
      %v659 = vor.u32 %v658, %v654
      %v660 = vrot.slane %v659, 4
      %v662 = vshll.u32 %v593, 16
      %v664 = vrot.slane %v662, 5
      %v665 = vsel %vm641, %v660, %v664
      %v667 = vshrl.u32 %v594, 16
      %v669 = vrot.slane %v667, 4
      %v670 = vshll.u32 %v594, 16
      %v672 = vrot.slane %v670, 5
      %v673 = vor.u32 %v669, %v672
      %v674 = vrot.slane %v673, 4
      %v676 = vshll.u32 %v595, 16
      %v678 = vrot.slane %v676, 5
      %v679 = vsel %vm641, %v674, %v678
      %v680 = vshrl.u32 %v595, 16
      %v682 = vrot.slane %v680, 4
      %v683 = vor.u32 %v682, %v678
      %v684 = vrot.slane %v683, 4
      %v686 = vshll.u32 %v596, 16
      %v688 = vrot.slane %v686, 5
      %v689 = vsel %vm641, %v684, %v688
      %v691 = vshrl.u32 %v597, 16
      %v693 = vrot.slane %v691, 4
      %v694 = vshll.u32 %v597, 16
      %v696 = vrot.slane %v694, 5
      %v697 = vor.u32 %v693, %v696
      %v698 = vrot.slane %v697, 4
      %v700 = vshll.u32 %v598, 16
      %v702 = vrot.slane %v700, 5
      %v703 = vsel %vm641, %v698, %v702
      %v704 = vshrl.u32 %v598, 16
      %v706 = vrot.slane %v704, 4
      %v707 = vor.u32 %v706, %v702
      %v708 = vrot.slane %v707, 4
      %v710 = vshll.u32 %v599, 16
      %v712 = vrot.slane %v710, 5
      %v713 = vsel %vm641, %v708, %v712
      %v715 = vshrl.u32 %v600, 16
      %v717 = vrot.slane %v715, 4
      %v718 = vshll.u32 %v600, 16
      %v720 = vrot.slane %v718, 5
      %v721 = vor.u32 %v717, %v720
      %v722 = vrot.slane %v721, 4
      %v724 = vshll.u32 %v601, 16
      %v726 = vrot.slane %v724, 5
      %v727 = vsel %vm641, %v722, %v726
      %v728 = vshrl.u32 %v601, 16
      %v730 = vrot.slane %v728, 4
      %v731 = vor.u32 %v730, %v726
      %v732 = vrot.slane %v731, 4
      %v734 = vshll.u32 %v602, 16
      %v736 = vrot.slane %v734, 5
      %v737 = vsel %vm641, %v732, %v736
      %v739 = vshrl.u32 %v603, 16
      %v741 = vrot.slane %v739, 4
      %v742 = vshll.u32 %v603, 16
      %v744 = vrot.slane %v742, 5
      %v745 = vor.u32 %v741, %v744
      %v746 = vrot.slane %v745, 4
      %v748 = vshll.u32 %v604, 16
      %v750 = vrot.slane %v748, 5
      %v751 = vsel %vm641, %v746, %v750
      %v752 = vshrl.u32 %v604, 16
      %v754 = vrot.slane %v752, 4
      %v755 = vor.u32 %v754, %v750
      %v756 = vrot.slane %v755, 4
      %v758 = vshll.u32 %v605, 16
      %v760 = vrot.slane %v758, 5
      %v761 = vsel %vm641, %v756, %v760
      %v763 = vshrl.u32 %v606, 16
      %v765 = vrot.slane %v763, 4
      %v766 = vshll.u32 %v606, 16
      %v768 = vrot.slane %v766, 5
      %v769 = vor.u32 %v765, %v768
      %v770 = vrot.slane %v769, 4
      %v772 = vshll.u32 %v607, 16
      %v774 = vrot.slane %v772, 5
      %v775 = vsel %vm641, %v770, %v774
      %v776 = vshrl.u32 %v607, 16
      %v778 = vrot.slane %v776, 4
      %v779 = vor.u32 %v778, %v774
      %v780 = vrot.slane %v779, 4
      %v782 = vshll.u32 %v608, 16
      %v784 = vrot.slane %v782, 5
      %v785 = vsel %vm641, %v780, %v784
      %v787 = vshrl.u32 %v609, 16
      %v789 = vrot.slane %v787, 4
      %v790 = vshll.u32 %v609, 16
      %v792 = vrot.slane %v790, 5
      %v793 = vor.u32 %v789, %v792
      %v794 = vrot.slane %v793, 4
      %v796 = vshll.u32 %v610, 16
      %v798 = vrot.slane %v796, 5
      %v799 = vsel %vm641, %v794, %v798
      %v800 = vshrl.u32 %v610, 16
      %v802 = vrot.slane %v800, 4
      %v803 = vor.u32 %v802, %v798
      %v804 = vrot.slane %v803, 4
      %v806 = vshll.u32 %v611, 16
      %v808 = vrot.slane %v806, 5
      %v809 = vsel %vm641, %v804, %v808
      %v811 = vshrl.u32 %v612, 16
      %v813 = vrot.slane %v811, 4
      %v814 = vshll.u32 %v612, 16
      %v816 = vrot.slane %v814, 5
      %v817 = vor.u32 %v813, %v816
      %v818 = vrot.slane %v817, 4
      %v820 = vshll.u32 %v613, 16
      %v822 = vrot.slane %v820, 5
      %v823 = vsel %vm641, %v818, %v822
      %v824 = vshrl.u32 %v613, 16
      %v826 = vrot.slane %v824, 4
      %v827 = vor.u32 %v826, %v822
      %v828 = vrot.slane %v827, 4
      %v830 = vshll.u32 %v614, 16
      %v832 = vrot.slane %v830, 5
      %v833 = vsel %vm641, %v828, %v832
      %v835 = vshrl.u32 %v615, 16
      %v837 = vrot.slane %v835, 4
      %v838 = vshll.u32 %v615, 16
      %v840 = vrot.slane %v838, 5
      %v841 = vor.u32 %v837, %v840
      %v842 = vrot.slane %v841, 4
      %v844 = vshll.u32 %v616, 16
      %v846 = vrot.slane %v844, 5
      %v847 = vsel %vm641, %v842, %v846
      %v848 = vshrl.u32 %v616, 16
      %v850 = vrot.slane %v848, 4
      %v851 = vor.u32 %v850, %v846
      %v852 = vrot.slane %v851, 4
      %v854 = vshll.u32 %v617, 16
      %v856 = vrot.slane %v854, 5
      %v857 = vsel %vm641, %v852, %v856
      %v859 = vshrl.u32 %v618, 16
      %v861 = vrot.slane %v859, 4
      %v862 = vshll.u32 %v618, 16
      %v864 = vrot.slane %v862, 5
      %v865 = vor.u32 %v861, %v864
      %v866 = vrot.slane %v865, 4
      %v868 = vshll.u32 %v619, 16
      %v870 = vrot.slane %v868, 5
      %v871 = vsel %vm641, %v866, %v870
      %v872 = vshrl.u32 %v619, 16
      %v874 = vrot.slane %v872, 4
      %v875 = vor.u32 %v874, %v870
      %v876 = vrot.slane %v875, 4
      %v878 = vshll.u32 %v620, 16
      %v880 = vrot.slane %v878, 5
      %v881 = vsel %vm641, %v876, %v880
      %v883 = vshrl.u32 %v621, 16
      %v885 = vrot.slane %v883, 4
      %v886 = vshll.u32 %v621, 16
      %v888 = vrot.slane %v886, 5
      %v889 = vor.u32 %v885, %v888
      %v890 = vrot.slane %v889, 4
      %v892 = vshll.u32 %v622, 16
      %v894 = vrot.slane %v892, 5
      %v895 = vsel %vm641, %v890, %v894
      %v896 = vshrl.u32 %v622, 16
      %v898 = vrot.slane %v896, 4
      %v899 = vor.u32 %v898, %v894
      %v900 = vrot.slane %v899, 4
      %v902 = vshll.u32 %v623, 16
      %v904 = vrot.slane %v902, 5
      %v905 = vsel %vm641, %v900, %v904
      %v907 = vshrl.u32 %v624, 16
      %v909 = vrot.slane %v907, 4
      %v910 = vshll.u32 %v624, 16
      %v912 = vrot.slane %v910, 5
      %v913 = vor.u32 %v909, %v912
      %v914 = vrot.slane %v913, 4
      %v916 = vshll.u32 %v625, 16
      %v918 = vrot.slane %v916, 5
      %v919 = vsel %vm641, %v914, %v918
      %v920 = vshrl.u32 %v625, 16
      %v922 = vrot.slane %v920, 4
      %v923 = vor.u32 %v922, %v918
      %v924 = vrot.slane %v923, 4
      %v926 = vshll.u32 %v626, 16
      %v928 = vrot.slane %v926, 5
      %v929 = vsel %vm641, %v924, %v928
      %v931 = vshrl.u32 %v627, 16
      %v933 = vrot.slane %v931, 4
      %v934 = vshll.u32 %v627, 16
      %v936 = vrot.slane %v934, 5
      %v937 = vor.u32 %v933, %v936
      %v938 = vrot.slane %v937, 4
      %v940 = vshll.u32 %v628, 16
      %v942 = vrot.slane %v940, 5
      %v943 = vsel %vm641, %v938, %v942
      %v944 = vshrl.u32 %v628, 16
      %v946 = vrot.slane %v944, 4
      %v947 = vor.u32 %v946, %v942
      %v948 = vrot.slane %v947, 4
      %v950 = vshll.u32 %v629, 16
      %v952 = vrot.slane %v950, 5
      %v953 = vsel %vm641, %v948, %v952
      %v955 = vshrl.u32 %v630, 16
      %v957 = vrot.slane %v955, 4
      %v958 = vshll.u32 %v630, 16
      %v960 = vrot.slane %v958, 5
      %v961 = vor.u32 %v957, %v960
      %v962 = vrot.slane %v961, 4
      %v964 = vshll.u32 %v631, 16
      %v966 = vrot.slane %v964, 5
      %v967 = vsel %vm641, %v962, %v966
      %v968 = vshrl.u32 %v631, 16
      %v970 = vrot.slane %v968, 4
      %v971 = vor.u32 %v970, %v966
      %v972 = vrot.slane %v971, 4
      %v974 = vshll.u32 %v632, 16
      %v976 = vrot.slane %v974, 5
      %v977 = vsel %vm641, %v972, %v976
      %v979 = vshrl.u32 %v633, 16
      %v981 = vrot.slane %v979, 4
      %v982 = vshll.u32 %v633, 16
      %v984 = vrot.slane %v982, 5
      %v985 = vor.u32 %v981, %v984
      %v986 = vrot.slane %v985, 4
      %v988 = vshll.u32 %v634, 16
      %v990 = vrot.slane %v988, 5
      %v991 = vsel %vm641, %v986, %v990
      %v992 = vshrl.u32 %v634, 16
      %v994 = vrot.slane %v992, 4
      %v995 = vor.u32 %v994, %v990
      %v996 = vrot.slane %v995, 4
      %v998 = vshll.u32 %v635, 16
      %v1000 = vrot.slane %v998, 5
      %v1001 = vsel %vm641, %v996, %v1000
      %v1003 = vshrl.u32 %v636, 16
      %v1005 = vrot.slane %v1003, 4
      %v1006 = vshll.u32 %v636, 16
      %v1008 = vrot.slane %v1006, 5
      %v1009 = vor.u32 %v1005, %v1008
      %v1010 = vrot.slane %v1009, 4
      %v1012 = vshll.u32 %v637, 16
      %v1014 = vrot.slane %v1012, 5
      %v1015 = vsel %vm641, %v1010, %v1014
      %v1016 = vshrl.u32 %v637, 16
      %v1018 = vrot.slane %v1016, 4
      %v1019 = vor.u32 %v1018, %v1014
      %v1020 = vrot.slane %v1019, 4
      %v1022 = vshll.u32 %v638, 16
      %v1024 = vrot.slane %v1022, 5
      %v1025 = vsel %vm641, %v1020, %v1024
      %v1026 = vld [vmem:[%s177] sm:$0xff]
      %v1027 = vld [vmem:[%s177 + $0x8] sm:$0xff]
      %v1028 = vld [vmem:[%s177 + $0x10] sm:$0xff]
      %v1029 = vld [vmem:[%s177 + $0x18] sm:$0xff]
      %v1030 = vld [vmem:[%s177 + $0x20] sm:$0xff]
      %v1031 = vld [vmem:[%s177 + $0x28] sm:$0xff]
      %v1032 = vld [vmem:[%s177 + $0x30] sm:$0xff]
      %v1033 = vld [vmem:[%s177 + $0x38] sm:$0xff]
      %v1034 = vld [vmem:[%s177 + $0x40] sm:$0xff]
      %v1035 = vld [vmem:[%s177 + $0x48] sm:$0xff]
      %v1036 = vld [vmem:[%s177 + $0x50] sm:$0xff]
      %v1037 = vld [vmem:[%s177 + $0x58] sm:$0xff]
      %v1038 = vld [vmem:[%s177 + $0x60] sm:$0xff]
      %v1039 = vld [vmem:[%s177 + $0x68] sm:$0xff]
      %v1040 = vld [vmem:[%s177 + $0x70] sm:$0xff]
      %v1041 = vld [vmem:[%s177 + $0x78] sm:$0xff]
      %v1042 = vld [vmem:[%s177 + $0x80] sm:$0xff]
      %v1043 = vld [vmem:[%s177 + $0x88] sm:$0xff]
      %v1044 = vld [vmem:[%s177 + $0x90] sm:$0xff]
      %v1045 = vld [vmem:[%s177 + $0x98] sm:$0xff]
      %v1046 = vld [vmem:[%s177 + $0xa0] sm:$0xff]
      %v1047 = vld [vmem:[%s177 + $0xa8] sm:$0xff]
      %v1048 = vld [vmem:[%s177 + $0xb0] sm:$0xff]
      %v1049 = vld [vmem:[%s177 + $0xb8] sm:$0xff]
      %v1050 = vld [vmem:[%s177 + $0xc0] sm:$0xff]
      %v1051 = vld [vmem:[%s177 + $0xc8] sm:$0xff]
      %v1052 = vld [vmem:[%s177 + $0xd0] sm:$0xff]
      %v1053 = vld [vmem:[%s177 + $0xd8] sm:$0xff]
      %v1054 = vld [vmem:[%s177 + $0xe0] sm:$0xff]
      %v1055 = vld [vmem:[%s177 + $0xe8] sm:$0xff]
      %v1056 = vld [vmem:[%s177 + $0xf0] sm:$0xff]
      %v1057 = vld [vmem:[%s177 + $0xf8] sm:$0xff]
      %s1058 = scalar_lea.vmem %s1, 64
      %v1059 = vld [vmem:[%s1058] sm:$0xf]
      %v1060 = vld [vmem:[%s1058 + $0x4] sm:$0xf]
      %v1061 = vld [vmem:[%s1058 + $0x8] sm:$0xf]
      %v1062 = vld [vmem:[%s1058 + $0xc] sm:$0xf]
      %v1063 = vld [vmem:[%s1058 + $0x10] sm:$0xf]
      %v1064 = vld [vmem:[%s1058 + $0x14] sm:$0xf]
      %v1065 = vld [vmem:[%s1058 + $0x18] sm:$0xf]
      %v1066 = vld [vmem:[%s1058 + $0x1c] sm:$0xf]
      %v1067 = vld [vmem:[%s1058 + $0x20] sm:$0xf]
      %v1068 = vld [vmem:[%s1058 + $0x24] sm:$0xf]
      %v1069 = vld [vmem:[%s1058 + $0x28] sm:$0xf]
      %v1070 = vld [vmem:[%s1058 + $0x2c] sm:$0xf]
      %v1071 = vld [vmem:[%s1058 + $0x30] sm:$0xf]
      %v1072 = vld [vmem:[%s1058 + $0x34] sm:$0xf]
      %v1073 = vld [vmem:[%s1058 + $0x38] sm:$0xf]
      %v1074 = vld [vmem:[%s1058 + $0x3c] sm:$0xf]
      %v1075 = vunpack.c.l.b16 %v655
      %v1076 = vunpack.c.l.b16 %v665
      %v1077 = vunpack.c.l.b16 %v679
      %v1078 = vunpack.c.l.b16 %v689
      %v1079 = vunpack.c.l.b16 %v703
      %v1080 = vunpack.c.l.b16 %v713
      %v1081 = vunpack.c.l.b16 %v727
      %v1082 = vunpack.c.l.b16 %v737
      %v1083 = vunpack.c.l.b16 %v751
      %v1084 = vunpack.c.l.b16 %v761
      %v1085 = vunpack.c.l.b16 %v775
      %v1086 = vunpack.c.l.b16 %v785
      %v1087 = vunpack.c.l.b16 %v799
      %v1088 = vunpack.c.l.b16 %v809
      %v1089 = vunpack.c.l.b16 %v823
      %v1090 = vunpack.c.l.b16 %v833
      %v1091 = vunpack.c.l.b16 %v847
      %v1092 = vunpack.c.l.b16 %v857
      %v1093 = vunpack.c.l.b16 %v871
      %v1094 = vunpack.c.l.b16 %v881
      %v1095 = vunpack.c.l.b16 %v895
      %v1096 = vunpack.c.l.b16 %v905
      %v1097 = vunpack.c.l.b16 %v919
      %v1098 = vunpack.c.l.b16 %v929
      %v1099 = vunpack.c.l.b16 %v943
      %v1100 = vunpack.c.l.b16 %v953
      %v1101 = vunpack.c.l.b16 %v967
      %v1102 = vunpack.c.l.b16 %v977
      %v1103 = vunpack.c.l.b16 %v991
      %v1104 = vunpack.c.l.b16 %v1001
      %v1105 = vunpack.c.l.b16 %v1015
      %v1106 = vunpack.c.l.b16 %v1025
      %v1107 = vpack.c.b16 %v1076, %v1075
      %v1108 = vpack.c.b16 %v1078, %v1077
      %v1109 = vpack.c.b16 %v1080, %v1079
      %v1110 = vpack.c.b16 %v1082, %v1081
      %v1111 = vpack.c.b16 %v1084, %v1083
      %v1112 = vpack.c.b16 %v1086, %v1085
      %v1113 = vpack.c.b16 %v1088, %v1087
      %v1114 = vpack.c.b16 %v1090, %v1089
      %v1115 = vpack.c.b16 %v1092, %v1091
      %v1116 = vpack.c.b16 %v1094, %v1093
      %v1117 = vpack.c.b16 %v1096, %v1095
      %v1118 = vpack.c.b16 %v1098, %v1097
      %v1119 = vpack.c.b16 %v1100, %v1099
      %v1120 = vpack.c.b16 %v1102, %v1101
      %v1121 = vpack.c.b16 %v1104, %v1103
      %v1122 = vpack.c.b16 %v1106, %v1105
      %v1155 = vunpack.c.l.b16 %v1059
      %v1156 = vunpack.c.l.b16 %v1060
      %v1157 = vunpack.c.l.b16 %v1061
      %v1158 = vunpack.c.l.b16 %v1062
      %v1159 = vunpack.c.l.b16 %v1063
      %v1160 = vunpack.c.l.b16 %v1064
      %v1161 = vunpack.c.l.b16 %v1065
      %v1162 = vunpack.c.l.b16 %v1066
      %v1163 = vunpack.c.l.b16 %v1067
      %v1164 = vunpack.c.l.b16 %v1068
      %v1165 = vunpack.c.l.b16 %v1069
      %v1166 = vunpack.c.l.b16 %v1070
      %v1167 = vunpack.c.l.b16 %v1071
      %v1168 = vunpack.c.l.b16 %v1072
      %v1169 = vunpack.c.l.b16 %v1073
      %v1170 = vunpack.c.l.b16 %v1074
      %v1171 = vpack.c.b16 %v1156, %v1155
      %v1172 = vpack.c.b16 %v1158, %v1157
      %v1173 = vpack.c.b16 %v1160, %v1159
      %v1174 = vpack.c.b16 %v1162, %v1161
      %v1175 = vpack.c.b16 %v1164, %v1163
      %v1176 = vpack.c.b16 %v1166, %v1165
      %v1177 = vpack.c.b16 %v1168, %v1167
      %v1178 = vpack.c.b16 %v1170, %v1169
      %1187 = vmatpush.bf16.msra.mxu0 %v1178
      %1188 = vmatpush.bf16.msra.mxu0 %v1177
      %1189 = vmatpush.bf16.msra.mxu0 %v1176
      %1190 = vmatpush.bf16.msra.mxu0 %v1175
      %1191 = vmatpush.bf16.msra.mxu0 %v1174
      %1192 = vmatpush.bf16.msra.mxu0 %v1173
      %1193 = vmatpush.bf16.msra.mxu0 %v1172
      %1194 = vmatpush.bf16.msra.mxu0 %v1171
      %1195 = vmatmul.bf16.gmra.mxu0 %v1107
      %v1196 = vpop.f32.mrf.mxu0
      %v1197 = vadd.f32 0.0, %v1196
      %v1198 = vpop.f32.mrf.mxu0
      %v1199 = vadd.f32 0.0, %v1198
      %1200 = vmatmul.bf16.gmra.mxu0 %v1108
      %v1201 = vpop.f32.mrf.mxu0
      %v1202 = vadd.f32 0.0, %v1201
      %v1203 = vpop.f32.mrf.mxu0
      %v1204 = vadd.f32 0.0, %v1203
      %1205 = vmatmul.bf16.gmra.mxu0 %v1109
      %v1206 = vpop.f32.mrf.mxu0
      %v1207 = vadd.f32 0.0, %v1206
      %v1208 = vpop.f32.mrf.mxu0
      %v1209 = vadd.f32 0.0, %v1208
      %1210 = vmatmul.bf16.gmra.mxu0 %v1110
      %v1211 = vpop.f32.mrf.mxu0
      %v1212 = vadd.f32 0.0, %v1211
      %v1213 = vpop.f32.mrf.mxu0
      %v1214 = vadd.f32 0.0, %v1213
      %1215 = vmatmul.bf16.gmra.mxu0 %v1111
      %v1216 = vpop.f32.mrf.mxu0
      %v1217 = vadd.f32 0.0, %v1216
      %v1218 = vpop.f32.mrf.mxu0
      %v1219 = vadd.f32 0.0, %v1218
      %1220 = vmatmul.bf16.gmra.mxu0 %v1112
      %v1221 = vpop.f32.mrf.mxu0
      %v1222 = vadd.f32 0.0, %v1221
      %v1223 = vpop.f32.mrf.mxu0
      %v1224 = vadd.f32 0.0, %v1223
      %1225 = vmatmul.bf16.gmra.mxu0 %v1113
      %v1226 = vpop.f32.mrf.mxu0
      %v1227 = vadd.f32 0.0, %v1226
      %v1228 = vpop.f32.mrf.mxu0
      %v1229 = vadd.f32 0.0, %v1228
      %1230 = vmatmul.bf16.gmra.mxu0 %v1114
      %v1231 = vpop.f32.mrf.mxu0
      %v1232 = vadd.f32 0.0, %v1231
      %v1233 = vpop.f32.mrf.mxu0
      %v1234 = vadd.f32 0.0, %v1233
      %1235 = vmatmul.bf16.gmra.mxu0 %v1115
      %v1236 = vpop.f32.mrf.mxu0
      %v1237 = vadd.f32 0.0, %v1236
      %v1238 = vpop.f32.mrf.mxu0
      %v1239 = vadd.f32 0.0, %v1238
      %1240 = vmatmul.bf16.gmra.mxu0 %v1116
      %v1241 = vpop.f32.mrf.mxu0
      %v1242 = vadd.f32 0.0, %v1241
      %v1243 = vpop.f32.mrf.mxu0
      %v1244 = vadd.f32 0.0, %v1243
      %1245 = vmatmul.bf16.gmra.mxu0 %v1117
      %v1246 = vpop.f32.mrf.mxu0
      %v1247 = vadd.f32 0.0, %v1246
      %v1248 = vpop.f32.mrf.mxu0
      %v1249 = vadd.f32 0.0, %v1248
      %1250 = vmatmul.bf16.gmra.mxu0 %v1118
      %v1251 = vpop.f32.mrf.mxu0
      %v1252 = vadd.f32 0.0, %v1251
      %v1253 = vpop.f32.mrf.mxu0
      %v1254 = vadd.f32 0.0, %v1253
      %1255 = vmatmul.bf16.gmra.mxu0 %v1119
      %v1256 = vpop.f32.mrf.mxu0
      %v1257 = vadd.f32 0.0, %v1256
      %v1258 = vpop.f32.mrf.mxu0
      %v1259 = vadd.f32 0.0, %v1258
      %1260 = vmatmul.bf16.gmra.mxu0 %v1120
      %v1261 = vpop.f32.mrf.mxu0
      %v1262 = vadd.f32 0.0, %v1261
      %v1263 = vpop.f32.mrf.mxu0
      %v1264 = vadd.f32 0.0, %v1263
      %1265 = vmatmul.bf16.gmra.mxu0 %v1121
      %v1266 = vpop.f32.mrf.mxu0
      %v1267 = vadd.f32 0.0, %v1266
      %v1268 = vpop.f32.mrf.mxu0
      %v1269 = vadd.f32 0.0, %v1268
      %1270 = vmatmul.bf16.gmra.mxu0 %v1122
      %v1271 = vpop.f32.mrf.mxu0
      %v1272 = vadd.f32 0.0, %v1271
      %v1273 = vpop.f32.mrf.mxu0
      %v1274 = vadd.f32 0.0, %v1273
      %1275 = vdwg.mxu0
      %v1276 = vadd.f32 %v1026, %v1197
      %v1277 = vadd.f32 %v1027, %v1199
      %v1278 = vadd.f32 %v1028, %v1202
      %v1279 = vadd.f32 %v1029, %v1204
      %v1280 = vadd.f32 %v1030, %v1207
      %v1281 = vadd.f32 %v1031, %v1209
      %v1282 = vadd.f32 %v1032, %v1212
      %v1283 = vadd.f32 %v1033, %v1214
      %v1284 = vadd.f32 %v1034, %v1217
      %v1285 = vadd.f32 %v1035, %v1219
      %v1286 = vadd.f32 %v1036, %v1222
      %v1287 = vadd.f32 %v1037, %v1224
      %v1288 = vadd.f32 %v1038, %v1227
      %v1289 = vadd.f32 %v1039, %v1229
      %v1290 = vadd.f32 %v1040, %v1232
      %v1291 = vadd.f32 %v1041, %v1234
      %v1292 = vadd.f32 %v1042, %v1237
      %v1293 = vadd.f32 %v1043, %v1239
      %v1294 = vadd.f32 %v1044, %v1242
      %v1295 = vadd.f32 %v1045, %v1244
      %v1296 = vadd.f32 %v1046, %v1247
      %v1297 = vadd.f32 %v1047, %v1249
      %v1298 = vadd.f32 %v1048, %v1252
      %v1299 = vadd.f32 %v1049, %v1254
      %v1300 = vadd.f32 %v1050, %v1257
      %v1301 = vadd.f32 %v1051, %v1259
      %v1302 = vadd.f32 %v1052, %v1262
      %v1303 = vadd.f32 %v1053, %v1264
      %v1304 = vadd.f32 %v1054, %v1267
      %v1305 = vadd.f32 %v1055, %v1269
      %v1306 = vadd.f32 %v1056, %v1272
      %v1307 = vadd.f32 %v1057, %v1274
      %1308 = vst [vmem:[%s177] sm:$0xff] %v1276
      %1309 = vst [vmem:[%s177 + $0x8] sm:$0xff] %v1277
      %1310 = vst [vmem:[%s177 + $0x10] sm:$0xff] %v1278
      %1311 = vst [vmem:[%s177 + $0x18] sm:$0xff] %v1279
      %1312 = vst [vmem:[%s177 + $0x20] sm:$0xff] %v1280
      %1313 = vst [vmem:[%s177 + $0x28] sm:$0xff] %v1281
      %1314 = vst [vmem:[%s177 + $0x30] sm:$0xff] %v1282
      %1315 = vst [vmem:[%s177 + $0x38] sm:$0xff] %v1283
      %1316 = vst [vmem:[%s177 + $0x40] sm:$0xff] %v1284
      %1317 = vst [vmem:[%s177 + $0x48] sm:$0xff] %v1285
      %1318 = vst [vmem:[%s177 + $0x50] sm:$0xff] %v1286
      %1319 = vst [vmem:[%s177 + $0x58] sm:$0xff] %v1287
      %1320 = vst [vmem:[%s177 + $0x60] sm:$0xff] %v1288
      %1321 = vst [vmem:[%s177 + $0x68] sm:$0xff] %v1289
      %1322 = vst [vmem:[%s177 + $0x70] sm:$0xff] %v1290
      %1323 = vst [vmem:[%s177 + $0x78] sm:$0xff] %v1291
      %1324 = vst [vmem:[%s177 + $0x80] sm:$0xff] %v1292
      %1325 = vst [vmem:[%s177 + $0x88] sm:$0xff] %v1293
      %1326 = vst [vmem:[%s177 + $0x90] sm:$0xff] %v1294
      %1327 = vst [vmem:[%s177 + $0x98] sm:$0xff] %v1295
      %1328 = vst [vmem:[%s177 + $0xa0] sm:$0xff] %v1296
      %1329 = vst [vmem:[%s177 + $0xa8] sm:$0xff] %v1297
      %1330 = vst [vmem:[%s177 + $0xb0] sm:$0xff] %v1298
      %1331 = vst [vmem:[%s177 + $0xb8] sm:$0xff] %v1299
      %1332 = vst [vmem:[%s177 + $0xc0] sm:$0xff] %v1300
      %1333 = vst [vmem:[%s177 + $0xc8] sm:$0xff] %v1301
      %1334 = vst [vmem:[%s177 + $0xd0] sm:$0xff] %v1302
      %1335 = vst [vmem:[%s177 + $0xd8] sm:$0xff] %v1303
      %1336 = vst [vmem:[%s177 + $0xe0] sm:$0xff] %v1304
      %1337 = vst [vmem:[%s177 + $0xe8] sm:$0xff] %v1305
      %1338 = vst [vmem:[%s177 + $0xf0] sm:$0xff] %v1306
      %1339 = vst [vmem:[%s177 + $0xf8] sm:$0xff] %v1307
      %v1340 = vld [vmem:[%s172] sm:$0xe]
      %v1341 = vld [vmem:[%s172 + $0x4] sm:$0xf]
      %v1342 = vld [vmem:[%s172 + $0x8] sm:$0x1]
      %v1343 = vld [vmem:[%s172 + $0xc] sm:$0xe]
      %v1344 = vld [vmem:[%s172 + $0x10] sm:$0xf]
      %v1345 = vld [vmem:[%s172 + $0x14] sm:$0x1]
      %v1346 = vld [vmem:[%s172 + $0x18] sm:$0xe]
      %v1347 = vld [vmem:[%s172 + $0x1c] sm:$0xf]
      %v1348 = vld [vmem:[%s172 + $0x20] sm:$0x1]
      %v1349 = vld [vmem:[%s172 + $0x24] sm:$0xe]
      %v1350 = vld [vmem:[%s172 + $0x28] sm:$0xf]
      %v1351 = vld [vmem:[%s172 + $0x2c] sm:$0x1]
      %v1352 = vld [vmem:[%s172 + $0x30] sm:$0xe]
      %v1353 = vld [vmem:[%s172 + $0x34] sm:$0xf]
      %v1354 = vld [vmem:[%s172 + $0x38] sm:$0x1]
      %v1355 = vld [vmem:[%s172 + $0x3c] sm:$0xe]
      %v1356 = vld [vmem:[%s172 + $0x40] sm:$0xf]
      %v1357 = vld [vmem:[%s172 + $0x44] sm:$0x1]
      %v1358 = vld [vmem:[%s172 + $0x48] sm:$0xe]
      %v1359 = vld [vmem:[%s172 + $0x4c] sm:$0xf]
      %v1360 = vld [vmem:[%s172 + $0x50] sm:$0x1]
      %v1361 = vld [vmem:[%s172 + $0x54] sm:$0xe]
      %v1362 = vld [vmem:[%s172 + $0x58] sm:$0xf]
      %v1363 = vld [vmem:[%s172 + $0x5c] sm:$0x1]
      %v1364 = vld [vmem:[%s172 + $0x60] sm:$0xe]
      %v1365 = vld [vmem:[%s172 + $0x64] sm:$0xf]
      %v1366 = vld [vmem:[%s172 + $0x68] sm:$0x1]
      %v1367 = vld [vmem:[%s172 + $0x6c] sm:$0xe]
      %v1368 = vld [vmem:[%s172 + $0x70] sm:$0xf]
      %v1369 = vld [vmem:[%s172 + $0x74] sm:$0x1]
      %v1370 = vld [vmem:[%s172 + $0x78] sm:$0xe]
      %v1371 = vld [vmem:[%s172 + $0x7c] sm:$0xf]
      %v1372 = vld [vmem:[%s172 + $0x80] sm:$0x1]
      %v1373 = vld [vmem:[%s172 + $0x84] sm:$0xe]
      %v1374 = vld [vmem:[%s172 + $0x88] sm:$0xf]
      %v1375 = vld [vmem:[%s172 + $0x8c] sm:$0x1]
      %v1376 = vld [vmem:[%s172 + $0x90] sm:$0xe]
      %v1377 = vld [vmem:[%s172 + $0x94] sm:$0xf]
      %v1378 = vld [vmem:[%s172 + $0x98] sm:$0x1]
      %v1379 = vld [vmem:[%s172 + $0x9c] sm:$0xe]
      %v1380 = vld [vmem:[%s172 + $0xa0] sm:$0xf]
      %v1381 = vld [vmem:[%s172 + $0xa4] sm:$0x1]
      %v1382 = vld [vmem:[%s172 + $0xa8] sm:$0xe]
      %v1383 = vld [vmem:[%s172 + $0xac] sm:$0xf]
      %v1384 = vld [vmem:[%s172 + $0xb0] sm:$0x1]
      %v1385 = vld [vmem:[%s172 + $0xb4] sm:$0xe]
      %v1386 = vld [vmem:[%s172 + $0xb8] sm:$0xf]
      %v1387 = vld [vmem:[%s172 + $0xbc] sm:$0x1]
      %vm1436 = vcmask 1042432
      %vm1437 = vcmask 1046532
      %vm1438 = vmor %vm1436, %vm1437
      %v1439 = vrot.slane %v1340, 5
      %v1440 = vrot.slane %v1439, 4
      %v1441 = vrot.slane %v1341, 5
      %v1442 = vsel %vm1438, %v1440, %v1441
      %v1443 = vrot.slane %v1441, 4
      %v1444 = vrot.slane %v1342, 5
      %v1445 = vsel %vm1438, %v1443, %v1444
      %v1446 = vrot.slane %v1343, 5
      %v1447 = vrot.slane %v1446, 4
      %v1448 = vrot.slane %v1344, 5
      %v1449 = vsel %vm1438, %v1447, %v1448
      %v1450 = vrot.slane %v1448, 4
      %v1451 = vrot.slane %v1345, 5
      %v1452 = vsel %vm1438, %v1450, %v1451
      %v1453 = vrot.slane %v1346, 5
      %v1454 = vrot.slane %v1453, 4
      %v1455 = vrot.slane %v1347, 5
      %v1456 = vsel %vm1438, %v1454, %v1455
      %v1457 = vrot.slane %v1455, 4
      %v1458 = vrot.slane %v1348, 5
      %v1459 = vsel %vm1438, %v1457, %v1458
      %v1460 = vrot.slane %v1349, 5
      %v1461 = vrot.slane %v1460, 4
      %v1462 = vrot.slane %v1350, 5
      %v1463 = vsel %vm1438, %v1461, %v1462
      %v1464 = vrot.slane %v1462, 4
      %v1465 = vrot.slane %v1351, 5
      %v1466 = vsel %vm1438, %v1464, %v1465
      %v1467 = vrot.slane %v1352, 5
      %v1468 = vrot.slane %v1467, 4
      %v1469 = vrot.slane %v1353, 5
      %v1470 = vsel %vm1438, %v1468, %v1469
      %v1471 = vrot.slane %v1469, 4
      %v1472 = vrot.slane %v1354, 5
      %v1473 = vsel %vm1438, %v1471, %v1472
      %v1474 = vrot.slane %v1355, 5
      %v1475 = vrot.slane %v1474, 4
      %v1476 = vrot.slane %v1356, 5
      %v1477 = vsel %vm1438, %v1475, %v1476
      %v1478 = vrot.slane %v1476, 4
      %v1479 = vrot.slane %v1357, 5
      %v1480 = vsel %vm1438, %v1478, %v1479
      %v1481 = vrot.slane %v1358, 5
      %v1482 = vrot.slane %v1481, 4
      %v1483 = vrot.slane %v1359, 5
      %v1484 = vsel %vm1438, %v1482, %v1483
      %v1485 = vrot.slane %v1483, 4
      %v1486 = vrot.slane %v1360, 5
      %v1487 = vsel %vm1438, %v1485, %v1486
      %v1488 = vrot.slane %v1361, 5
      %v1489 = vrot.slane %v1488, 4
      %v1490 = vrot.slane %v1362, 5
      %v1491 = vsel %vm1438, %v1489, %v1490
      %v1492 = vrot.slane %v1490, 4
      %v1493 = vrot.slane %v1363, 5
      %v1494 = vsel %vm1438, %v1492, %v1493
      %v1495 = vrot.slane %v1364, 5
      %v1496 = vrot.slane %v1495, 4
      %v1497 = vrot.slane %v1365, 5
      %v1498 = vsel %vm1438, %v1496, %v1497
      %v1499 = vrot.slane %v1497, 4
      %v1500 = vrot.slane %v1366, 5
      %v1501 = vsel %vm1438, %v1499, %v1500
      %v1502 = vrot.slane %v1367, 5
      %v1503 = vrot.slane %v1502, 4
      %v1504 = vrot.slane %v1368, 5
      %v1505 = vsel %vm1438, %v1503, %v1504
      %v1506 = vrot.slane %v1504, 4
      %v1507 = vrot.slane %v1369, 5
      %v1508 = vsel %vm1438, %v1506, %v1507
      %v1509 = vrot.slane %v1370, 5
      %v1510 = vrot.slane %v1509, 4
      %v1511 = vrot.slane %v1371, 5
      %v1512 = vsel %vm1438, %v1510, %v1511
      %v1513 = vrot.slane %v1511, 4
      %v1514 = vrot.slane %v1372, 5
      %v1515 = vsel %vm1438, %v1513, %v1514
      %v1516 = vrot.slane %v1373, 5
      %v1517 = vrot.slane %v1516, 4
      %v1518 = vrot.slane %v1374, 5
      %v1519 = vsel %vm1438, %v1517, %v1518
      %v1520 = vrot.slane %v1518, 4
      %v1521 = vrot.slane %v1375, 5
      %v1522 = vsel %vm1438, %v1520, %v1521
      %v1523 = vrot.slane %v1376, 5
      %v1524 = vrot.slane %v1523, 4
      %v1525 = vrot.slane %v1377, 5
      %v1526 = vsel %vm1438, %v1524, %v1525
      %v1527 = vrot.slane %v1525, 4
      %v1528 = vrot.slane %v1378, 5
      %v1529 = vsel %vm1438, %v1527, %v1528
      %v1530 = vrot.slane %v1379, 5
      %v1531 = vrot.slane %v1530, 4
      %v1532 = vrot.slane %v1380, 5
      %v1533 = vsel %vm1438, %v1531, %v1532
      %v1534 = vrot.slane %v1532, 4
      %v1535 = vrot.slane %v1381, 5
      %v1536 = vsel %vm1438, %v1534, %v1535
      %v1537 = vrot.slane %v1382, 5
      %v1538 = vrot.slane %v1537, 4
      %v1539 = vrot.slane %v1383, 5
      %v1540 = vsel %vm1438, %v1538, %v1539
      %v1541 = vrot.slane %v1539, 4
      %v1542 = vrot.slane %v1384, 5
      %v1543 = vsel %vm1438, %v1541, %v1542
      %v1544 = vrot.slane %v1385, 5
      %v1545 = vrot.slane %v1544, 4
      %v1546 = vrot.slane %v1386, 5
      %v1547 = vsel %vm1438, %v1545, %v1546
      %v1548 = vrot.slane %v1546, 4
      %v1549 = vrot.slane %v1387, 5
      %v1550 = vsel %vm1438, %v1548, %v1549
      %v1551 = vld [vmem:[%s177] sm:$0xff]
      %v1552 = vld [vmem:[%s177 + $0x8] sm:$0xff]
      %v1553 = vld [vmem:[%s177 + $0x10] sm:$0xff]
      %v1554 = vld [vmem:[%s177 + $0x18] sm:$0xff]
      %v1555 = vld [vmem:[%s177 + $0x20] sm:$0xff]
      %v1556 = vld [vmem:[%s177 + $0x28] sm:$0xff]
      %v1557 = vld [vmem:[%s177 + $0x30] sm:$0xff]
      %v1558 = vld [vmem:[%s177 + $0x38] sm:$0xff]
      %v1559 = vld [vmem:[%s177 + $0x40] sm:$0xff]
      %v1560 = vld [vmem:[%s177 + $0x48] sm:$0xff]
      %v1561 = vld [vmem:[%s177 + $0x50] sm:$0xff]
      %v1562 = vld [vmem:[%s177 + $0x58] sm:$0xff]
      %v1563 = vld [vmem:[%s177 + $0x60] sm:$0xff]
      %v1564 = vld [vmem:[%s177 + $0x68] sm:$0xff]
      %v1565 = vld [vmem:[%s177 + $0x70] sm:$0xff]
      %v1566 = vld [vmem:[%s177 + $0x78] sm:$0xff]
      %v1567 = vld [vmem:[%s177 + $0x80] sm:$0xff]
      %v1568 = vld [vmem:[%s177 + $0x88] sm:$0xff]
      %v1569 = vld [vmem:[%s177 + $0x90] sm:$0xff]
      %v1570 = vld [vmem:[%s177 + $0x98] sm:$0xff]
      %v1571 = vld [vmem:[%s177 + $0xa0] sm:$0xff]
      %v1572 = vld [vmem:[%s177 + $0xa8] sm:$0xff]
      %v1573 = vld [vmem:[%s177 + $0xb0] sm:$0xff]
      %v1574 = vld [vmem:[%s177 + $0xb8] sm:$0xff]
      %v1575 = vld [vmem:[%s177 + $0xc0] sm:$0xff]
      %v1576 = vld [vmem:[%s177 + $0xc8] sm:$0xff]
      %v1577 = vld [vmem:[%s177 + $0xd0] sm:$0xff]
      %v1578 = vld [vmem:[%s177 + $0xd8] sm:$0xff]
      %v1579 = vld [vmem:[%s177 + $0xe0] sm:$0xff]
      %v1580 = vld [vmem:[%s177 + $0xe8] sm:$0xff]
      %v1581 = vld [vmem:[%s177 + $0xf0] sm:$0xff]
      %v1582 = vld [vmem:[%s177 + $0xf8] sm:$0xff]
      %s1583 = scalar_lea.vmem %s1, 128
      %v1584 = vld [vmem:[%s1583] sm:$0xf]
      %v1585 = vld [vmem:[%s1583 + $0x4] sm:$0xf]
      %v1586 = vld [vmem:[%s1583 + $0x8] sm:$0xf]
      %v1587 = vld [vmem:[%s1583 + $0xc] sm:$0xf]
      %v1588 = vld [vmem:[%s1583 + $0x10] sm:$0xf]
      %v1589 = vld [vmem:[%s1583 + $0x14] sm:$0xf]
      %v1590 = vld [vmem:[%s1583 + $0x18] sm:$0xf]
      %v1591 = vld [vmem:[%s1583 + $0x1c] sm:$0xf]
      %v1592 = vld [vmem:[%s1583 + $0x20] sm:$0xf]
      %v1593 = vld [vmem:[%s1583 + $0x24] sm:$0xf]
      %v1594 = vld [vmem:[%s1583 + $0x28] sm:$0xf]
      %v1595 = vld [vmem:[%s1583 + $0x2c] sm:$0xf]
      %v1596 = vld [vmem:[%s1583 + $0x30] sm:$0xf]
      %v1597 = vld [vmem:[%s1583 + $0x34] sm:$0xf]
      %v1598 = vld [vmem:[%s1583 + $0x38] sm:$0xf]
      %v1599 = vld [vmem:[%s1583 + $0x3c] sm:$0xf]
      %v1600 = vunpack.c.l.b16 %v1442
      %v1601 = vunpack.c.l.b16 %v1445
      %v1602 = vunpack.c.l.b16 %v1449
      %v1603 = vunpack.c.l.b16 %v1452
      %v1604 = vunpack.c.l.b16 %v1456
      %v1605 = vunpack.c.l.b16 %v1459
      %v1606 = vunpack.c.l.b16 %v1463
      %v1607 = vunpack.c.l.b16 %v1466
      %v1608 = vunpack.c.l.b16 %v1470
      %v1609 = vunpack.c.l.b16 %v1473
      %v1610 = vunpack.c.l.b16 %v1477
      %v1611 = vunpack.c.l.b16 %v1480
      %v1612 = vunpack.c.l.b16 %v1484
      %v1613 = vunpack.c.l.b16 %v1487
      %v1614 = vunpack.c.l.b16 %v1491
      %v1615 = vunpack.c.l.b16 %v1494
      %v1616 = vunpack.c.l.b16 %v1498
      %v1617 = vunpack.c.l.b16 %v1501
      %v1618 = vunpack.c.l.b16 %v1505
      %v1619 = vunpack.c.l.b16 %v1508
      %v1620 = vunpack.c.l.b16 %v1512
      %v1621 = vunpack.c.l.b16 %v1515
      %v1622 = vunpack.c.l.b16 %v1519
      %v1623 = vunpack.c.l.b16 %v1522
      %v1624 = vunpack.c.l.b16 %v1526
      %v1625 = vunpack.c.l.b16 %v1529
      %v1626 = vunpack.c.l.b16 %v1533
      %v1627 = vunpack.c.l.b16 %v1536
      %v1628 = vunpack.c.l.b16 %v1540
      %v1629 = vunpack.c.l.b16 %v1543
      %v1630 = vunpack.c.l.b16 %v1547
      %v1631 = vunpack.c.l.b16 %v1550
      %v1632 = vpack.c.b16 %v1601, %v1600
      %v1633 = vpack.c.b16 %v1603, %v1602
      %v1634 = vpack.c.b16 %v1605, %v1604
      %v1635 = vpack.c.b16 %v1607, %v1606
      %v1636 = vpack.c.b16 %v1609, %v1608
      %v1637 = vpack.c.b16 %v1611, %v1610
      %v1638 = vpack.c.b16 %v1613, %v1612
      %v1639 = vpack.c.b16 %v1615, %v1614
      %v1640 = vpack.c.b16 %v1617, %v1616
      %v1641 = vpack.c.b16 %v1619, %v1618
      %v1642 = vpack.c.b16 %v1621, %v1620
      %v1643 = vpack.c.b16 %v1623, %v1622
      %v1644 = vpack.c.b16 %v1625, %v1624
      %v1645 = vpack.c.b16 %v1627, %v1626
      %v1646 = vpack.c.b16 %v1629, %v1628
      %v1647 = vpack.c.b16 %v1631, %v1630
      %v1680 = vunpack.c.l.b16 %v1584
      %v1681 = vunpack.c.l.b16 %v1585
      %v1682 = vunpack.c.l.b16 %v1586
      %v1683 = vunpack.c.l.b16 %v1587
      %v1684 = vunpack.c.l.b16 %v1588
      %v1685 = vunpack.c.l.b16 %v1589
      %v1686 = vunpack.c.l.b16 %v1590
      %v1687 = vunpack.c.l.b16 %v1591
      %v1688 = vunpack.c.l.b16 %v1592
      %v1689 = vunpack.c.l.b16 %v1593
      %v1690 = vunpack.c.l.b16 %v1594
      %v1691 = vunpack.c.l.b16 %v1595
      %v1692 = vunpack.c.l.b16 %v1596
      %v1693 = vunpack.c.l.b16 %v1597
      %v1694 = vunpack.c.l.b16 %v1598
      %v1695 = vunpack.c.l.b16 %v1599
      %v1696 = vpack.c.b16 %v1681, %v1680
      %v1697 = vpack.c.b16 %v1683, %v1682
      %v1698 = vpack.c.b16 %v1685, %v1684
      %v1699 = vpack.c.b16 %v1687, %v1686
      %v1700 = vpack.c.b16 %v1689, %v1688
      %v1701 = vpack.c.b16 %v1691, %v1690
      %v1702 = vpack.c.b16 %v1693, %v1692
      %v1703 = vpack.c.b16 %v1695, %v1694
      %1712 = vmatpush.bf16.msra.mxu0 %v1703
      %1713 = vmatpush.bf16.msra.mxu0 %v1702
      %1714 = vmatpush.bf16.msra.mxu0 %v1701
      %1715 = vmatpush.bf16.msra.mxu0 %v1700
      %1716 = vmatpush.bf16.msra.mxu0 %v1699
      %1717 = vmatpush.bf16.msra.mxu0 %v1698
      %1718 = vmatpush.bf16.msra.mxu0 %v1697
      %1719 = vmatpush.bf16.msra.mxu0 %v1696
      %1720 = vmatmul.bf16.gmra.mxu0 %v1632
      %v1721 = vpop.f32.mrf.mxu0
      %v1722 = vadd.f32 0.0, %v1721
      %v1723 = vpop.f32.mrf.mxu0
      %v1724 = vadd.f32 0.0, %v1723
      %1725 = vmatmul.bf16.gmra.mxu0 %v1633
      %v1726 = vpop.f32.mrf.mxu0
      %v1727 = vadd.f32 0.0, %v1726
      %v1728 = vpop.f32.mrf.mxu0
      %v1729 = vadd.f32 0.0, %v1728
      %1730 = vmatmul.bf16.gmra.mxu0 %v1634
      %v1731 = vpop.f32.mrf.mxu0
      %v1732 = vadd.f32 0.0, %v1731
      %v1733 = vpop.f32.mrf.mxu0
      %v1734 = vadd.f32 0.0, %v1733
      %1735 = vmatmul.bf16.gmra.mxu0 %v1635
      %v1736 = vpop.f32.mrf.mxu0
      %v1737 = vadd.f32 0.0, %v1736
      %v1738 = vpop.f32.mrf.mxu0
      %v1739 = vadd.f32 0.0, %v1738
      %1740 = vmatmul.bf16.gmra.mxu0 %v1636
      %v1741 = vpop.f32.mrf.mxu0
      %v1742 = vadd.f32 0.0, %v1741
      %v1743 = vpop.f32.mrf.mxu0
      %v1744 = vadd.f32 0.0, %v1743
      %1745 = vmatmul.bf16.gmra.mxu0 %v1637
      %v1746 = vpop.f32.mrf.mxu0
      %v1747 = vadd.f32 0.0, %v1746
      %v1748 = vpop.f32.mrf.mxu0
      %v1749 = vadd.f32 0.0, %v1748
      %1750 = vmatmul.bf16.gmra.mxu0 %v1638
      %v1751 = vpop.f32.mrf.mxu0
      %v1752 = vadd.f32 0.0, %v1751
      %v1753 = vpop.f32.mrf.mxu0
      %v1754 = vadd.f32 0.0, %v1753
      %1755 = vmatmul.bf16.gmra.mxu0 %v1639
      %v1756 = vpop.f32.mrf.mxu0
      %v1757 = vadd.f32 0.0, %v1756
      %v1758 = vpop.f32.mrf.mxu0
      %v1759 = vadd.f32 0.0, %v1758
      %1760 = vmatmul.bf16.gmra.mxu0 %v1640
      %v1761 = vpop.f32.mrf.mxu0
      %v1762 = vadd.f32 0.0, %v1761
      %v1763 = vpop.f32.mrf.mxu0
      %v1764 = vadd.f32 0.0, %v1763
      %1765 = vmatmul.bf16.gmra.mxu0 %v1641
      %v1766 = vpop.f32.mrf.mxu0
      %v1767 = vadd.f32 0.0, %v1766
      %v1768 = vpop.f32.mrf.mxu0
      %v1769 = vadd.f32 0.0, %v1768
      %1770 = vmatmul.bf16.gmra.mxu0 %v1642
      %v1771 = vpop.f32.mrf.mxu0
      %v1772 = vadd.f32 0.0, %v1771
      %v1773 = vpop.f32.mrf.mxu0
      %v1774 = vadd.f32 0.0, %v1773
      %1775 = vmatmul.bf16.gmra.mxu0 %v1643
      %v1776 = vpop.f32.mrf.mxu0
      %v1777 = vadd.f32 0.0, %v1776
      %v1778 = vpop.f32.mrf.mxu0
      %v1779 = vadd.f32 0.0, %v1778
      %1780 = vmatmul.bf16.gmra.mxu0 %v1644
      %v1781 = vpop.f32.mrf.mxu0
      %v1782 = vadd.f32 0.0, %v1781
      %v1783 = vpop.f32.mrf.mxu0
      %v1784 = vadd.f32 0.0, %v1783
      %1785 = vmatmul.bf16.gmra.mxu0 %v1645
      %v1786 = vpop.f32.mrf.mxu0
      %v1787 = vadd.f32 0.0, %v1786
      %v1788 = vpop.f32.mrf.mxu0
      %v1789 = vadd.f32 0.0, %v1788
      %1790 = vmatmul.bf16.gmra.mxu0 %v1646
      %v1791 = vpop.f32.mrf.mxu0
      %v1792 = vadd.f32 0.0, %v1791
      %v1793 = vpop.f32.mrf.mxu0
      %v1794 = vadd.f32 0.0, %v1793
      %1795 = vmatmul.bf16.gmra.mxu0 %v1647
      %v1796 = vpop.f32.mrf.mxu0
      %v1797 = vadd.f32 0.0, %v1796
      %v1798 = vpop.f32.mrf.mxu0
      %v1799 = vadd.f32 0.0, %v1798
      %1800 = vdwg.mxu0
      %v1801 = vadd.f32 %v1551, %v1722
      %v1802 = vadd.f32 %v1552, %v1724
      %v1803 = vadd.f32 %v1553, %v1727
      %v1804 = vadd.f32 %v1554, %v1729
      %v1805 = vadd.f32 %v1555, %v1732
      %v1806 = vadd.f32 %v1556, %v1734
      %v1807 = vadd.f32 %v1557, %v1737
      %v1808 = vadd.f32 %v1558, %v1739
      %v1809 = vadd.f32 %v1559, %v1742
      %v1810 = vadd.f32 %v1560, %v1744
      %v1811 = vadd.f32 %v1561, %v1747
      %v1812 = vadd.f32 %v1562, %v1749
      %v1813 = vadd.f32 %v1563, %v1752
      %v1814 = vadd.f32 %v1564, %v1754
      %v1815 = vadd.f32 %v1565, %v1757
      %v1816 = vadd.f32 %v1566, %v1759
      %v1817 = vadd.f32 %v1567, %v1762
      %v1818 = vadd.f32 %v1568, %v1764
      %v1819 = vadd.f32 %v1569, %v1767
      %v1820 = vadd.f32 %v1570, %v1769
      %v1821 = vadd.f32 %v1571, %v1772
      %v1822 = vadd.f32 %v1572, %v1774
      %v1823 = vadd.f32 %v1573, %v1777
      %v1824 = vadd.f32 %v1574, %v1779
      %v1825 = vadd.f32 %v1575, %v1782
      %v1826 = vadd.f32 %v1576, %v1784
      %v1827 = vadd.f32 %v1577, %v1787
      %v1828 = vadd.f32 %v1578, %v1789
      %v1829 = vadd.f32 %v1579, %v1792
      %v1830 = vadd.f32 %v1580, %v1794
      %v1831 = vadd.f32 %v1581, %v1797
      %v1832 = vadd.f32 %v1582, %v1799
      %1833 = vst [vmem:[%s177] sm:$0xff] %v1801
      %1834 = vst [vmem:[%s177 + $0x8] sm:$0xff] %v1802
      %1835 = vst [vmem:[%s177 + $0x10] sm:$0xff] %v1803
      %1836 = vst [vmem:[%s177 + $0x18] sm:$0xff] %v1804
      %1837 = vst [vmem:[%s177 + $0x20] sm:$0xff] %v1805
      %1838 = vst [vmem:[%s177 + $0x28] sm:$0xff] %v1806
      %1839 = vst [vmem:[%s177 + $0x30] sm:$0xff] %v1807
      %1840 = vst [vmem:[%s177 + $0x38] sm:$0xff] %v1808
      %1841 = vst [vmem:[%s177 + $0x40] sm:$0xff] %v1809
      %1842 = vst [vmem:[%s177 + $0x48] sm:$0xff] %v1810
      %1843 = vst [vmem:[%s177 + $0x50] sm:$0xff] %v1811
      %1844 = vst [vmem:[%s177 + $0x58] sm:$0xff] %v1812
      %1845 = vst [vmem:[%s177 + $0x60] sm:$0xff] %v1813
      %1846 = vst [vmem:[%s177 + $0x68] sm:$0xff] %v1814
      %1847 = vst [vmem:[%s177 + $0x70] sm:$0xff] %v1815
      %1848 = vst [vmem:[%s177 + $0x78] sm:$0xff] %v1816
      %1849 = vst [vmem:[%s177 + $0x80] sm:$0xff] %v1817
      %1850 = vst [vmem:[%s177 + $0x88] sm:$0xff] %v1818
      %1851 = vst [vmem:[%s177 + $0x90] sm:$0xff] %v1819
      %1852 = vst [vmem:[%s177 + $0x98] sm:$0xff] %v1820
      %1853 = vst [vmem:[%s177 + $0xa0] sm:$0xff] %v1821
      %1854 = vst [vmem:[%s177 + $0xa8] sm:$0xff] %v1822
      %1855 = vst [vmem:[%s177 + $0xb0] sm:$0xff] %v1823
      %1856 = vst [vmem:[%s177 + $0xb8] sm:$0xff] %v1824
      %1857 = vst [vmem:[%s177 + $0xc0] sm:$0xff] %v1825
      %1858 = vst [vmem:[%s177 + $0xc8] sm:$0xff] %v1826
      %1859 = vst [vmem:[%s177 + $0xd0] sm:$0xff] %v1827
      %1860 = vst [vmem:[%s177 + $0xd8] sm:$0xff] %v1828
      %1861 = vst [vmem:[%s177 + $0xe0] sm:$0xff] %v1829
      %1862 = vst [vmem:[%s177 + $0xe8] sm:$0xff] %v1830
      %1863 = vst [vmem:[%s177 + $0xf0] sm:$0xff] %v1831
      %1864 = vst [vmem:[%s177 + $0xf8] sm:$0xff] %v1832
      %s1865 = scalar_lea.vmem %s172, 12
      %v1866 = vld [vmem:[%s1865] sm:$0xf]
      %v1867 = vld [vmem:[%s1865 + $0x4] sm:$0xf]
      %v1868 = vld [vmem:[%s1865 + $0xc] sm:$0xf]
      %v1869 = vld [vmem:[%s1865 + $0x10] sm:$0xf]
      %v1870 = vld [vmem:[%s1865 + $0x18] sm:$0xf]
      %v1871 = vld [vmem:[%s1865 + $0x1c] sm:$0xf]
      %v1872 = vld [vmem:[%s1865 + $0x24] sm:$0xf]
      %v1873 = vld [vmem:[%s1865 + $0x28] sm:$0xf]
      %v1874 = vld [vmem:[%s1865 + $0x30] sm:$0xf]
      %v1875 = vld [vmem:[%s1865 + $0x34] sm:$0xf]
      %v1876 = vld [vmem:[%s1865 + $0x3c] sm:$0xf]
      %v1877 = vld [vmem:[%s1865 + $0x40] sm:$0xf]
      %v1878 = vld [vmem:[%s1865 + $0x48] sm:$0xf]
      %v1879 = vld [vmem:[%s1865 + $0x4c] sm:$0xf]
      %v1880 = vld [vmem:[%s1865 + $0x54] sm:$0xf]
      %v1881 = vld [vmem:[%s1865 + $0x58] sm:$0xf]
      %v1882 = vld [vmem:[%s1865 + $0x60] sm:$0xf]
      %v1883 = vld [vmem:[%s1865 + $0x64] sm:$0xf]
      %v1884 = vld [vmem:[%s1865 + $0x6c] sm:$0xf]
      %v1885 = vld [vmem:[%s1865 + $0x70] sm:$0xf]
      %v1886 = vld [vmem:[%s1865 + $0x78] sm:$0xf]
      %v1887 = vld [vmem:[%s1865 + $0x7c] sm:$0xf]
      %v1888 = vld [vmem:[%s1865 + $0x84] sm:$0xf]
      %v1889 = vld [vmem:[%s1865 + $0x88] sm:$0xf]
      %v1890 = vld [vmem:[%s1865 + $0x90] sm:$0xf]
      %v1891 = vld [vmem:[%s1865 + $0x94] sm:$0xf]
      %v1892 = vld [vmem:[%s1865 + $0x9c] sm:$0xf]
      %v1893 = vld [vmem:[%s1865 + $0xa0] sm:$0xf]
      %v1894 = vld [vmem:[%s1865 + $0xa8] sm:$0xf]
      %v1895 = vld [vmem:[%s1865 + $0xac] sm:$0xf]
      %v1896 = vld [vmem:[%s1865 + $0xb4] sm:$0xf]
      %v1897 = vld [vmem:[%s1865 + $0xb8] sm:$0xf]
      %v1898 = vld [vmem:[%s177] sm:$0xff]
      %v1899 = vld [vmem:[%s177 + $0x8] sm:$0xff]
      %v1900 = vld [vmem:[%s177 + $0x10] sm:$0xff]
      %v1901 = vld [vmem:[%s177 + $0x18] sm:$0xff]
      %v1902 = vld [vmem:[%s177 + $0x20] sm:$0xff]
      %v1903 = vld [vmem:[%s177 + $0x28] sm:$0xff]
      %v1904 = vld [vmem:[%s177 + $0x30] sm:$0xff]
      %v1905 = vld [vmem:[%s177 + $0x38] sm:$0xff]
      %v1906 = vld [vmem:[%s177 + $0x40] sm:$0xff]
      %v1907 = vld [vmem:[%s177 + $0x48] sm:$0xff]
      %v1908 = vld [vmem:[%s177 + $0x50] sm:$0xff]
      %v1909 = vld [vmem:[%s177 + $0x58] sm:$0xff]
      %v1910 = vld [vmem:[%s177 + $0x60] sm:$0xff]
      %v1911 = vld [vmem:[%s177 + $0x68] sm:$0xff]
      %v1912 = vld [vmem:[%s177 + $0x70] sm:$0xff]
      %v1913 = vld [vmem:[%s177 + $0x78] sm:$0xff]
      %v1914 = vld [vmem:[%s177 + $0x80] sm:$0xff]
      %v1915 = vld [vmem:[%s177 + $0x88] sm:$0xff]
      %v1916 = vld [vmem:[%s177 + $0x90] sm:$0xff]
      %v1917 = vld [vmem:[%s177 + $0x98] sm:$0xff]
      %v1918 = vld [vmem:[%s177 + $0xa0] sm:$0xff]
      %v1919 = vld [vmem:[%s177 + $0xa8] sm:$0xff]
      %v1920 = vld [vmem:[%s177 + $0xb0] sm:$0xff]
      %v1921 = vld [vmem:[%s177 + $0xb8] sm:$0xff]
      %v1922 = vld [vmem:[%s177 + $0xc0] sm:$0xff]
      %v1923 = vld [vmem:[%s177 + $0xc8] sm:$0xff]
      %v1924 = vld [vmem:[%s177 + $0xd0] sm:$0xff]
      %v1925 = vld [vmem:[%s177 + $0xd8] sm:$0xff]
      %v1926 = vld [vmem:[%s177 + $0xe0] sm:$0xff]
      %v1927 = vld [vmem:[%s177 + $0xe8] sm:$0xff]
      %v1928 = vld [vmem:[%s177 + $0xf0] sm:$0xff]
      %v1929 = vld [vmem:[%s177 + $0xf8] sm:$0xff]
      %s1930 = scalar_lea.vmem %s1, 192
      %v1931 = vld [vmem:[%s1930] sm:$0xf]
      %v1932 = vld [vmem:[%s1930 + $0x4] sm:$0xf]
      %v1933 = vld [vmem:[%s1930 + $0x8] sm:$0xf]
      %v1934 = vld [vmem:[%s1930 + $0xc] sm:$0xf]
      %v1935 = vld [vmem:[%s1930 + $0x10] sm:$0xf]
      %v1936 = vld [vmem:[%s1930 + $0x14] sm:$0xf]
      %v1937 = vld [vmem:[%s1930 + $0x18] sm:$0xf]
      %v1938 = vld [vmem:[%s1930 + $0x1c] sm:$0xf]
      %v1939 = vld [vmem:[%s1930 + $0x20] sm:$0xf]
      %v1940 = vld [vmem:[%s1930 + $0x24] sm:$0xf]
      %v1941 = vld [vmem:[%s1930 + $0x28] sm:$0xf]
      %v1942 = vld [vmem:[%s1930 + $0x2c] sm:$0xf]
      %v1943 = vld [vmem:[%s1930 + $0x30] sm:$0xf]
      %v1944 = vld [vmem:[%s1930 + $0x34] sm:$0xf]
      %v1945 = vld [vmem:[%s1930 + $0x38] sm:$0xf]
      %v1946 = vld [vmem:[%s1930 + $0x3c] sm:$0xf]
      %v1979 = vunpack.c.l.b16 %v1866
      %v1980 = vunpack.c.l.b16 %v1867
      %v1981 = vunpack.c.l.b16 %v1868
      %v1982 = vunpack.c.l.b16 %v1869
      %v1983 = vunpack.c.l.b16 %v1870
      %v1984 = vunpack.c.l.b16 %v1871
      %v1985 = vunpack.c.l.b16 %v1872
      %v1986 = vunpack.c.l.b16 %v1873
      %v1987 = vunpack.c.l.b16 %v1874
      %v1988 = vunpack.c.l.b16 %v1875
      %v1989 = vunpack.c.l.b16 %v1876
      %v1990 = vunpack.c.l.b16 %v1877
      %v1991 = vunpack.c.l.b16 %v1878
      %v1992 = vunpack.c.l.b16 %v1879
      %v1993 = vunpack.c.l.b16 %v1880
      %v1994 = vunpack.c.l.b16 %v1881
      %v1995 = vunpack.c.l.b16 %v1882
      %v1996 = vunpack.c.l.b16 %v1883
      %v1997 = vunpack.c.l.b16 %v1884
      %v1998 = vunpack.c.l.b16 %v1885
      %v1999 = vunpack.c.l.b16 %v1886
      %v2000 = vunpack.c.l.b16 %v1887
      %v2001 = vunpack.c.l.b16 %v1888
      %v2002 = vunpack.c.l.b16 %v1889
      %v2003 = vunpack.c.l.b16 %v1890
      %v2004 = vunpack.c.l.b16 %v1891
      %v2005 = vunpack.c.l.b16 %v1892
      %v2006 = vunpack.c.l.b16 %v1893
      %v2007 = vunpack.c.l.b16 %v1894
      %v2008 = vunpack.c.l.b16 %v1895
      %v2009 = vunpack.c.l.b16 %v1896
      %v2010 = vunpack.c.l.b16 %v1897
      %v2011 = vpack.c.b16 %v1980, %v1979
      %v2012 = vpack.c.b16 %v1982, %v1981
      %v2013 = vpack.c.b16 %v1984, %v1983
      %v2014 = vpack.c.b16 %v1986, %v1985
      %v2015 = vpack.c.b16 %v1988, %v1987
      %v2016 = vpack.c.b16 %v1990, %v1989
      %v2017 = vpack.c.b16 %v1992, %v1991
      %v2018 = vpack.c.b16 %v1994, %v1993
      %v2019 = vpack.c.b16 %v1996, %v1995
      %v2020 = vpack.c.b16 %v1998, %v1997
      %v2021 = vpack.c.b16 %v2000, %v1999
      %v2022 = vpack.c.b16 %v2002, %v2001
      %v2023 = vpack.c.b16 %v2004, %v2003
      %v2024 = vpack.c.b16 %v2006, %v2005
      %v2025 = vpack.c.b16 %v2008, %v2007
      %v2026 = vpack.c.b16 %v2010, %v2009
      %v2059 = vunpack.c.l.b16 %v1931
      %v2060 = vunpack.c.l.b16 %v1932
      %v2061 = vunpack.c.l.b16 %v1933
      %v2062 = vunpack.c.l.b16 %v1934
      %v2063 = vunpack.c.l.b16 %v1935
      %v2064 = vunpack.c.l.b16 %v1936
      %v2065 = vunpack.c.l.b16 %v1937
      %v2066 = vunpack.c.l.b16 %v1938
      %v2067 = vunpack.c.l.b16 %v1939
      %v2068 = vunpack.c.l.b16 %v1940
      %v2069 = vunpack.c.l.b16 %v1941
      %v2070 = vunpack.c.l.b16 %v1942
      %v2071 = vunpack.c.l.b16 %v1943
      %v2072 = vunpack.c.l.b16 %v1944
      %v2073 = vunpack.c.l.b16 %v1945
      %v2074 = vunpack.c.l.b16 %v1946
      %v2075 = vpack.c.b16 %v2060, %v2059
      %v2076 = vpack.c.b16 %v2062, %v2061
      %v2077 = vpack.c.b16 %v2064, %v2063
      %v2078 = vpack.c.b16 %v2066, %v2065
      %v2079 = vpack.c.b16 %v2068, %v2067
      %v2080 = vpack.c.b16 %v2070, %v2069
      %v2081 = vpack.c.b16 %v2072, %v2071
      %v2082 = vpack.c.b16 %v2074, %v2073
      %2091 = vmatpush.bf16.msra.mxu0 %v2082
      %2092 = vmatpush.bf16.msra.mxu0 %v2081
      %2093 = vmatpush.bf16.msra.mxu0 %v2080
      %2094 = vmatpush.bf16.msra.mxu0 %v2079
      %2095 = vmatpush.bf16.msra.mxu0 %v2078
      %2096 = vmatpush.bf16.msra.mxu0 %v2077
      %2097 = vmatpush.bf16.msra.mxu0 %v2076
      %2098 = vmatpush.bf16.msra.mxu0 %v2075
      %2099 = vmatmul.bf16.gmra.mxu0 %v2011
      %v2100 = vpop.f32.mrf.mxu0
      %v2101 = vadd.f32 0.0, %v2100
      %v2102 = vpop.f32.mrf.mxu0
      %v2103 = vadd.f32 0.0, %v2102
      %2104 = vmatmul.bf16.gmra.mxu0 %v2012
      %v2105 = vpop.f32.mrf.mxu0
      %v2106 = vadd.f32 0.0, %v2105
      %v2107 = vpop.f32.mrf.mxu0
      %v2108 = vadd.f32 0.0, %v2107
      %2109 = vmatmul.bf16.gmra.mxu0 %v2013
      %v2110 = vpop.f32.mrf.mxu0
      %v2111 = vadd.f32 0.0, %v2110
      %v2112 = vpop.f32.mrf.mxu0
      %v2113 = vadd.f32 0.0, %v2112
      %2114 = vmatmul.bf16.gmra.mxu0 %v2014
      %v2115 = vpop.f32.mrf.mxu0
      %v2116 = vadd.f32 0.0, %v2115
      %v2117 = vpop.f32.mrf.mxu0
      %v2118 = vadd.f32 0.0, %v2117
      %2119 = vmatmul.bf16.gmra.mxu0 %v2015
      %v2120 = vpop.f32.mrf.mxu0
      %v2121 = vadd.f32 0.0, %v2120
      %v2122 = vpop.f32.mrf.mxu0
      %v2123 = vadd.f32 0.0, %v2122
      %2124 = vmatmul.bf16.gmra.mxu0 %v2016
      %v2125 = vpop.f32.mrf.mxu0
      %v2126 = vadd.f32 0.0, %v2125
      %v2127 = vpop.f32.mrf.mxu0
      %v2128 = vadd.f32 0.0, %v2127
      %2129 = vmatmul.bf16.gmra.mxu0 %v2017
      %v2130 = vpop.f32.mrf.mxu0
      %v2131 = vadd.f32 0.0, %v2130
      %v2132 = vpop.f32.mrf.mxu0
      %v2133 = vadd.f32 0.0, %v2132
      %2134 = vmatmul.bf16.gmra.mxu0 %v2018
      %v2135 = vpop.f32.mrf.mxu0
      %v2136 = vadd.f32 0.0, %v2135
      %v2137 = vpop.f32.mrf.mxu0
      %v2138 = vadd.f32 0.0, %v2137
      %2139 = vmatmul.bf16.gmra.mxu0 %v2019
      %v2140 = vpop.f32.mrf.mxu0
      %v2141 = vadd.f32 0.0, %v2140
      %v2142 = vpop.f32.mrf.mxu0
      %v2143 = vadd.f32 0.0, %v2142
      %2144 = vmatmul.bf16.gmra.mxu0 %v2020
      %v2145 = vpop.f32.mrf.mxu0
      %v2146 = vadd.f32 0.0, %v2145
      %v2147 = vpop.f32.mrf.mxu0
      %v2148 = vadd.f32 0.0, %v2147
      %2149 = vmatmul.bf16.gmra.mxu0 %v2021
      %v2150 = vpop.f32.mrf.mxu0
      %v2151 = vadd.f32 0.0, %v2150
      %v2152 = vpop.f32.mrf.mxu0
      %v2153 = vadd.f32 0.0, %v2152
      %2154 = vmatmul.bf16.gmra.mxu0 %v2022
      %v2155 = vpop.f32.mrf.mxu0
      %v2156 = vadd.f32 0.0, %v2155
      %v2157 = vpop.f32.mrf.mxu0
      %v2158 = vadd.f32 0.0, %v2157
      %2159 = vmatmul.bf16.gmra.mxu0 %v2023
      %v2160 = vpop.f32.mrf.mxu0
      %v2161 = vadd.f32 0.0, %v2160
      %v2162 = vpop.f32.mrf.mxu0
      %v2163 = vadd.f32 0.0, %v2162
      %2164 = vmatmul.bf16.gmra.mxu0 %v2024
      %v2165 = vpop.f32.mrf.mxu0
      %v2166 = vadd.f32 0.0, %v2165
      %v2167 = vpop.f32.mrf.mxu0
      %v2168 = vadd.f32 0.0, %v2167
      %2169 = vmatmul.bf16.gmra.mxu0 %v2025
      %v2170 = vpop.f32.mrf.mxu0
      %v2171 = vadd.f32 0.0, %v2170
      %v2172 = vpop.f32.mrf.mxu0
      %v2173 = vadd.f32 0.0, %v2172
      %2174 = vmatmul.bf16.gmra.mxu0 %v2026
      %v2175 = vpop.f32.mrf.mxu0
      %v2176 = vadd.f32 0.0, %v2175
      %v2177 = vpop.f32.mrf.mxu0
      %v2178 = vadd.f32 0.0, %v2177
      %2179 = vdwg.mxu0
      %v2180 = vadd.f32 %v1898, %v2101
      %v2181 = vadd.f32 %v1899, %v2103
      %v2182 = vadd.f32 %v1900, %v2106
      %v2183 = vadd.f32 %v1901, %v2108
      %v2184 = vadd.f32 %v1902, %v2111
      %v2185 = vadd.f32 %v1903, %v2113
      %v2186 = vadd.f32 %v1904, %v2116
      %v2187 = vadd.f32 %v1905, %v2118
      %v2188 = vadd.f32 %v1906, %v2121
      %v2189 = vadd.f32 %v1907, %v2123
      %v2190 = vadd.f32 %v1908, %v2126
      %v2191 = vadd.f32 %v1909, %v2128
      %v2192 = vadd.f32 %v1910, %v2131
      %v2193 = vadd.f32 %v1911, %v2133
      %v2194 = vadd.f32 %v1912, %v2136
      %v2195 = vadd.f32 %v1913, %v2138
      %v2196 = vadd.f32 %v1914, %v2141
      %v2197 = vadd.f32 %v1915, %v2143
      %v2198 = vadd.f32 %v1916, %v2146
      %v2199 = vadd.f32 %v1917, %v2148
      %v2200 = vadd.f32 %v1918, %v2151
      %v2201 = vadd.f32 %v1919, %v2153
      %v2202 = vadd.f32 %v1920, %v2156
      %v2203 = vadd.f32 %v1921, %v2158
      %v2204 = vadd.f32 %v1922, %v2161
      %v2205 = vadd.f32 %v1923, %v2163
      %v2206 = vadd.f32 %v1924, %v2166
      %v2207 = vadd.f32 %v1925, %v2168
      %v2208 = vadd.f32 %v1926, %v2171
      %v2209 = vadd.f32 %v1927, %v2173
      %v2210 = vadd.f32 %v1928, %v2176
      %v2211 = vadd.f32 %v1929, %v2178
      %2212 = vst [vmem:[%s177] sm:$0xff] %v2180
      %2213 = vst [vmem:[%s177 + $0x8] sm:$0xff] %v2181
      %2214 = vst [vmem:[%s177 + $0x10] sm:$0xff] %v2182
      %2215 = vst [vmem:[%s177 + $0x18] sm:$0xff] %v2183
      %2216 = vst [vmem:[%s177 + $0x20] sm:$0xff] %v2184
      %2217 = vst [vmem:[%s177 + $0x28] sm:$0xff] %v2185
      %2218 = vst [vmem:[%s177 + $0x30] sm:$0xff] %v2186
      %2219 = vst [vmem:[%s177 + $0x38] sm:$0xff] %v2187
      %2220 = vst [vmem:[%s177 + $0x40] sm:$0xff] %v2188
      %2221 = vst [vmem:[%s177 + $0x48] sm:$0xff] %v2189
      %2222 = vst [vmem:[%s177 + $0x50] sm:$0xff] %v2190
      %2223 = vst [vmem:[%s177 + $0x58] sm:$0xff] %v2191
      %2224 = vst [vmem:[%s177 + $0x60] sm:$0xff] %v2192
      %2225 = vst [vmem:[%s177 + $0x68] sm:$0xff] %v2193
      %2226 = vst [vmem:[%s177 + $0x70] sm:$0xff] %v2194
      %2227 = vst [vmem:[%s177 + $0x78] sm:$0xff] %v2195
      %2228 = vst [vmem:[%s177 + $0x80] sm:$0xff] %v2196
      %2229 = vst [vmem:[%s177 + $0x88] sm:$0xff] %v2197
      %2230 = vst [vmem:[%s177 + $0x90] sm:$0xff] %v2198
      %2231 = vst [vmem:[%s177 + $0x98] sm:$0xff] %v2199
      %2232 = vst [vmem:[%s177 + $0xa0] sm:$0xff] %v2200
      %2233 = vst [vmem:[%s177 + $0xa8] sm:$0xff] %v2201
      %2234 = vst [vmem:[%s177 + $0xb0] sm:$0xff] %v2202
      %2235 = vst [vmem:[%s177 + $0xb8] sm:$0xff] %v2203
      %2236 = vst [vmem:[%s177 + $0xc0] sm:$0xff] %v2204
      %2237 = vst [vmem:[%s177 + $0xc8] sm:$0xff] %v2205
      %2238 = vst [vmem:[%s177 + $0xd0] sm:$0xff] %v2206
      %2239 = vst [vmem:[%s177 + $0xd8] sm:$0xff] %v2207
      %2240 = vst [vmem:[%s177 + $0xe0] sm:$0xff] %v2208
      %2241 = vst [vmem:[%s177 + $0xe8] sm:$0xff] %v2209
      %2242 = vst [vmem:[%s177 + $0xf0] sm:$0xff] %v2210
      %2243 = vst [vmem:[%s177 + $0xf8] sm:$0xff] %v2211
      %v2244 = vld [vmem:[%s1865] sm:$0xf]
      %v2245 = vld [vmem:[%s1865 + $0x4] sm:$0xf]
      %v2246 = vld [vmem:[%s1865 + $0x8] sm:$0x1]
      %v2247 = vld [vmem:[%s1865 + $0xc] sm:$0xf]
      %v2248 = vld [vmem:[%s1865 + $0x10] sm:$0xf]
      %v2249 = vld [vmem:[%s1865 + $0x14] sm:$0x1]
      %v2250 = vld [vmem:[%s1865 + $0x18] sm:$0xf]
      %v2251 = vld [vmem:[%s1865 + $0x1c] sm:$0xf]
      %v2252 = vld [vmem:[%s1865 + $0x20] sm:$0x1]
      %v2253 = vld [vmem:[%s1865 + $0x24] sm:$0xf]
      %v2254 = vld [vmem:[%s1865 + $0x28] sm:$0xf]
      %v2255 = vld [vmem:[%s1865 + $0x2c] sm:$0x1]
      %v2256 = vld [vmem:[%s1865 + $0x30] sm:$0xf]
      %v2257 = vld [vmem:[%s1865 + $0x34] sm:$0xf]
      %v2258 = vld [vmem:[%s1865 + $0x38] sm:$0x1]
      %v2259 = vld [vmem:[%s1865 + $0x3c] sm:$0xf]
      %v2260 = vld [vmem:[%s1865 + $0x40] sm:$0xf]
      %v2261 = vld [vmem:[%s1865 + $0x44] sm:$0x1]
      %v2262 = vld [vmem:[%s1865 + $0x48] sm:$0xf]
      %v2263 = vld [vmem:[%s1865 + $0x4c] sm:$0xf]
      %v2264 = vld [vmem:[%s1865 + $0x50] sm:$0x1]
      %v2265 = vld [vmem:[%s1865 + $0x54] sm:$0xf]
      %v2266 = vld [vmem:[%s1865 + $0x58] sm:$0xf]
      %v2267 = vld [vmem:[%s1865 + $0x5c] sm:$0x1]
      %v2268 = vld [vmem:[%s1865 + $0x60] sm:$0xf]
      %v2269 = vld [vmem:[%s1865 + $0x64] sm:$0xf]
      %v2270 = vld [vmem:[%s1865 + $0x68] sm:$0x1]
      %v2271 = vld [vmem:[%s1865 + $0x6c] sm:$0xf]
      %v2272 = vld [vmem:[%s1865 + $0x70] sm:$0xf]
      %v2273 = vld [vmem:[%s1865 + $0x74] sm:$0x1]
      %v2274 = vld [vmem:[%s1865 + $0x78] sm:$0xf]
      %v2275 = vld [vmem:[%s1865 + $0x7c] sm:$0xf]
      %v2276 = vld [vmem:[%s1865 + $0x80] sm:$0x1]
      %v2277 = vld [vmem:[%s1865 + $0x84] sm:$0xf]
      %v2278 = vld [vmem:[%s1865 + $0x88] sm:$0xf]
      %v2279 = vld [vmem:[%s1865 + $0x8c] sm:$0x1]
      %v2280 = vld [vmem:[%s1865 + $0x90] sm:$0xf]
      %v2281 = vld [vmem:[%s1865 + $0x94] sm:$0xf]
      %v2282 = vld [vmem:[%s1865 + $0x98] sm:$0x1]
      %v2283 = vld [vmem:[%s1865 + $0x9c] sm:$0xf]
      %v2284 = vld [vmem:[%s1865 + $0xa0] sm:$0xf]
      %v2285 = vld [vmem:[%s1865 + $0xa4] sm:$0x1]
      %v2286 = vld [vmem:[%s1865 + $0xa8] sm:$0xf]
      %v2287 = vld [vmem:[%s1865 + $0xac] sm:$0xf]
      %v2288 = vld [vmem:[%s1865 + $0xb0] sm:$0x1]
      %v2289 = vld [vmem:[%s1865 + $0xb4] sm:$0xf]
      %v2290 = vld [vmem:[%s1865 + $0xb8] sm:$0xf]
      %v2291 = vld [vmem:[%s1865 + $0xbc] sm:$0x1]
      %v2293 = vshrl.u32 %v2244, 16
      %v2295 = vrot.slane %v2293, 4
      %v2296 = vshll.u32 %v2244, 16
      %v2298 = vrot.slane %v2296, 5
      %v2299 = vor.u32 %v2295, %v2298
      %v2300 = vrot.slane %v2299, 4
      %v2302 = vshll.u32 %v2245, 16
      %v2304 = vrot.slane %v2302, 5
      %v2305 = vsel %vm641, %v2300, %v2304
      %v2306 = vshrl.u32 %v2245, 16
      %v2308 = vrot.slane %v2306, 4
      %v2309 = vor.u32 %v2308, %v2304
      %v2310 = vrot.slane %v2309, 4
      %v2312 = vshll.u32 %v2246, 16
      %v2314 = vrot.slane %v2312, 5
      %v2315 = vsel %vm641, %v2310, %v2314
      %v2317 = vshrl.u32 %v2247, 16
      %v2319 = vrot.slane %v2317, 4
      %v2320 = vshll.u32 %v2247, 16
      %v2322 = vrot.slane %v2320, 5
      %v2323 = vor.u32 %v2319, %v2322
      %v2324 = vrot.slane %v2323, 4
      %v2326 = vshll.u32 %v2248, 16
      %v2328 = vrot.slane %v2326, 5
      %v2329 = vsel %vm641, %v2324, %v2328
      %v2330 = vshrl.u32 %v2248, 16
      %v2332 = vrot.slane %v2330, 4
      %v2333 = vor.u32 %v2332, %v2328
      %v2334 = vrot.slane %v2333, 4
      %v2336 = vshll.u32 %v2249, 16
      %v2338 = vrot.slane %v2336, 5
      %v2339 = vsel %vm641, %v2334, %v2338
      %v2341 = vshrl.u32 %v2250, 16
      %v2343 = vrot.slane %v2341, 4
      %v2344 = vshll.u32 %v2250, 16
      %v2346 = vrot.slane %v2344, 5
      %v2347 = vor.u32 %v2343, %v2346
      %v2348 = vrot.slane %v2347, 4
      %v2350 = vshll.u32 %v2251, 16
      %v2352 = vrot.slane %v2350, 5
      %v2353 = vsel %vm641, %v2348, %v2352
      %v2354 = vshrl.u32 %v2251, 16
      %v2356 = vrot.slane %v2354, 4
      %v2357 = vor.u32 %v2356, %v2352
      %v2358 = vrot.slane %v2357, 4
      %v2360 = vshll.u32 %v2252, 16
      %v2362 = vrot.slane %v2360, 5
      %v2363 = vsel %vm641, %v2358, %v2362
      %v2365 = vshrl.u32 %v2253, 16
      %v2367 = vrot.slane %v2365, 4
      %v2368 = vshll.u32 %v2253, 16
      %v2370 = vrot.slane %v2368, 5
      %v2371 = vor.u32 %v2367, %v2370
      %v2372 = vrot.slane %v2371, 4
      %v2374 = vshll.u32 %v2254, 16
      %v2376 = vrot.slane %v2374, 5
      %v2377 = vsel %vm641, %v2372, %v2376
      %v2378 = vshrl.u32 %v2254, 16
      %v2380 = vrot.slane %v2378, 4
      %v2381 = vor.u32 %v2380, %v2376
      %v2382 = vrot.slane %v2381, 4
      %v2384 = vshll.u32 %v2255, 16
      %v2386 = vrot.slane %v2384, 5
      %v2387 = vsel %vm641, %v2382, %v2386
      %v2389 = vshrl.u32 %v2256, 16
      %v2391 = vrot.slane %v2389, 4
      %v2392 = vshll.u32 %v2256, 16
      %v2394 = vrot.slane %v2392, 5
      %v2395 = vor.u32 %v2391, %v2394
      %v2396 = vrot.slane %v2395, 4
      %v2398 = vshll.u32 %v2257, 16
      %v2400 = vrot.slane %v2398, 5
      %v2401 = vsel %vm641, %v2396, %v2400
      %v2402 = vshrl.u32 %v2257, 16
      %v2404 = vrot.slane %v2402, 4
      %v2405 = vor.u32 %v2404, %v2400
      %v2406 = vrot.slane %v2405, 4
      %v2408 = vshll.u32 %v2258, 16
      %v2410 = vrot.slane %v2408, 5
      %v2411 = vsel %vm641, %v2406, %v2410
      %v2413 = vshrl.u32 %v2259, 16
      %v2415 = vrot.slane %v2413, 4
      %v2416 = vshll.u32 %v2259, 16
      %v2418 = vrot.slane %v2416, 5
      %v2419 = vor.u32 %v2415, %v2418
      %v2420 = vrot.slane %v2419, 4
      %v2422 = vshll.u32 %v2260, 16
      %v2424 = vrot.slane %v2422, 5
      %v2425 = vsel %vm641, %v2420, %v2424
      %v2426 = vshrl.u32 %v2260, 16
      %v2428 = vrot.slane %v2426, 4
      %v2429 = vor.u32 %v2428, %v2424
      %v2430 = vrot.slane %v2429, 4
      %v2432 = vshll.u32 %v2261, 16
      %v2434 = vrot.slane %v2432, 5
      %v2435 = vsel %vm641, %v2430, %v2434
      %v2437 = vshrl.u32 %v2262, 16
      %v2439 = vrot.slane %v2437, 4
      %v2440 = vshll.u32 %v2262, 16
      %v2442 = vrot.slane %v2440, 5
      %v2443 = vor.u32 %v2439, %v2442
      %v2444 = vrot.slane %v2443, 4
      %v2446 = vshll.u32 %v2263, 16
      %v2448 = vrot.slane %v2446, 5
      %v2449 = vsel %vm641, %v2444, %v2448
      %v2450 = vshrl.u32 %v2263, 16
      %v2452 = vrot.slane %v2450, 4
      %v2453 = vor.u32 %v2452, %v2448
      %v2454 = vrot.slane %v2453, 4
      %v2456 = vshll.u32 %v2264, 16
      %v2458 = vrot.slane %v2456, 5
      %v2459 = vsel %vm641, %v2454, %v2458
      %v2461 = vshrl.u32 %v2265, 16
      %v2463 = vrot.slane %v2461, 4
      %v2464 = vshll.u32 %v2265, 16
      %v2466 = vrot.slane %v2464, 5
      %v2467 = vor.u32 %v2463, %v2466
      %v2468 = vrot.slane %v2467, 4
      %v2470 = vshll.u32 %v2266, 16
      %v2472 = vrot.slane %v2470, 5
      %v2473 = vsel %vm641, %v2468, %v2472
      %v2474 = vshrl.u32 %v2266, 16
      %v2476 = vrot.slane %v2474, 4
      %v2477 = vor.u32 %v2476, %v2472
      %v2478 = vrot.slane %v2477, 4
      %v2480 = vshll.u32 %v2267, 16
      %v2482 = vrot.slane %v2480, 5
      %v2483 = vsel %vm641, %v2478, %v2482
      %v2485 = vshrl.u32 %v2268, 16
      %v2487 = vrot.slane %v2485, 4
      %v2488 = vshll.u32 %v2268, 16
      %v2490 = vrot.slane %v2488, 5
      %v2491 = vor.u32 %v2487, %v2490
      %v2492 = vrot.slane %v2491, 4
      %v2494 = vshll.u32 %v2269, 16
      %v2496 = vrot.slane %v2494, 5
      %v2497 = vsel %vm641, %v2492, %v2496
      %v2498 = vshrl.u32 %v2269, 16
      %v2500 = vrot.slane %v2498, 4
      %v2501 = vor.u32 %v2500, %v2496
      %v2502 = vrot.slane %v2501, 4
      %v2504 = vshll.u32 %v2270, 16
      %v2506 = vrot.slane %v2504, 5
      %v2507 = vsel %vm641, %v2502, %v2506
      %v2509 = vshrl.u32 %v2271, 16
      %v2511 = vrot.slane %v2509, 4
      %v2512 = vshll.u32 %v2271, 16
      %v2514 = vrot.slane %v2512, 5
      %v2515 = vor.u32 %v2511, %v2514
      %v2516 = vrot.slane %v2515, 4
      %v2518 = vshll.u32 %v2272, 16
      %v2520 = vrot.slane %v2518, 5
      %v2521 = vsel %vm641, %v2516, %v2520
      %v2522 = vshrl.u32 %v2272, 16
      %v2524 = vrot.slane %v2522, 4
      %v2525 = vor.u32 %v2524, %v2520
      %v2526 = vrot.slane %v2525, 4
      %v2528 = vshll.u32 %v2273, 16
      %v2530 = vrot.slane %v2528, 5
      %v2531 = vsel %vm641, %v2526, %v2530
      %v2533 = vshrl.u32 %v2274, 16
      %v2535 = vrot.slane %v2533, 4
      %v2536 = vshll.u32 %v2274, 16
      %v2538 = vrot.slane %v2536, 5
      %v2539 = vor.u32 %v2535, %v2538
      %v2540 = vrot.slane %v2539, 4
      %v2542 = vshll.u32 %v2275, 16
      %v2544 = vrot.slane %v2542, 5
      %v2545 = vsel %vm641, %v2540, %v2544
      %v2546 = vshrl.u32 %v2275, 16
      %v2548 = vrot.slane %v2546, 4
      %v2549 = vor.u32 %v2548, %v2544
      %v2550 = vrot.slane %v2549, 4
      %v2552 = vshll.u32 %v2276, 16
      %v2554 = vrot.slane %v2552, 5
      %v2555 = vsel %vm641, %v2550, %v2554
      %v2557 = vshrl.u32 %v2277, 16
      %v2559 = vrot.slane %v2557, 4
      %v2560 = vshll.u32 %v2277, 16
      %v2562 = vrot.slane %v2560, 5
      %v2563 = vor.u32 %v2559, %v2562
      %v2564 = vrot.slane %v2563, 4
      %v2566 = vshll.u32 %v2278, 16
      %v2568 = vrot.slane %v2566, 5
      %v2569 = vsel %vm641, %v2564, %v2568
      %v2570 = vshrl.u32 %v2278, 16
      %v2572 = vrot.slane %v2570, 4
      %v2573 = vor.u32 %v2572, %v2568
      %v2574 = vrot.slane %v2573, 4
      %v2576 = vshll.u32 %v2279, 16
      %v2578 = vrot.slane %v2576, 5
      %v2579 = vsel %vm641, %v2574, %v2578
      %v2581 = vshrl.u32 %v2280, 16
      %v2583 = vrot.slane %v2581, 4
      %v2584 = vshll.u32 %v2280, 16
      %v2586 = vrot.slane %v2584, 5
      %v2587 = vor.u32 %v2583, %v2586
      %v2588 = vrot.slane %v2587, 4
      %v2590 = vshll.u32 %v2281, 16
      %v2592 = vrot.slane %v2590, 5
      %v2593 = vsel %vm641, %v2588, %v2592
      %v2594 = vshrl.u32 %v2281, 16
      %v2596 = vrot.slane %v2594, 4
      %v2597 = vor.u32 %v2596, %v2592
      %v2598 = vrot.slane %v2597, 4
      %v2600 = vshll.u32 %v2282, 16
      %v2602 = vrot.slane %v2600, 5
      %v2603 = vsel %vm641, %v2598, %v2602
      %v2605 = vshrl.u32 %v2283, 16
      %v2607 = vrot.slane %v2605, 4
      %v2608 = vshll.u32 %v2283, 16
      %v2610 = vrot.slane %v2608, 5
      %v2611 = vor.u32 %v2607, %v2610
      %v2612 = vrot.slane %v2611, 4
      %v2614 = vshll.u32 %v2284, 16
      %v2616 = vrot.slane %v2614, 5
      %v2617 = vsel %vm641, %v2612, %v2616
      %v2618 = vshrl.u32 %v2284, 16
      %v2620 = vrot.slane %v2618, 4
      %v2621 = vor.u32 %v2620, %v2616
      %v2622 = vrot.slane %v2621, 4
      %v2624 = vshll.u32 %v2285, 16
      %v2626 = vrot.slane %v2624, 5
      %v2627 = vsel %vm641, %v2622, %v2626
      %v2629 = vshrl.u32 %v2286, 16
      %v2631 = vrot.slane %v2629, 4
      %v2632 = vshll.u32 %v2286, 16
      %v2634 = vrot.slane %v2632, 5
      %v2635 = vor.u32 %v2631, %v2634
      %v2636 = vrot.slane %v2635, 4
      %v2638 = vshll.u32 %v2287, 16
      %v2640 = vrot.slane %v2638, 5
      %v2641 = vsel %vm641, %v2636, %v2640
      %v2642 = vshrl.u32 %v2287, 16
      %v2644 = vrot.slane %v2642, 4
      %v2645 = vor.u32 %v2644, %v2640
      %v2646 = vrot.slane %v2645, 4
      %v2648 = vshll.u32 %v2288, 16
      %v2650 = vrot.slane %v2648, 5
      %v2651 = vsel %vm641, %v2646, %v2650
      %v2653 = vshrl.u32 %v2289, 16
      %v2655 = vrot.slane %v2653, 4
      %v2656 = vshll.u32 %v2289, 16
      %v2658 = vrot.slane %v2656, 5
      %v2659 = vor.u32 %v2655, %v2658
      %v2660 = vrot.slane %v2659, 4
      %v2662 = vshll.u32 %v2290, 16
      %v2664 = vrot.slane %v2662, 5
      %v2665 = vsel %vm641, %v2660, %v2664
      %v2666 = vshrl.u32 %v2290, 16
      %v2668 = vrot.slane %v2666, 4
      %v2669 = vor.u32 %v2668, %v2664
      %v2670 = vrot.slane %v2669, 4
      %v2672 = vshll.u32 %v2291, 16
      %v2674 = vrot.slane %v2672, 5
      %v2675 = vsel %vm641, %v2670, %v2674
      %v2676 = vld [vmem:[%s177] sm:$0xff]
      %v2677 = vld [vmem:[%s177 + $0x8] sm:$0xff]
      %v2678 = vld [vmem:[%s177 + $0x10] sm:$0xff]
      %v2679 = vld [vmem:[%s177 + $0x18] sm:$0xff]
      %v2680 = vld [vmem:[%s177 + $0x20] sm:$0xff]
      %v2681 = vld [vmem:[%s177 + $0x28] sm:$0xff]
      %v2682 = vld [vmem:[%s177 + $0x30] sm:$0xff]
      %v2683 = vld [vmem:[%s177 + $0x38] sm:$0xff]
      %v2684 = vld [vmem:[%s177 + $0x40] sm:$0xff]
      %v2685 = vld [vmem:[%s177 + $0x48] sm:$0xff]
      %v2686 = vld [vmem:[%s177 + $0x50] sm:$0xff]
      %v2687 = vld [vmem:[%s177 + $0x58] sm:$0xff]
      %v2688 = vld [vmem:[%s177 + $0x60] sm:$0xff]
      %v2689 = vld [vmem:[%s177 + $0x68] sm:$0xff]
      %v2690 = vld [vmem:[%s177 + $0x70] sm:$0xff]
      %v2691 = vld [vmem:[%s177 + $0x78] sm:$0xff]
      %v2692 = vld [vmem:[%s177 + $0x80] sm:$0xff]
      %v2693 = vld [vmem:[%s177 + $0x88] sm:$0xff]
      %v2694 = vld [vmem:[%s177 + $0x90] sm:$0xff]
      %v2695 = vld [vmem:[%s177 + $0x98] sm:$0xff]
      %v2696 = vld [vmem:[%s177 + $0xa0] sm:$0xff]
      %v2697 = vld [vmem:[%s177 + $0xa8] sm:$0xff]
      %v2698 = vld [vmem:[%s177 + $0xb0] sm:$0xff]
      %v2699 = vld [vmem:[%s177 + $0xb8] sm:$0xff]
      %v2700 = vld [vmem:[%s177 + $0xc0] sm:$0xff]
      %v2701 = vld [vmem:[%s177 + $0xc8] sm:$0xff]
      %v2702 = vld [vmem:[%s177 + $0xd0] sm:$0xff]
      %v2703 = vld [vmem:[%s177 + $0xd8] sm:$0xff]
      %v2704 = vld [vmem:[%s177 + $0xe0] sm:$0xff]
      %v2705 = vld [vmem:[%s177 + $0xe8] sm:$0xff]
      %v2706 = vld [vmem:[%s177 + $0xf0] sm:$0xff]
      %v2707 = vld [vmem:[%s177 + $0xf8] sm:$0xff]
      %s2708 = scalar_lea.vmem %s1, 256
      %v2709 = vld [vmem:[%s2708] sm:$0xf]
      %v2710 = vld [vmem:[%s2708 + $0x4] sm:$0xf]
      %v2711 = vld [vmem:[%s2708 + $0x8] sm:$0xf]
      %v2712 = vld [vmem:[%s2708 + $0xc] sm:$0xf]
      %v2713 = vld [vmem:[%s2708 + $0x10] sm:$0xf]
      %v2714 = vld [vmem:[%s2708 + $0x14] sm:$0xf]
      %v2715 = vld [vmem:[%s2708 + $0x18] sm:$0xf]
      %v2716 = vld [vmem:[%s2708 + $0x1c] sm:$0xf]
      %v2717 = vld [vmem:[%s2708 + $0x20] sm:$0xf]
      %v2718 = vld [vmem:[%s2708 + $0x24] sm:$0xf]
      %v2719 = vld [vmem:[%s2708 + $0x28] sm:$0xf]
      %v2720 = vld [vmem:[%s2708 + $0x2c] sm:$0xf]
      %v2721 = vld [vmem:[%s2708 + $0x30] sm:$0xf]
      %v2722 = vld [vmem:[%s2708 + $0x34] sm:$0xf]
      %v2723 = vld [vmem:[%s2708 + $0x38] sm:$0xf]
      %v2724 = vld [vmem:[%s2708 + $0x3c] sm:$0xf]
      %v2725 = vunpack.c.l.b16 %v2305
      %v2726 = vunpack.c.l.b16 %v2315
      %v2727 = vunpack.c.l.b16 %v2329
      %v2728 = vunpack.c.l.b16 %v2339
      %v2729 = vunpack.c.l.b16 %v2353
      %v2730 = vunpack.c.l.b16 %v2363
      %v2731 = vunpack.c.l.b16 %v2377
      %v2732 = vunpack.c.l.b16 %v2387
      %v2733 = vunpack.c.l.b16 %v2401
      %v2734 = vunpack.c.l.b16 %v2411
      %v2735 = vunpack.c.l.b16 %v2425
      %v2736 = vunpack.c.l.b16 %v2435
      %v2737 = vunpack.c.l.b16 %v2449
      %v2738 = vunpack.c.l.b16 %v2459
      %v2739 = vunpack.c.l.b16 %v2473
      %v2740 = vunpack.c.l.b16 %v2483
      %v2741 = vunpack.c.l.b16 %v2497
      %v2742 = vunpack.c.l.b16 %v2507
      %v2743 = vunpack.c.l.b16 %v2521
      %v2744 = vunpack.c.l.b16 %v2531
      %v2745 = vunpack.c.l.b16 %v2545
      %v2746 = vunpack.c.l.b16 %v2555
      %v2747 = vunpack.c.l.b16 %v2569
      %v2748 = vunpack.c.l.b16 %v2579
      %v2749 = vunpack.c.l.b16 %v2593
      %v2750 = vunpack.c.l.b16 %v2603
      %v2751 = vunpack.c.l.b16 %v2617
      %v2752 = vunpack.c.l.b16 %v2627
      %v2753 = vunpack.c.l.b16 %v2641
      %v2754 = vunpack.c.l.b16 %v2651
      %v2755 = vunpack.c.l.b16 %v2665
      %v2756 = vunpack.c.l.b16 %v2675
      %v2757 = vpack.c.b16 %v2726, %v2725
      %v2758 = vpack.c.b16 %v2728, %v2727
      %v2759 = vpack.c.b16 %v2730, %v2729
      %v2760 = vpack.c.b16 %v2732, %v2731
      %v2761 = vpack.c.b16 %v2734, %v2733
      %v2762 = vpack.c.b16 %v2736, %v2735
      %v2763 = vpack.c.b16 %v2738, %v2737
      %v2764 = vpack.c.b16 %v2740, %v2739
      %v2765 = vpack.c.b16 %v2742, %v2741
      %v2766 = vpack.c.b16 %v2744, %v2743
      %v2767 = vpack.c.b16 %v2746, %v2745
      %v2768 = vpack.c.b16 %v2748, %v2747
      %v2769 = vpack.c.b16 %v2750, %v2749
      %v2770 = vpack.c.b16 %v2752, %v2751
      %v2771 = vpack.c.b16 %v2754, %v2753
      %v2772 = vpack.c.b16 %v2756, %v2755
      %v2805 = vunpack.c.l.b16 %v2709
      %v2806 = vunpack.c.l.b16 %v2710
      %v2807 = vunpack.c.l.b16 %v2711
      %v2808 = vunpack.c.l.b16 %v2712
      %v2809 = vunpack.c.l.b16 %v2713
      %v2810 = vunpack.c.l.b16 %v2714
      %v2811 = vunpack.c.l.b16 %v2715
      %v2812 = vunpack.c.l.b16 %v2716
      %v2813 = vunpack.c.l.b16 %v2717
      %v2814 = vunpack.c.l.b16 %v2718
      %v2815 = vunpack.c.l.b16 %v2719
      %v2816 = vunpack.c.l.b16 %v2720
      %v2817 = vunpack.c.l.b16 %v2721
      %v2818 = vunpack.c.l.b16 %v2722
      %v2819 = vunpack.c.l.b16 %v2723
      %v2820 = vunpack.c.l.b16 %v2724
      %v2821 = vpack.c.b16 %v2806, %v2805
      %v2822 = vpack.c.b16 %v2808, %v2807
      %v2823 = vpack.c.b16 %v2810, %v2809
      %v2824 = vpack.c.b16 %v2812, %v2811
      %v2825 = vpack.c.b16 %v2814, %v2813
      %v2826 = vpack.c.b16 %v2816, %v2815
      %v2827 = vpack.c.b16 %v2818, %v2817
      %v2828 = vpack.c.b16 %v2820, %v2819
      %2837 = vmatpush.bf16.msra.mxu0 %v2828
      %2838 = vmatpush.bf16.msra.mxu0 %v2827
      %2839 = vmatpush.bf16.msra.mxu0 %v2826
      %2840 = vmatpush.bf16.msra.mxu0 %v2825
      %2841 = vmatpush.bf16.msra.mxu0 %v2824
      %2842 = vmatpush.bf16.msra.mxu0 %v2823
      %2843 = vmatpush.bf16.msra.mxu0 %v2822
      %2844 = vmatpush.bf16.msra.mxu0 %v2821
      %2845 = vmatmul.bf16.gmra.mxu0 %v2757
      %v2846 = vpop.f32.mrf.mxu0
      %v2847 = vadd.f32 0.0, %v2846
      %v2848 = vpop.f32.mrf.mxu0
      %v2849 = vadd.f32 0.0, %v2848
      %2850 = vmatmul.bf16.gmra.mxu0 %v2758
      %v2851 = vpop.f32.mrf.mxu0
      %v2852 = vadd.f32 0.0, %v2851
      %v2853 = vpop.f32.mrf.mxu0
      %v2854 = vadd.f32 0.0, %v2853
      %2855 = vmatmul.bf16.gmra.mxu0 %v2759
      %v2856 = vpop.f32.mrf.mxu0
      %v2857 = vadd.f32 0.0, %v2856
      %v2858 = vpop.f32.mrf.mxu0
      %v2859 = vadd.f32 0.0, %v2858
      %2860 = vmatmul.bf16.gmra.mxu0 %v2760
      %v2861 = vpop.f32.mrf.mxu0
      %v2862 = vadd.f32 0.0, %v2861
      %v2863 = vpop.f32.mrf.mxu0
      %v2864 = vadd.f32 0.0, %v2863
      %2865 = vmatmul.bf16.gmra.mxu0 %v2761
      %v2866 = vpop.f32.mrf.mxu0
      %v2867 = vadd.f32 0.0, %v2866
      %v2868 = vpop.f32.mrf.mxu0
      %v2869 = vadd.f32 0.0, %v2868
      %2870 = vmatmul.bf16.gmra.mxu0 %v2762
      %v2871 = vpop.f32.mrf.mxu0
      %v2872 = vadd.f32 0.0, %v2871
      %v2873 = vpop.f32.mrf.mxu0
      %v2874 = vadd.f32 0.0, %v2873
      %2875 = vmatmul.bf16.gmra.mxu0 %v2763
      %v2876 = vpop.f32.mrf.mxu0
      %v2877 = vadd.f32 0.0, %v2876
      %v2878 = vpop.f32.mrf.mxu0
      %v2879 = vadd.f32 0.0, %v2878
      %2880 = vmatmul.bf16.gmra.mxu0 %v2764
      %v2881 = vpop.f32.mrf.mxu0
      %v2882 = vadd.f32 0.0, %v2881
      %v2883 = vpop.f32.mrf.mxu0
      %v2884 = vadd.f32 0.0, %v2883
      %2885 = vmatmul.bf16.gmra.mxu0 %v2765
      %v2886 = vpop.f32.mrf.mxu0
      %v2887 = vadd.f32 0.0, %v2886
      %v2888 = vpop.f32.mrf.mxu0
      %v2889 = vadd.f32 0.0, %v2888
      %2890 = vmatmul.bf16.gmra.mxu0 %v2766
      %v2891 = vpop.f32.mrf.mxu0
      %v2892 = vadd.f32 0.0, %v2891
      %v2893 = vpop.f32.mrf.mxu0
      %v2894 = vadd.f32 0.0, %v2893
      %2895 = vmatmul.bf16.gmra.mxu0 %v2767
      %v2896 = vpop.f32.mrf.mxu0
      %v2897 = vadd.f32 0.0, %v2896
      %v2898 = vpop.f32.mrf.mxu0
      %v2899 = vadd.f32 0.0, %v2898
      %2900 = vmatmul.bf16.gmra.mxu0 %v2768
      %v2901 = vpop.f32.mrf.mxu0
      %v2902 = vadd.f32 0.0, %v2901
      %v2903 = vpop.f32.mrf.mxu0
      %v2904 = vadd.f32 0.0, %v2903
      %2905 = vmatmul.bf16.gmra.mxu0 %v2769
      %v2906 = vpop.f32.mrf.mxu0
      %v2907 = vadd.f32 0.0, %v2906
      %v2908 = vpop.f32.mrf.mxu0
      %v2909 = vadd.f32 0.0, %v2908
      %2910 = vmatmul.bf16.gmra.mxu0 %v2770
      %v2911 = vpop.f32.mrf.mxu0
      %v2912 = vadd.f32 0.0, %v2911
      %v2913 = vpop.f32.mrf.mxu0
      %v2914 = vadd.f32 0.0, %v2913
      %2915 = vmatmul.bf16.gmra.mxu0 %v2771
      %v2916 = vpop.f32.mrf.mxu0
      %v2917 = vadd.f32 0.0, %v2916
      %v2918 = vpop.f32.mrf.mxu0
      %v2919 = vadd.f32 0.0, %v2918
      %2920 = vmatmul.bf16.gmra.mxu0 %v2772
      %v2921 = vpop.f32.mrf.mxu0
      %v2922 = vadd.f32 0.0, %v2921
      %v2923 = vpop.f32.mrf.mxu0
      %v2924 = vadd.f32 0.0, %v2923
      %2925 = vdwg.mxu0
      %v2926 = vadd.f32 %v2676, %v2847
      %v2927 = vadd.f32 %v2677, %v2849
      %v2928 = vadd.f32 %v2678, %v2852
      %v2929 = vadd.f32 %v2679, %v2854
      %v2930 = vadd.f32 %v2680, %v2857
      %v2931 = vadd.f32 %v2681, %v2859
      %v2932 = vadd.f32 %v2682, %v2862
      %v2933 = vadd.f32 %v2683, %v2864
      %v2934 = vadd.f32 %v2684, %v2867
      %v2935 = vadd.f32 %v2685, %v2869
      %v2936 = vadd.f32 %v2686, %v2872
      %v2937 = vadd.f32 %v2687, %v2874
      %v2938 = vadd.f32 %v2688, %v2877
      %v2939 = vadd.f32 %v2689, %v2879
      %v2940 = vadd.f32 %v2690, %v2882
      %v2941 = vadd.f32 %v2691, %v2884
      %v2942 = vadd.f32 %v2692, %v2887
      %v2943 = vadd.f32 %v2693, %v2889
      %v2944 = vadd.f32 %v2694, %v2892
      %v2945 = vadd.f32 %v2695, %v2894
      %v2946 = vadd.f32 %v2696, %v2897
      %v2947 = vadd.f32 %v2697, %v2899
      %v2948 = vadd.f32 %v2698, %v2902
      %v2949 = vadd.f32 %v2699, %v2904
      %v2950 = vadd.f32 %v2700, %v2907
      %v2951 = vadd.f32 %v2701, %v2909
      %v2952 = vadd.f32 %v2702, %v2912
      %v2953 = vadd.f32 %v2703, %v2914
      %v2954 = vadd.f32 %v2704, %v2917
      %v2955 = vadd.f32 %v2705, %v2919
      %v2956 = vadd.f32 %v2706, %v2922
      %v2957 = vadd.f32 %v2707, %v2924
      %2958 = vst [vmem:[%s177] sm:$0xff] %v2926
      %2959 = vst [vmem:[%s177 + $0x8] sm:$0xff] %v2927
      %2960 = vst [vmem:[%s177 + $0x10] sm:$0xff] %v2928
      %2961 = vst [vmem:[%s177 + $0x18] sm:$0xff] %v2929
      %2962 = vst [vmem:[%s177 + $0x20] sm:$0xff] %v2930
      %2963 = vst [vmem:[%s177 + $0x28] sm:$0xff] %v2931
      %2964 = vst [vmem:[%s177 + $0x30] sm:$0xff] %v2932
      %2965 = vst [vmem:[%s177 + $0x38] sm:$0xff] %v2933
      %2966 = vst [vmem:[%s177 + $0x40] sm:$0xff] %v2934
      %2967 = vst [vmem:[%s177 + $0x48] sm:$0xff] %v2935
      %2968 = vst [vmem:[%s177 + $0x50] sm:$0xff] %v2936
      %2969 = vst [vmem:[%s177 + $0x58] sm:$0xff] %v2937
      %2970 = vst [vmem:[%s177 + $0x60] sm:$0xff] %v2938
      %2971 = vst [vmem:[%s177 + $0x68] sm:$0xff] %v2939
      %2972 = vst [vmem:[%s177 + $0x70] sm:$0xff] %v2940
      %2973 = vst [vmem:[%s177 + $0x78] sm:$0xff] %v2941
      %2974 = vst [vmem:[%s177 + $0x80] sm:$0xff] %v2942
      %2975 = vst [vmem:[%s177 + $0x88] sm:$0xff] %v2943
      %2976 = vst [vmem:[%s177 + $0x90] sm:$0xff] %v2944
      %2977 = vst [vmem:[%s177 + $0x98] sm:$0xff] %v2945
      %2978 = vst [vmem:[%s177 + $0xa0] sm:$0xff] %v2946
      %2979 = vst [vmem:[%s177 + $0xa8] sm:$0xff] %v2947
      %2980 = vst [vmem:[%s177 + $0xb0] sm:$0xff] %v2948
      %2981 = vst [vmem:[%s177 + $0xb8] sm:$0xff] %v2949
      %2982 = vst [vmem:[%s177 + $0xc0] sm:$0xff] %v2950
      %2983 = vst [vmem:[%s177 + $0xc8] sm:$0xff] %v2951
      %2984 = vst [vmem:[%s177 + $0xd0] sm:$0xff] %v2952
      %2985 = vst [vmem:[%s177 + $0xd8] sm:$0xff] %v2953
      %2986 = vst [vmem:[%s177 + $0xe0] sm:$0xff] %v2954
      %2987 = vst [vmem:[%s177 + $0xe8] sm:$0xff] %v2955
      %2988 = vst [vmem:[%s177 + $0xf0] sm:$0xff] %v2956
      %2989 = vst [vmem:[%s177 + $0xf8] sm:$0xff] %v2957
      %v2990 = vld [vmem:[%s1865] sm:$0xe]
      %v2991 = vld [vmem:[%s1865 + $0x4] sm:$0xf]
      %v2992 = vld [vmem:[%s1865 + $0x8] sm:$0x1]
      %v2993 = vld [vmem:[%s1865 + $0xc] sm:$0xe]
      %v2994 = vld [vmem:[%s1865 + $0x10] sm:$0xf]
      %v2995 = vld [vmem:[%s1865 + $0x14] sm:$0x1]
      %v2996 = vld [vmem:[%s1865 + $0x18] sm:$0xe]
      %v2997 = vld [vmem:[%s1865 + $0x1c] sm:$0xf]
      %v2998 = vld [vmem:[%s1865 + $0x20] sm:$0x1]
      %v2999 = vld [vmem:[%s1865 + $0x24] sm:$0xe]
      %v3000 = vld [vmem:[%s1865 + $0x28] sm:$0xf]
      %v3001 = vld [vmem:[%s1865 + $0x2c] sm:$0x1]
      %v3002 = vld [vmem:[%s1865 + $0x30] sm:$0xe]
      %v3003 = vld [vmem:[%s1865 + $0x34] sm:$0xf]
      %v3004 = vld [vmem:[%s1865 + $0x38] sm:$0x1]
      %v3005 = vld [vmem:[%s1865 + $0x3c] sm:$0xe]
      %v3006 = vld [vmem:[%s1865 + $0x40] sm:$0xf]
      %v3007 = vld [vmem:[%s1865 + $0x44] sm:$0x1]
      %v3008 = vld [vmem:[%s1865 + $0x48] sm:$0xe]
      %v3009 = vld [vmem:[%s1865 + $0x4c] sm:$0xf]
      %v3010 = vld [vmem:[%s1865 + $0x50] sm:$0x1]
      %v3011 = vld [vmem:[%s1865 + $0x54] sm:$0xe]
      %v3012 = vld [vmem:[%s1865 + $0x58] sm:$0xf]
      %v3013 = vld [vmem:[%s1865 + $0x5c] sm:$0x1]
      %v3014 = vld [vmem:[%s1865 + $0x60] sm:$0xe]
      %v3015 = vld [vmem:[%s1865 + $0x64] sm:$0xf]
      %v3016 = vld [vmem:[%s1865 + $0x68] sm:$0x1]
      %v3017 = vld [vmem:[%s1865 + $0x6c] sm:$0xe]
      %v3018 = vld [vmem:[%s1865 + $0x70] sm:$0xf]
      %v3019 = vld [vmem:[%s1865 + $0x74] sm:$0x1]
      %v3020 = vld [vmem:[%s1865 + $0x78] sm:$0xe]
      %v3021 = vld [vmem:[%s1865 + $0x7c] sm:$0xf]
      %v3022 = vld [vmem:[%s1865 + $0x80] sm:$0x1]
      %v3023 = vld [vmem:[%s1865 + $0x84] sm:$0xe]
      %v3024 = vld [vmem:[%s1865 + $0x88] sm:$0xf]
      %v3025 = vld [vmem:[%s1865 + $0x8c] sm:$0x1]
      %v3026 = vld [vmem:[%s1865 + $0x90] sm:$0xe]
      %v3027 = vld [vmem:[%s1865 + $0x94] sm:$0xf]
      %v3028 = vld [vmem:[%s1865 + $0x98] sm:$0x1]
      %v3029 = vld [vmem:[%s1865 + $0x9c] sm:$0xe]
      %v3030 = vld [vmem:[%s1865 + $0xa0] sm:$0xf]
      %v3031 = vld [vmem:[%s1865 + $0xa4] sm:$0x1]
      %v3032 = vld [vmem:[%s1865 + $0xa8] sm:$0xe]
      %v3033 = vld [vmem:[%s1865 + $0xac] sm:$0xf]
      %v3034 = vld [vmem:[%s1865 + $0xb0] sm:$0x1]
      %v3035 = vld [vmem:[%s1865 + $0xb4] sm:$0xe]
      %v3036 = vld [vmem:[%s1865 + $0xb8] sm:$0xf]
      %v3037 = vld [vmem:[%s1865 + $0xbc] sm:$0x1]
      %v3086 = vrot.slane %v2990, 5
      %v3087 = vrot.slane %v3086, 4
      %v3088 = vrot.slane %v2991, 5
      %v3089 = vsel %vm1438, %v3087, %v3088
      %v3090 = vrot.slane %v3088, 4
      %v3091 = vrot.slane %v2992, 5
      %v3092 = vsel %vm1438, %v3090, %v3091
      %v3093 = vrot.slane %v2993, 5
      %v3094 = vrot.slane %v3093, 4
      %v3095 = vrot.slane %v2994, 5
      %v3096 = vsel %vm1438, %v3094, %v3095
      %v3097 = vrot.slane %v3095, 4
      %v3098 = vrot.slane %v2995, 5
      %v3099 = vsel %vm1438, %v3097, %v3098
      %v3100 = vrot.slane %v2996, 5
      %v3101 = vrot.slane %v3100, 4
      %v3102 = vrot.slane %v2997, 5
      %v3103 = vsel %vm1438, %v3101, %v3102
      %v3104 = vrot.slane %v3102, 4
      %v3105 = vrot.slane %v2998, 5
      %v3106 = vsel %vm1438, %v3104, %v3105
      %v3107 = vrot.slane %v2999, 5
      %v3108 = vrot.slane %v3107, 4
      %v3109 = vrot.slane %v3000, 5
      %v3110 = vsel %vm1438, %v3108, %v3109
      %v3111 = vrot.slane %v3109, 4
      %v3112 = vrot.slane %v3001, 5
      %v3113 = vsel %vm1438, %v3111, %v3112
      %v3114 = vrot.slane %v3002, 5
      %v3115 = vrot.slane %v3114, 4
      %v3116 = vrot.slane %v3003, 5
      %v3117 = vsel %vm1438, %v3115, %v3116
      %v3118 = vrot.slane %v3116, 4
      %v3119 = vrot.slane %v3004, 5
      %v3120 = vsel %vm1438, %v3118, %v3119
      %v3121 = vrot.slane %v3005, 5
      %v3122 = vrot.slane %v3121, 4
      %v3123 = vrot.slane %v3006, 5
      %v3124 = vsel %vm1438, %v3122, %v3123
      %v3125 = vrot.slane %v3123, 4
      %v3126 = vrot.slane %v3007, 5
      %v3127 = vsel %vm1438, %v3125, %v3126
      %v3128 = vrot.slane %v3008, 5
      %v3129 = vrot.slane %v3128, 4
      %v3130 = vrot.slane %v3009, 5
      %v3131 = vsel %vm1438, %v3129, %v3130
      %v3132 = vrot.slane %v3130, 4
      %v3133 = vrot.slane %v3010, 5
      %v3134 = vsel %vm1438, %v3132, %v3133
      %v3135 = vrot.slane %v3011, 5
      %v3136 = vrot.slane %v3135, 4
      %v3137 = vrot.slane %v3012, 5
      %v3138 = vsel %vm1438, %v3136, %v3137
      %v3139 = vrot.slane %v3137, 4
      %v3140 = vrot.slane %v3013, 5
      %v3141 = vsel %vm1438, %v3139, %v3140
      %v3142 = vrot.slane %v3014, 5
      %v3143 = vrot.slane %v3142, 4
      %v3144 = vrot.slane %v3015, 5
      %v3145 = vsel %vm1438, %v3143, %v3144
      %v3146 = vrot.slane %v3144, 4
      %v3147 = vrot.slane %v3016, 5
      %v3148 = vsel %vm1438, %v3146, %v3147
      %v3149 = vrot.slane %v3017, 5
      %v3150 = vrot.slane %v3149, 4
      %v3151 = vrot.slane %v3018, 5
      %v3152 = vsel %vm1438, %v3150, %v3151
      %v3153 = vrot.slane %v3151, 4
      %v3154 = vrot.slane %v3019, 5
      %v3155 = vsel %vm1438, %v3153, %v3154
      %v3156 = vrot.slane %v3020, 5
      %v3157 = vrot.slane %v3156, 4
      %v3158 = vrot.slane %v3021, 5
      %v3159 = vsel %vm1438, %v3157, %v3158
      %v3160 = vrot.slane %v3158, 4
      %v3161 = vrot.slane %v3022, 5
      %v3162 = vsel %vm1438, %v3160, %v3161
      %v3163 = vrot.slane %v3023, 5
      %v3164 = vrot.slane %v3163, 4
      %v3165 = vrot.slane %v3024, 5
      %v3166 = vsel %vm1438, %v3164, %v3165
      %v3167 = vrot.slane %v3165, 4
      %v3168 = vrot.slane %v3025, 5
      %v3169 = vsel %vm1438, %v3167, %v3168
      %v3170 = vrot.slane %v3026, 5
      %v3171 = vrot.slane %v3170, 4
      %v3172 = vrot.slane %v3027, 5
      %v3173 = vsel %vm1438, %v3171, %v3172
      %v3174 = vrot.slane %v3172, 4
      %v3175 = vrot.slane %v3028, 5
      %v3176 = vsel %vm1438, %v3174, %v3175
      %v3177 = vrot.slane %v3029, 5
      %v3178 = vrot.slane %v3177, 4
      %v3179 = vrot.slane %v3030, 5
      %v3180 = vsel %vm1438, %v3178, %v3179
      %v3181 = vrot.slane %v3179, 4
      %v3182 = vrot.slane %v3031, 5
      %v3183 = vsel %vm1438, %v3181, %v3182
      %v3184 = vrot.slane %v3032, 5
      %v3185 = vrot.slane %v3184, 4
      %v3186 = vrot.slane %v3033, 5
      %v3187 = vsel %vm1438, %v3185, %v3186
      %v3188 = vrot.slane %v3186, 4
      %v3189 = vrot.slane %v3034, 5
      %v3190 = vsel %vm1438, %v3188, %v3189
      %v3191 = vrot.slane %v3035, 5
      %v3192 = vrot.slane %v3191, 4
      %v3193 = vrot.slane %v3036, 5
      %v3194 = vsel %vm1438, %v3192, %v3193
      %v3195 = vrot.slane %v3193, 4
      %v3196 = vrot.slane %v3037, 5
      %v3197 = vsel %vm1438, %v3195, %v3196
      %v3198 = vld [vmem:[%s177] sm:$0xff]
      %v3199 = vld [vmem:[%s177 + $0x8] sm:$0xff]
      %v3200 = vld [vmem:[%s177 + $0x10] sm:$0xff]
      %v3201 = vld [vmem:[%s177 + $0x18] sm:$0xff]
      %v3202 = vld [vmem:[%s177 + $0x20] sm:$0xff]
      %v3203 = vld [vmem:[%s177 + $0x28] sm:$0xff]
      %v3204 = vld [vmem:[%s177 + $0x30] sm:$0xff]
      %v3205 = vld [vmem:[%s177 + $0x38] sm:$0xff]
      %v3206 = vld [vmem:[%s177 + $0x40] sm:$0xff]
      %v3207 = vld [vmem:[%s177 + $0x48] sm:$0xff]
      %v3208 = vld [vmem:[%s177 + $0x50] sm:$0xff]
      %v3209 = vld [vmem:[%s177 + $0x58] sm:$0xff]
      %v3210 = vld [vmem:[%s177 + $0x60] sm:$0xff]
      %v3211 = vld [vmem:[%s177 + $0x68] sm:$0xff]
      %v3212 = vld [vmem:[%s177 + $0x70] sm:$0xff]
      %v3213 = vld [vmem:[%s177 + $0x78] sm:$0xff]
      %v3214 = vld [vmem:[%s177 + $0x80] sm:$0xff]
      %v3215 = vld [vmem:[%s177 + $0x88] sm:$0xff]
      %v3216 = vld [vmem:[%s177 + $0x90] sm:$0xff]
      %v3217 = vld [vmem:[%s177 + $0x98] sm:$0xff]
      %v3218 = vld [vmem:[%s177 + $0xa0] sm:$0xff]
      %v3219 = vld [vmem:[%s177 + $0xa8] sm:$0xff]
      %v3220 = vld [vmem:[%s177 + $0xb0] sm:$0xff]
      %v3221 = vld [vmem:[%s177 + $0xb8] sm:$0xff]
      %v3222 = vld [vmem:[%s177 + $0xc0] sm:$0xff]
      %v3223 = vld [vmem:[%s177 + $0xc8] sm:$0xff]
      %v3224 = vld [vmem:[%s177 + $0xd0] sm:$0xff]
      %v3225 = vld [vmem:[%s177 + $0xd8] sm:$0xff]
      %v3226 = vld [vmem:[%s177 + $0xe0] sm:$0xff]
      %v3227 = vld [vmem:[%s177 + $0xe8] sm:$0xff]
      %v3228 = vld [vmem:[%s177 + $0xf0] sm:$0xff]
      %v3229 = vld [vmem:[%s177 + $0xf8] sm:$0xff]
      %s3230 = scalar_lea.vmem %s1, 320
      %v3231 = vld [vmem:[%s3230] sm:$0xf]
      %v3232 = vld [vmem:[%s3230 + $0x4] sm:$0xf]
      %v3233 = vld [vmem:[%s3230 + $0x8] sm:$0xf]
      %v3234 = vld [vmem:[%s3230 + $0xc] sm:$0xf]
      %v3235 = vld [vmem:[%s3230 + $0x10] sm:$0xf]
      %v3236 = vld [vmem:[%s3230 + $0x14] sm:$0xf]
      %v3237 = vld [vmem:[%s3230 + $0x18] sm:$0xf]
      %v3238 = vld [vmem:[%s3230 + $0x1c] sm:$0xf]
      %v3239 = vld [vmem:[%s3230 + $0x20] sm:$0xf]
      %v3240 = vld [vmem:[%s3230 + $0x24] sm:$0xf]
      %v3241 = vld [vmem:[%s3230 + $0x28] sm:$0xf]
      %v3242 = vld [vmem:[%s3230 + $0x2c] sm:$0xf]
      %v3243 = vld [vmem:[%s3230 + $0x30] sm:$0xf]
      %v3244 = vld [vmem:[%s3230 + $0x34] sm:$0xf]
      %v3245 = vld [vmem:[%s3230 + $0x38] sm:$0xf]
      %v3246 = vld [vmem:[%s3230 + $0x3c] sm:$0xf]
      %v3247 = vunpack.c.l.b16 %v3089
      %v3248 = vunpack.c.l.b16 %v3092
      %v3249 = vunpack.c.l.b16 %v3096
      %v3250 = vunpack.c.l.b16 %v3099
      %v3251 = vunpack.c.l.b16 %v3103
      %v3252 = vunpack.c.l.b16 %v3106
      %v3253 = vunpack.c.l.b16 %v3110
      %v3254 = vunpack.c.l.b16 %v3113
      %v3255 = vunpack.c.l.b16 %v3117
      %v3256 = vunpack.c.l.b16 %v3120
      %v3257 = vunpack.c.l.b16 %v3124
      %v3258 = vunpack.c.l.b16 %v3127
      %v3259 = vunpack.c.l.b16 %v3131
      %v3260 = vunpack.c.l.b16 %v3134
      %v3261 = vunpack.c.l.b16 %v3138
      %v3262 = vunpack.c.l.b16 %v3141
      %v3263 = vunpack.c.l.b16 %v3145
      %v3264 = vunpack.c.l.b16 %v3148
      %v3265 = vunpack.c.l.b16 %v3152
      %v3266 = vunpack.c.l.b16 %v3155
      %v3267 = vunpack.c.l.b16 %v3159
      %v3268 = vunpack.c.l.b16 %v3162
      %v3269 = vunpack.c.l.b16 %v3166
      %v3270 = vunpack.c.l.b16 %v3169
      %v3271 = vunpack.c.l.b16 %v3173
      %v3272 = vunpack.c.l.b16 %v3176
      %v3273 = vunpack.c.l.b16 %v3180
      %v3274 = vunpack.c.l.b16 %v3183
      %v3275 = vunpack.c.l.b16 %v3187
      %v3276 = vunpack.c.l.b16 %v3190
      %v3277 = vunpack.c.l.b16 %v3194
      %v3278 = vunpack.c.l.b16 %v3197
      %v3279 = vpack.c.b16 %v3248, %v3247
      %v3280 = vpack.c.b16 %v3250, %v3249
      %v3281 = vpack.c.b16 %v3252, %v3251
      %v3282 = vpack.c.b16 %v3254, %v3253
      %v3283 = vpack.c.b16 %v3256, %v3255
      %v3284 = vpack.c.b16 %v3258, %v3257
      %v3285 = vpack.c.b16 %v3260, %v3259
      %v3286 = vpack.c.b16 %v3262, %v3261
      %v3287 = vpack.c.b16 %v3264, %v3263
      %v3288 = vpack.c.b16 %v3266, %v3265
      %v3289 = vpack.c.b16 %v3268, %v3267
      %v3290 = vpack.c.b16 %v3270, %v3269
      %v3291 = vpack.c.b16 %v3272, %v3271
      %v3292 = vpack.c.b16 %v3274, %v3273
      %v3293 = vpack.c.b16 %v3276, %v3275
      %v3294 = vpack.c.b16 %v3278, %v3277
      %v3327 = vunpack.c.l.b16 %v3231
      %v3328 = vunpack.c.l.b16 %v3232
      %v3329 = vunpack.c.l.b16 %v3233
      %v3330 = vunpack.c.l.b16 %v3234
      %v3331 = vunpack.c.l.b16 %v3235
      %v3332 = vunpack.c.l.b16 %v3236
      %v3333 = vunpack.c.l.b16 %v3237
      %v3334 = vunpack.c.l.b16 %v3238
      %v3335 = vunpack.c.l.b16 %v3239
      %v3336 = vunpack.c.l.b16 %v3240
      %v3337 = vunpack.c.l.b16 %v3241
      %v3338 = vunpack.c.l.b16 %v3242
      %v3339 = vunpack.c.l.b16 %v3243
      %v3340 = vunpack.c.l.b16 %v3244
      %v3341 = vunpack.c.l.b16 %v3245
      %v3342 = vunpack.c.l.b16 %v3246
      %v3343 = vpack.c.b16 %v3328, %v3327
      %v3344 = vpack.c.b16 %v3330, %v3329
      %v3345 = vpack.c.b16 %v3332, %v3331
      %v3346 = vpack.c.b16 %v3334, %v3333
      %v3347 = vpack.c.b16 %v3336, %v3335
      %v3348 = vpack.c.b16 %v3338, %v3337
      %v3349 = vpack.c.b16 %v3340, %v3339
      %v3350 = vpack.c.b16 %v3342, %v3341
      %3359 = vmatpush.bf16.msra.mxu0 %v3350
      %3360 = vmatpush.bf16.msra.mxu0 %v3349
      %3361 = vmatpush.bf16.msra.mxu0 %v3348
      %3362 = vmatpush.bf16.msra.mxu0 %v3347
      %3363 = vmatpush.bf16.msra.mxu0 %v3346
      %3364 = vmatpush.bf16.msra.mxu0 %v3345
      %3365 = vmatpush.bf16.msra.mxu0 %v3344
      %3366 = vmatpush.bf16.msra.mxu0 %v3343
      %3367 = vmatmul.bf16.gmra.mxu0 %v3279
      %v3368 = vpop.f32.mrf.mxu0
      %v3369 = vadd.f32 0.0, %v3368
      %v3370 = vpop.f32.mrf.mxu0
      %v3371 = vadd.f32 0.0, %v3370
      %3372 = vmatmul.bf16.gmra.mxu0 %v3280
      %v3373 = vpop.f32.mrf.mxu0
      %v3374 = vadd.f32 0.0, %v3373
      %v3375 = vpop.f32.mrf.mxu0
      %v3376 = vadd.f32 0.0, %v3375
      %3377 = vmatmul.bf16.gmra.mxu0 %v3281
      %v3378 = vpop.f32.mrf.mxu0
      %v3379 = vadd.f32 0.0, %v3378
      %v3380 = vpop.f32.mrf.mxu0
      %v3381 = vadd.f32 0.0, %v3380
      %3382 = vmatmul.bf16.gmra.mxu0 %v3282
      %v3383 = vpop.f32.mrf.mxu0
      %v3384 = vadd.f32 0.0, %v3383
      %v3385 = vpop.f32.mrf.mxu0
      %v3386 = vadd.f32 0.0, %v3385
      %3387 = vmatmul.bf16.gmra.mxu0 %v3283
      %v3388 = vpop.f32.mrf.mxu0
      %v3389 = vadd.f32 0.0, %v3388
      %v3390 = vpop.f32.mrf.mxu0
      %v3391 = vadd.f32 0.0, %v3390
      %3392 = vmatmul.bf16.gmra.mxu0 %v3284
      %v3393 = vpop.f32.mrf.mxu0
      %v3394 = vadd.f32 0.0, %v3393
      %v3395 = vpop.f32.mrf.mxu0
      %v3396 = vadd.f32 0.0, %v3395
      %3397 = vmatmul.bf16.gmra.mxu0 %v3285
      %v3398 = vpop.f32.mrf.mxu0
      %v3399 = vadd.f32 0.0, %v3398
      %v3400 = vpop.f32.mrf.mxu0
      %v3401 = vadd.f32 0.0, %v3400
      %3402 = vmatmul.bf16.gmra.mxu0 %v3286
      %v3403 = vpop.f32.mrf.mxu0
      %v3404 = vadd.f32 0.0, %v3403
      %v3405 = vpop.f32.mrf.mxu0
      %v3406 = vadd.f32 0.0, %v3405
      %3407 = vmatmul.bf16.gmra.mxu0 %v3287
      %v3408 = vpop.f32.mrf.mxu0
      %v3409 = vadd.f32 0.0, %v3408
      %v3410 = vpop.f32.mrf.mxu0
      %v3411 = vadd.f32 0.0, %v3410
      %3412 = vmatmul.bf16.gmra.mxu0 %v3288
      %v3413 = vpop.f32.mrf.mxu0
      %v3414 = vadd.f32 0.0, %v3413
      %v3415 = vpop.f32.mrf.mxu0
      %v3416 = vadd.f32 0.0, %v3415
      %3417 = vmatmul.bf16.gmra.mxu0 %v3289
      %v3418 = vpop.f32.mrf.mxu0
      %v3419 = vadd.f32 0.0, %v3418
      %v3420 = vpop.f32.mrf.mxu0
      %v3421 = vadd.f32 0.0, %v3420
      %3422 = vmatmul.bf16.gmra.mxu0 %v3290
      %v3423 = vpop.f32.mrf.mxu0
      %v3424 = vadd.f32 0.0, %v3423
      %v3425 = vpop.f32.mrf.mxu0
      %v3426 = vadd.f32 0.0, %v3425
      %3427 = vmatmul.bf16.gmra.mxu0 %v3291
      %v3428 = vpop.f32.mrf.mxu0
      %v3429 = vadd.f32 0.0, %v3428
      %v3430 = vpop.f32.mrf.mxu0
      %v3431 = vadd.f32 0.0, %v3430
      %3432 = vmatmul.bf16.gmra.mxu0 %v3292
      %v3433 = vpop.f32.mrf.mxu0
      %v3434 = vadd.f32 0.0, %v3433
      %v3435 = vpop.f32.mrf.mxu0
      %v3436 = vadd.f32 0.0, %v3435
      %3437 = vmatmul.bf16.gmra.mxu0 %v3293
      %v3438 = vpop.f32.mrf.mxu0
      %v3439 = vadd.f32 0.0, %v3438
      %v3440 = vpop.f32.mrf.mxu0
      %v3441 = vadd.f32 0.0, %v3440
      %3442 = vmatmul.bf16.gmra.mxu0 %v3294
      %v3443 = vpop.f32.mrf.mxu0
      %v3444 = vadd.f32 0.0, %v3443
      %v3445 = vpop.f32.mrf.mxu0
      %v3446 = vadd.f32 0.0, %v3445
      %3447 = vdwg.mxu0
      %v3448 = vadd.f32 %v3198, %v3369
      %v3449 = vadd.f32 %v3199, %v3371
      %v3450 = vadd.f32 %v3200, %v3374
      %v3451 = vadd.f32 %v3201, %v3376
      %v3452 = vadd.f32 %v3202, %v3379
      %v3453 = vadd.f32 %v3203, %v3381
      %v3454 = vadd.f32 %v3204, %v3384
      %v3455 = vadd.f32 %v3205, %v3386
      %v3456 = vadd.f32 %v3206, %v3389
      %v3457 = vadd.f32 %v3207, %v3391
      %v3458 = vadd.f32 %v3208, %v3394
      %v3459 = vadd.f32 %v3209, %v3396
      %v3460 = vadd.f32 %v3210, %v3399
      %v3461 = vadd.f32 %v3211, %v3401
      %v3462 = vadd.f32 %v3212, %v3404
      %v3463 = vadd.f32 %v3213, %v3406
      %v3464 = vadd.f32 %v3214, %v3409
      %v3465 = vadd.f32 %v3215, %v3411
      %v3466 = vadd.f32 %v3216, %v3414
      %v3467 = vadd.f32 %v3217, %v3416
      %v3468 = vadd.f32 %v3218, %v3419
      %v3469 = vadd.f32 %v3219, %v3421
      %v3470 = vadd.f32 %v3220, %v3424
      %v3471 = vadd.f32 %v3221, %v3426
      %v3472 = vadd.f32 %v3222, %v3429
      %v3473 = vadd.f32 %v3223, %v3431
      %v3474 = vadd.f32 %v3224, %v3434
      %v3475 = vadd.f32 %v3225, %v3436
      %v3476 = vadd.f32 %v3226, %v3439
      %v3477 = vadd.f32 %v3227, %v3441
      %v3478 = vadd.f32 %v3228, %v3444
      %v3479 = vadd.f32 %v3229, %v3446
      %3480 = vst [vmem:[%s177] sm:$0xff] %v3448
      %3481 = vst [vmem:[%s177 + $0x8] sm:$0xff] %v3449
      %3482 = vst [vmem:[%s177 + $0x10] sm:$0xff] %v3450
      %3483 = vst [vmem:[%s177 + $0x18] sm:$0xff] %v3451
      %3484 = vst [vmem:[%s177 + $0x20] sm:$0xff] %v3452
      %3485 = vst [vmem:[%s177 + $0x28] sm:$0xff] %v3453
      %3486 = vst [vmem:[%s177 + $0x30] sm:$0xff] %v3454
      %3487 = vst [vmem:[%s177 + $0x38] sm:$0xff] %v3455
      %3488 = vst [vmem:[%s177 + $0x40] sm:$0xff] %v3456
      %3489 = vst [vmem:[%s177 + $0x48] sm:$0xff] %v3457
      %3490 = vst [vmem:[%s177 + $0x50] sm:$0xff] %v3458
      %3491 = vst [vmem:[%s177 + $0x58] sm:$0xff] %v3459
      %3492 = vst [vmem:[%s177 + $0x60] sm:$0xff] %v3460
      %3493 = vst [vmem:[%s177 + $0x68] sm:$0xff] %v3461
      %3494 = vst [vmem:[%s177 + $0x70] sm:$0xff] %v3462
      %3495 = vst [vmem:[%s177 + $0x78] sm:$0xff] %v3463
      %3496 = vst [vmem:[%s177 + $0x80] sm:$0xff] %v3464
      %3497 = vst [vmem:[%s177 + $0x88] sm:$0xff] %v3465
      %3498 = vst [vmem:[%s177 + $0x90] sm:$0xff] %v3466
      %3499 = vst [vmem:[%s177 + $0x98] sm:$0xff] %v3467
      %3500 = vst [vmem:[%s177 + $0xa0] sm:$0xff] %v3468
      %3501 = vst [vmem:[%s177 + $0xa8] sm:$0xff] %v3469
      %3502 = vst [vmem:[%s177 + $0xb0] sm:$0xff] %v3470
      %3503 = vst [vmem:[%s177 + $0xb8] sm:$0xff] %v3471
      %3504 = vst [vmem:[%s177 + $0xc0] sm:$0xff] %v3472
      %3505 = vst [vmem:[%s177 + $0xc8] sm:$0xff] %v3473
      %3506 = vst [vmem:[%s177 + $0xd0] sm:$0xff] %v3474
      %3507 = vst [vmem:[%s177 + $0xd8] sm:$0xff] %v3475
      %3508 = vst [vmem:[%s177 + $0xe0] sm:$0xff] %v3476
      %3509 = vst [vmem:[%s177 + $0xe8] sm:$0xff] %v3477
      %3510 = vst [vmem:[%s177 + $0xf0] sm:$0xff] %v3478
      %3511 = vst [vmem:[%s177 + $0xf8] sm:$0xff] %v3479
      %s3512 = scalar_lea.vmem %s172, 24
      %v3513 = vld [vmem:[%s3512] sm:$0xf]
      %v3514 = vld [vmem:[%s3512 + $0x4] sm:$0xf]
      %v3515 = vld [vmem:[%s3512 + $0xc] sm:$0xf]
      %v3516 = vld [vmem:[%s3512 + $0x10] sm:$0xf]
      %v3517 = vld [vmem:[%s3512 + $0x18] sm:$0xf]
      %v3518 = vld [vmem:[%s3512 + $0x1c] sm:$0xf]
      %v3519 = vld [vmem:[%s3512 + $0x24] sm:$0xf]
      %v3520 = vld [vmem:[%s3512 + $0x28] sm:$0xf]
      %v3521 = vld [vmem:[%s3512 + $0x30] sm:$0xf]
      %v3522 = vld [vmem:[%s3512 + $0x34] sm:$0xf]
      %v3523 = vld [vmem:[%s3512 + $0x3c] sm:$0xf]
      %v3524 = vld [vmem:[%s3512 + $0x40] sm:$0xf]
      %v3525 = vld [vmem:[%s3512 + $0x48] sm:$0xf]
      %v3526 = vld [vmem:[%s3512 + $0x4c] sm:$0xf]
      %v3527 = vld [vmem:[%s3512 + $0x54] sm:$0xf]
      %v3528 = vld [vmem:[%s3512 + $0x58] sm:$0xf]
      %v3529 = vld [vmem:[%s3512 + $0x60] sm:$0xf]
      %v3530 = vld [vmem:[%s3512 + $0x64] sm:$0xf]
      %v3531 = vld [vmem:[%s3512 + $0x6c] sm:$0xf]
      %v3532 = vld [vmem:[%s3512 + $0x70] sm:$0xf]
      %v3533 = vld [vmem:[%s3512 + $0x78] sm:$0xf]
      %v3534 = vld [vmem:[%s3512 + $0x7c] sm:$0xf]
      %v3535 = vld [vmem:[%s3512 + $0x84] sm:$0xf]
      %v3536 = vld [vmem:[%s3512 + $0x88] sm:$0xf]
      %v3537 = vld [vmem:[%s3512 + $0x90] sm:$0xf]
      %v3538 = vld [vmem:[%s3512 + $0x94] sm:$0xf]
      %v3539 = vld [vmem:[%s3512 + $0x9c] sm:$0xf]
      %v3540 = vld [vmem:[%s3512 + $0xa0] sm:$0xf]
      %v3541 = vld [vmem:[%s3512 + $0xa8] sm:$0xf]
      %v3542 = vld [vmem:[%s3512 + $0xac] sm:$0xf]
      %v3543 = vld [vmem:[%s3512 + $0xb4] sm:$0xf]
      %v3544 = vld [vmem:[%s3512 + $0xb8] sm:$0xf]
      %v3545 = vld [vmem:[%s177] sm:$0xff]
      %v3546 = vld [vmem:[%s177 + $0x8] sm:$0xff]
      %v3547 = vld [vmem:[%s177 + $0x10] sm:$0xff]
      %v3548 = vld [vmem:[%s177 + $0x18] sm:$0xff]
      %v3549 = vld [vmem:[%s177 + $0x20] sm:$0xff]
      %v3550 = vld [vmem:[%s177 + $0x28] sm:$0xff]
      %v3551 = vld [vmem:[%s177 + $0x30] sm:$0xff]
      %v3552 = vld [vmem:[%s177 + $0x38] sm:$0xff]
      %v3553 = vld [vmem:[%s177 + $0x40] sm:$0xff]
      %v3554 = vld [vmem:[%s177 + $0x48] sm:$0xff]
      %v3555 = vld [vmem:[%s177 + $0x50] sm:$0xff]
      %v3556 = vld [vmem:[%s177 + $0x58] sm:$0xff]
      %v3557 = vld [vmem:[%s177 + $0x60] sm:$0xff]
      %v3558 = vld [vmem:[%s177 + $0x68] sm:$0xff]
      %v3559 = vld [vmem:[%s177 + $0x70] sm:$0xff]
      %v3560 = vld [vmem:[%s177 + $0x78] sm:$0xff]
      %v3561 = vld [vmem:[%s177 + $0x80] sm:$0xff]
      %v3562 = vld [vmem:[%s177 + $0x88] sm:$0xff]
      %v3563 = vld [vmem:[%s177 + $0x90] sm:$0xff]
      %v3564 = vld [vmem:[%s177 + $0x98] sm:$0xff]
      %v3565 = vld [vmem:[%s177 + $0xa0] sm:$0xff]
      %v3566 = vld [vmem:[%s177 + $0xa8] sm:$0xff]
      %v3567 = vld [vmem:[%s177 + $0xb0] sm:$0xff]
      %v3568 = vld [vmem:[%s177 + $0xb8] sm:$0xff]
      %v3569 = vld [vmem:[%s177 + $0xc0] sm:$0xff]
      %v3570 = vld [vmem:[%s177 + $0xc8] sm:$0xff]
      %v3571 = vld [vmem:[%s177 + $0xd0] sm:$0xff]
      %v3572 = vld [vmem:[%s177 + $0xd8] sm:$0xff]
      %v3573 = vld [vmem:[%s177 + $0xe0] sm:$0xff]
      %v3574 = vld [vmem:[%s177 + $0xe8] sm:$0xff]
      %v3575 = vld [vmem:[%s177 + $0xf0] sm:$0xff]
      %v3576 = vld [vmem:[%s177 + $0xf8] sm:$0xff]
      %s3577 = scalar_lea.vmem %s1, 384
      %v3578 = vld [vmem:[%s3577] sm:$0xf]
      %v3579 = vld [vmem:[%s3577 + $0x4] sm:$0xf]
      %v3580 = vld [vmem:[%s3577 + $0x8] sm:$0xf]
      %v3581 = vld [vmem:[%s3577 + $0xc] sm:$0xf]
      %v3582 = vld [vmem:[%s3577 + $0x10] sm:$0xf]
      %v3583 = vld [vmem:[%s3577 + $0x14] sm:$0xf]
      %v3584 = vld [vmem:[%s3577 + $0x18] sm:$0xf]
      %v3585 = vld [vmem:[%s3577 + $0x1c] sm:$0xf]
      %v3586 = vld [vmem:[%s3577 + $0x20] sm:$0xf]
      %v3587 = vld [vmem:[%s3577 + $0x24] sm:$0xf]
      %v3588 = vld [vmem:[%s3577 + $0x28] sm:$0xf]
      %v3589 = vld [vmem:[%s3577 + $0x2c] sm:$0xf]
      %v3590 = vld [vmem:[%s3577 + $0x30] sm:$0xf]
      %v3591 = vld [vmem:[%s3577 + $0x34] sm:$0xf]
      %v3592 = vld [vmem:[%s3577 + $0x38] sm:$0xf]
      %v3593 = vld [vmem:[%s3577 + $0x3c] sm:$0xf]
      %v3626 = vunpack.c.l.b16 %v3513
      %v3627 = vunpack.c.l.b16 %v3514
      %v3628 = vunpack.c.l.b16 %v3515
      %v3629 = vunpack.c.l.b16 %v3516
      %v3630 = vunpack.c.l.b16 %v3517
      %v3631 = vunpack.c.l.b16 %v3518
      %v3632 = vunpack.c.l.b16 %v3519
      %v3633 = vunpack.c.l.b16 %v3520
      %v3634 = vunpack.c.l.b16 %v3521
      %v3635 = vunpack.c.l.b16 %v3522
      %v3636 = vunpack.c.l.b16 %v3523
      %v3637 = vunpack.c.l.b16 %v3524
      %v3638 = vunpack.c.l.b16 %v3525
      %v3639 = vunpack.c.l.b16 %v3526
      %v3640 = vunpack.c.l.b16 %v3527
      %v3641 = vunpack.c.l.b16 %v3528
      %v3642 = vunpack.c.l.b16 %v3529
      %v3643 = vunpack.c.l.b16 %v3530
      %v3644 = vunpack.c.l.b16 %v3531
      %v3645 = vunpack.c.l.b16 %v3532
      %v3646 = vunpack.c.l.b16 %v3533
      %v3647 = vunpack.c.l.b16 %v3534
      %v3648 = vunpack.c.l.b16 %v3535
      %v3649 = vunpack.c.l.b16 %v3536
      %v3650 = vunpack.c.l.b16 %v3537
      %v3651 = vunpack.c.l.b16 %v3538
      %v3652 = vunpack.c.l.b16 %v3539
      %v3653 = vunpack.c.l.b16 %v3540
      %v3654 = vunpack.c.l.b16 %v3541
      %v3655 = vunpack.c.l.b16 %v3542
      %v3656 = vunpack.c.l.b16 %v3543
      %v3657 = vunpack.c.l.b16 %v3544
      %v3658 = vpack.c.b16 %v3627, %v3626
      %v3659 = vpack.c.b16 %v3629, %v3628
      %v3660 = vpack.c.b16 %v3631, %v3630
      %v3661 = vpack.c.b16 %v3633, %v3632
      %v3662 = vpack.c.b16 %v3635, %v3634
      %v3663 = vpack.c.b16 %v3637, %v3636
      %v3664 = vpack.c.b16 %v3639, %v3638
      %v3665 = vpack.c.b16 %v3641, %v3640
      %v3666 = vpack.c.b16 %v3643, %v3642
      %v3667 = vpack.c.b16 %v3645, %v3644
      %v3668 = vpack.c.b16 %v3647, %v3646
      %v3669 = vpack.c.b16 %v3649, %v3648
      %v3670 = vpack.c.b16 %v3651, %v3650
      %v3671 = vpack.c.b16 %v3653, %v3652
      %v3672 = vpack.c.b16 %v3655, %v3654
      %v3673 = vpack.c.b16 %v3657, %v3656
      %v3706 = vunpack.c.l.b16 %v3578
      %v3707 = vunpack.c.l.b16 %v3579
      %v3708 = vunpack.c.l.b16 %v3580
      %v3709 = vunpack.c.l.b16 %v3581
      %v3710 = vunpack.c.l.b16 %v3582
      %v3711 = vunpack.c.l.b16 %v3583
      %v3712 = vunpack.c.l.b16 %v3584
      %v3713 = vunpack.c.l.b16 %v3585
      %v3714 = vunpack.c.l.b16 %v3586
      %v3715 = vunpack.c.l.b16 %v3587
      %v3716 = vunpack.c.l.b16 %v3588
      %v3717 = vunpack.c.l.b16 %v3589
      %v3718 = vunpack.c.l.b16 %v3590
      %v3719 = vunpack.c.l.b16 %v3591
      %v3720 = vunpack.c.l.b16 %v3592
      %v3721 = vunpack.c.l.b16 %v3593
      %v3722 = vpack.c.b16 %v3707, %v3706
      %v3723 = vpack.c.b16 %v3709, %v3708
      %v3724 = vpack.c.b16 %v3711, %v3710
      %v3725 = vpack.c.b16 %v3713, %v3712
      %v3726 = vpack.c.b16 %v3715, %v3714
      %v3727 = vpack.c.b16 %v3717, %v3716
      %v3728 = vpack.c.b16 %v3719, %v3718
      %v3729 = vpack.c.b16 %v3721, %v3720
      %3738 = vmatpush.bf16.msra.mxu0 %v3729
      %3739 = vmatpush.bf16.msra.mxu0 %v3728
      %3740 = vmatpush.bf16.msra.mxu0 %v3727
      %3741 = vmatpush.bf16.msra.mxu0 %v3726
      %3742 = vmatpush.bf16.msra.mxu0 %v3725
      %3743 = vmatpush.bf16.msra.mxu0 %v3724
      %3744 = vmatpush.bf16.msra.mxu0 %v3723
      %3745 = vmatpush.bf16.msra.mxu0 %v3722
      %3746 = vmatmul.bf16.gmra.mxu0 %v3658
      %v3747 = vpop.f32.mrf.mxu0
      %v3748 = vadd.f32 0.0, %v3747
      %v3749 = vpop.f32.mrf.mxu0
      %v3750 = vadd.f32 0.0, %v3749
      %3751 = vmatmul.bf16.gmra.mxu0 %v3659
      %v3752 = vpop.f32.mrf.mxu0
      %v3753 = vadd.f32 0.0, %v3752
      %v3754 = vpop.f32.mrf.mxu0
      %v3755 = vadd.f32 0.0, %v3754
      %3756 = vmatmul.bf16.gmra.mxu0 %v3660
      %v3757 = vpop.f32.mrf.mxu0
      %v3758 = vadd.f32 0.0, %v3757
      %v3759 = vpop.f32.mrf.mxu0
      %v3760 = vadd.f32 0.0, %v3759
      %3761 = vmatmul.bf16.gmra.mxu0 %v3661
      %v3762 = vpop.f32.mrf.mxu0
      %v3763 = vadd.f32 0.0, %v3762
      %v3764 = vpop.f32.mrf.mxu0
      %v3765 = vadd.f32 0.0, %v3764
      %3766 = vmatmul.bf16.gmra.mxu0 %v3662
      %v3767 = vpop.f32.mrf.mxu0
      %v3768 = vadd.f32 0.0, %v3767
      %v3769 = vpop.f32.mrf.mxu0
      %v3770 = vadd.f32 0.0, %v3769
      %3771 = vmatmul.bf16.gmra.mxu0 %v3663
      %v3772 = vpop.f32.mrf.mxu0
      %v3773 = vadd.f32 0.0, %v3772
      %v3774 = vpop.f32.mrf.mxu0
      %v3775 = vadd.f32 0.0, %v3774
      %3776 = vmatmul.bf16.gmra.mxu0 %v3664
      %v3777 = vpop.f32.mrf.mxu0
      %v3778 = vadd.f32 0.0, %v3777
      %v3779 = vpop.f32.mrf.mxu0
      %v3780 = vadd.f32 0.0, %v3779
      %3781 = vmatmul.bf16.gmra.mxu0 %v3665
      %v3782 = vpop.f32.mrf.mxu0
      %v3783 = vadd.f32 0.0, %v3782
      %v3784 = vpop.f32.mrf.mxu0
      %v3785 = vadd.f32 0.0, %v3784
      %3786 = vmatmul.bf16.gmra.mxu0 %v3666
      %v3787 = vpop.f32.mrf.mxu0
      %v3788 = vadd.f32 0.0, %v3787
      %v3789 = vpop.f32.mrf.mxu0
      %v3790 = vadd.f32 0.0, %v3789
      %3791 = vmatmul.bf16.gmra.mxu0 %v3667
      %v3792 = vpop.f32.mrf.mxu0
      %v3793 = vadd.f32 0.0, %v3792
      %v3794 = vpop.f32.mrf.mxu0
      %v3795 = vadd.f32 0.0, %v3794
      %3796 = vmatmul.bf16.gmra.mxu0 %v3668
      %v3797 = vpop.f32.mrf.mxu0
      %v3798 = vadd.f32 0.0, %v3797
      %v3799 = vpop.f32.mrf.mxu0
      %v3800 = vadd.f32 0.0, %v3799
      %3801 = vmatmul.bf16.gmra.mxu0 %v3669
      %v3802 = vpop.f32.mrf.mxu0
      %v3803 = vadd.f32 0.0, %v3802
      %v3804 = vpop.f32.mrf.mxu0
      %v3805 = vadd.f32 0.0, %v3804
      %3806 = vmatmul.bf16.gmra.mxu0 %v3670
      %v3807 = vpop.f32.mrf.mxu0
      %v3808 = vadd.f32 0.0, %v3807
      %v3809 = vpop.f32.mrf.mxu0
      %v3810 = vadd.f32 0.0, %v3809
      %3811 = vmatmul.bf16.gmra.mxu0 %v3671
      %v3812 = vpop.f32.mrf.mxu0
      %v3813 = vadd.f32 0.0, %v3812
      %v3814 = vpop.f32.mrf.mxu0
      %v3815 = vadd.f32 0.0, %v3814
      %3816 = vmatmul.bf16.gmra.mxu0 %v3672
      %v3817 = vpop.f32.mrf.mxu0
      %v3818 = vadd.f32 0.0, %v3817
      %v3819 = vpop.f32.mrf.mxu0
      %v3820 = vadd.f32 0.0, %v3819
      %3821 = vmatmul.bf16.gmra.mxu0 %v3673
      %v3822 = vpop.f32.mrf.mxu0
      %v3823 = vadd.f32 0.0, %v3822
      %v3824 = vpop.f32.mrf.mxu0
      %v3825 = vadd.f32 0.0, %v3824
      %3826 = vdwg.mxu0
      %v3827 = vadd.f32 %v3545, %v3748
      %v3828 = vadd.f32 %v3546, %v3750
      %v3829 = vadd.f32 %v3547, %v3753
      %v3830 = vadd.f32 %v3548, %v3755
      %v3831 = vadd.f32 %v3549, %v3758
      %v3832 = vadd.f32 %v3550, %v3760
      %v3833 = vadd.f32 %v3551, %v3763
      %v3834 = vadd.f32 %v3552, %v3765
      %v3835 = vadd.f32 %v3553, %v3768
      %v3836 = vadd.f32 %v3554, %v3770
      %v3837 = vadd.f32 %v3555, %v3773
      %v3838 = vadd.f32 %v3556, %v3775
      %v3839 = vadd.f32 %v3557, %v3778
      %v3840 = vadd.f32 %v3558, %v3780
      %v3841 = vadd.f32 %v3559, %v3783
      %v3842 = vadd.f32 %v3560, %v3785
      %v3843 = vadd.f32 %v3561, %v3788
      %v3844 = vadd.f32 %v3562, %v3790
      %v3845 = vadd.f32 %v3563, %v3793
      %v3846 = vadd.f32 %v3564, %v3795
      %v3847 = vadd.f32 %v3565, %v3798
      %v3848 = vadd.f32 %v3566, %v3800
      %v3849 = vadd.f32 %v3567, %v3803
      %v3850 = vadd.f32 %v3568, %v3805
      %v3851 = vadd.f32 %v3569, %v3808
      %v3852 = vadd.f32 %v3570, %v3810
      %v3853 = vadd.f32 %v3571, %v3813
      %v3854 = vadd.f32 %v3572, %v3815
      %v3855 = vadd.f32 %v3573, %v3818
      %v3856 = vadd.f32 %v3574, %v3820
      %v3857 = vadd.f32 %v3575, %v3823
      %v3858 = vadd.f32 %v3576, %v3825
      %3859 = vst [vmem:[%s177] sm:$0xff] %v3827
      %3860 = vst [vmem:[%s177 + $0x8] sm:$0xff] %v3828
      %3861 = vst [vmem:[%s177 + $0x10] sm:$0xff] %v3829
      %3862 = vst [vmem:[%s177 + $0x18] sm:$0xff] %v3830
      %3863 = vst [vmem:[%s177 + $0x20] sm:$0xff] %v3831
      %3864 = vst [vmem:[%s177 + $0x28] sm:$0xff] %v3832
      %3865 = vst [vmem:[%s177 + $0x30] sm:$0xff] %v3833
      %3866 = vst [vmem:[%s177 + $0x38] sm:$0xff] %v3834
      %3867 = vst [vmem:[%s177 + $0x40] sm:$0xff] %v3835
      %3868 = vst [vmem:[%s177 + $0x48] sm:$0xff] %v3836
      %3869 = vst [vmem:[%s177 + $0x50] sm:$0xff] %v3837
      %3870 = vst [vmem:[%s177 + $0x58] sm:$0xff] %v3838
      %3871 = vst [vmem:[%s177 + $0x60] sm:$0xff] %v3839
      %3872 = vst [vmem:[%s177 + $0x68] sm:$0xff] %v3840
      %3873 = vst [vmem:[%s177 + $0x70] sm:$0xff] %v3841
      %3874 = vst [vmem:[%s177 + $0x78] sm:$0xff] %v3842
      %3875 = vst [vmem:[%s177 + $0x80] sm:$0xff] %v3843
      %3876 = vst [vmem:[%s177 + $0x88] sm:$0xff] %v3844
      %3877 = vst [vmem:[%s177 + $0x90] sm:$0xff] %v3845
      %3878 = vst [vmem:[%s177 + $0x98] sm:$0xff] %v3846
      %3879 = vst [vmem:[%s177 + $0xa0] sm:$0xff] %v3847
      %3880 = vst [vmem:[%s177 + $0xa8] sm:$0xff] %v3848
      %3881 = vst [vmem:[%s177 + $0xb0] sm:$0xff] %v3849
      %3882 = vst [vmem:[%s177 + $0xb8] sm:$0xff] %v3850
      %3883 = vst [vmem:[%s177 + $0xc0] sm:$0xff] %v3851
      %3884 = vst [vmem:[%s177 + $0xc8] sm:$0xff] %v3852
      %3885 = vst [vmem:[%s177 + $0xd0] sm:$0xff] %v3853
      %3886 = vst [vmem:[%s177 + $0xd8] sm:$0xff] %v3854
      %3887 = vst [vmem:[%s177 + $0xe0] sm:$0xff] %v3855
      %3888 = vst [vmem:[%s177 + $0xe8] sm:$0xff] %v3856
      %3889 = vst [vmem:[%s177 + $0xf0] sm:$0xff] %v3857
      %3890 = vst [vmem:[%s177 + $0xf8] sm:$0xff] %v3858
      %v3891 = vld [vmem:[%s3512] sm:$0xf]
      %v3892 = vld [vmem:[%s3512 + $0x4] sm:$0xf]
      %v3893 = vld [vmem:[%s3512 + $0x8] sm:$0x1]
      %v3894 = vld [vmem:[%s3512 + $0xc] sm:$0xf]
      %v3895 = vld [vmem:[%s3512 + $0x10] sm:$0xf]
      %v3896 = vld [vmem:[%s3512 + $0x14] sm:$0x1]
      %v3897 = vld [vmem:[%s3512 + $0x18] sm:$0xf]
      %v3898 = vld [vmem:[%s3512 + $0x1c] sm:$0xf]
      %v3899 = vld [vmem:[%s3512 + $0x20] sm:$0x1]
      %v3900 = vld [vmem:[%s3512 + $0x24] sm:$0xf]
      %v3901 = vld [vmem:[%s3512 + $0x28] sm:$0xf]
      %v3902 = vld [vmem:[%s3512 + $0x2c] sm:$0x1]
      %v3903 = vld [vmem:[%s3512 + $0x30] sm:$0xf]
      %v3904 = vld [vmem:[%s3512 + $0x34] sm:$0xf]
      %v3905 = vld [vmem:[%s3512 + $0x38] sm:$0x1]
      %v3906 = vld [vmem:[%s3512 + $0x3c] sm:$0xf]
      %v3907 = vld [vmem:[%s3512 + $0x40] sm:$0xf]
      %v3908 = vld [vmem:[%s3512 + $0x44] sm:$0x1]
      %v3909 = vld [vmem:[%s3512 + $0x48] sm:$0xf]
      %v3910 = vld [vmem:[%s3512 + $0x4c] sm:$0xf]
      %v3911 = vld [vmem:[%s3512 + $0x50] sm:$0x1]
      %v3912 = vld [vmem:[%s3512 + $0x54] sm:$0xf]
      %v3913 = vld [vmem:[%s3512 + $0x58] sm:$0xf]
      %v3914 = vld [vmem:[%s3512 + $0x5c] sm:$0x1]
      %v3915 = vld [vmem:[%s3512 + $0x60] sm:$0xf]
      %v3916 = vld [vmem:[%s3512 + $0x64] sm:$0xf]
      %v3917 = vld [vmem:[%s3512 + $0x68] sm:$0x1]
      %v3918 = vld [vmem:[%s3512 + $0x6c] sm:$0xf]
      %v3919 = vld [vmem:[%s3512 + $0x70] sm:$0xf]
      %v3920 = vld [vmem:[%s3512 + $0x74] sm:$0x1]
      %v3921 = vld [vmem:[%s3512 + $0x78] sm:$0xf]
      %v3922 = vld [vmem:[%s3512 + $0x7c] sm:$0xf]
      %v3923 = vld [vmem:[%s3512 + $0x80] sm:$0x1]
      %v3924 = vld [vmem:[%s3512 + $0x84] sm:$0xf]
      %v3925 = vld [vmem:[%s3512 + $0x88] sm:$0xf]
      %v3926 = vld [vmem:[%s3512 + $0x8c] sm:$0x1]
      %v3927 = vld [vmem:[%s3512 + $0x90] sm:$0xf]
      %v3928 = vld [vmem:[%s3512 + $0x94] sm:$0xf]
      %v3929 = vld [vmem:[%s3512 + $0x98] sm:$0x1]
      %v3930 = vld [vmem:[%s3512 + $0x9c] sm:$0xf]
      %v3931 = vld [vmem:[%s3512 + $0xa0] sm:$0xf]
      %v3932 = vld [vmem:[%s3512 + $0xa4] sm:$0x1]
      %v3933 = vld [vmem:[%s3512 + $0xa8] sm:$0xf]
      %v3934 = vld [vmem:[%s3512 + $0xac] sm:$0xf]
      %v3935 = vld [vmem:[%s3512 + $0xb0] sm:$0x1]
      %v3936 = vld [vmem:[%s3512 + $0xb4] sm:$0xf]
      %v3937 = vld [vmem:[%s3512 + $0xb8] sm:$0xf]
      %v3938 = vld [vmem:[%s3512 + $0xbc] sm:$0x1]
      %v3940 = vshrl.u32 %v3891, 16
      %v3942 = vrot.slane %v3940, 4
      %v3943 = vshll.u32 %v3891, 16
      %v3945 = vrot.slane %v3943, 5
      %v3946 = vor.u32 %v3942, %v3945
      %v3947 = vrot.slane %v3946, 4
      %v3949 = vshll.u32 %v3892, 16
      %v3951 = vrot.slane %v3949, 5
      %v3952 = vsel %vm641, %v3947, %v3951
      %v3953 = vshrl.u32 %v3892, 16
      %v3955 = vrot.slane %v3953, 4
      %v3956 = vor.u32 %v3955, %v3951
      %v3957 = vrot.slane %v3956, 4
      %v3959 = vshll.u32 %v3893, 16
      %v3961 = vrot.slane %v3959, 5
      %v3962 = vsel %vm641, %v3957, %v3961
      %v3964 = vshrl.u32 %v3894, 16
      %v3966 = vrot.slane %v3964, 4
      %v3967 = vshll.u32 %v3894, 16
      %v3969 = vrot.slane %v3967, 5
      %v3970 = vor.u32 %v3966, %v3969
      %v3971 = vrot.slane %v3970, 4
      %v3973 = vshll.u32 %v3895, 16
      %v3975 = vrot.slane %v3973, 5
      %v3976 = vsel %vm641, %v3971, %v3975
      %v3977 = vshrl.u32 %v3895, 16
      %v3979 = vrot.slane %v3977, 4
      %v3980 = vor.u32 %v3979, %v3975
      %v3981 = vrot.slane %v3980, 4
      %v3983 = vshll.u32 %v3896, 16
      %v3985 = vrot.slane %v3983, 5
      %v3986 = vsel %vm641, %v3981, %v3985
      %v3988 = vshrl.u32 %v3897, 16
      %v3990 = vrot.slane %v3988, 4
      %v3991 = vshll.u32 %v3897, 16
      %v3993 = vrot.slane %v3991, 5
      %v3994 = vor.u32 %v3990, %v3993
      %v3995 = vrot.slane %v3994, 4
      %v3997 = vshll.u32 %v3898, 16
      %v3999 = vrot.slane %v3997, 5
      %v4000 = vsel %vm641, %v3995, %v3999
      %v4001 = vshrl.u32 %v3898, 16
      %v4003 = vrot.slane %v4001, 4
      %v4004 = vor.u32 %v4003, %v3999
      %v4005 = vrot.slane %v4004, 4
      %v4007 = vshll.u32 %v3899, 16
      %v4009 = vrot.slane %v4007, 5
      %v4010 = vsel %vm641, %v4005, %v4009
      %v4012 = vshrl.u32 %v3900, 16
      %v4014 = vrot.slane %v4012, 4
      %v4015 = vshll.u32 %v3900, 16
      %v4017 = vrot.slane %v4015, 5
      %v4018 = vor.u32 %v4014, %v4017
      %v4019 = vrot.slane %v4018, 4
      %v4021 = vshll.u32 %v3901, 16
      %v4023 = vrot.slane %v4021, 5
      %v4024 = vsel %vm641, %v4019, %v4023
      %v4025 = vshrl.u32 %v3901, 16
      %v4027 = vrot.slane %v4025, 4
      %v4028 = vor.u32 %v4027, %v4023
      %v4029 = vrot.slane %v4028, 4
      %v4031 = vshll.u32 %v3902, 16
      %v4033 = vrot.slane %v4031, 5
      %v4034 = vsel %vm641, %v4029, %v4033
      %v4036 = vshrl.u32 %v3903, 16
      %v4038 = vrot.slane %v4036, 4
      %v4039 = vshll.u32 %v3903, 16
      %v4041 = vrot.slane %v4039, 5
      %v4042 = vor.u32 %v4038, %v4041
      %v4043 = vrot.slane %v4042, 4
      %v4045 = vshll.u32 %v3904, 16
      %v4047 = vrot.slane %v4045, 5
      %v4048 = vsel %vm641, %v4043, %v4047
      %v4049 = vshrl.u32 %v3904, 16
      %v4051 = vrot.slane %v4049, 4
      %v4052 = vor.u32 %v4051, %v4047
      %v4053 = vrot.slane %v4052, 4
      %v4055 = vshll.u32 %v3905, 16
      %v4057 = vrot.slane %v4055, 5
      %v4058 = vsel %vm641, %v4053, %v4057
      %v4060 = vshrl.u32 %v3906, 16
      %v4062 = vrot.slane %v4060, 4
      %v4063 = vshll.u32 %v3906, 16
      %v4065 = vrot.slane %v4063, 5
      %v4066 = vor.u32 %v4062, %v4065
      %v4067 = vrot.slane %v4066, 4
      %v4069 = vshll.u32 %v3907, 16
      %v4071 = vrot.slane %v4069, 5
      %v4072 = vsel %vm641, %v4067, %v4071
      %v4073 = vshrl.u32 %v3907, 16
      %v4075 = vrot.slane %v4073, 4
      %v4076 = vor.u32 %v4075, %v4071
      %v4077 = vrot.slane %v4076, 4
      %v4079 = vshll.u32 %v3908, 16
      %v4081 = vrot.slane %v4079, 5
      %v4082 = vsel %vm641, %v4077, %v4081
      %v4084 = vshrl.u32 %v3909, 16
      %v4086 = vrot.slane %v4084, 4
      %v4087 = vshll.u32 %v3909, 16
      %v4089 = vrot.slane %v4087, 5
      %v4090 = vor.u32 %v4086, %v4089
      %v4091 = vrot.slane %v4090, 4
      %v4093 = vshll.u32 %v3910, 16
      %v4095 = vrot.slane %v4093, 5
      %v4096 = vsel %vm641, %v4091, %v4095
      %v4097 = vshrl.u32 %v3910, 16
      %v4099 = vrot.slane %v4097, 4
      %v4100 = vor.u32 %v4099, %v4095
      %v4101 = vrot.slane %v4100, 4
      %v4103 = vshll.u32 %v3911, 16
      %v4105 = vrot.slane %v4103, 5
      %v4106 = vsel %vm641, %v4101, %v4105
      %v4108 = vshrl.u32 %v3912, 16
      %v4110 = vrot.slane %v4108, 4
      %v4111 = vshll.u32 %v3912, 16
      %v4113 = vrot.slane %v4111, 5
      %v4114 = vor.u32 %v4110, %v4113
      %v4115 = vrot.slane %v4114, 4
      %v4117 = vshll.u32 %v3913, 16
      %v4119 = vrot.slane %v4117, 5
      %v4120 = vsel %vm641, %v4115, %v4119
      %v4121 = vshrl.u32 %v3913, 16
      %v4123 = vrot.slane %v4121, 4
      %v4124 = vor.u32 %v4123, %v4119
      %v4125 = vrot.slane %v4124, 4
      %v4127 = vshll.u32 %v3914, 16
      %v4129 = vrot.slane %v4127, 5
      %v4130 = vsel %vm641, %v4125, %v4129
      %v4132 = vshrl.u32 %v3915, 16
      %v4134 = vrot.slane %v4132, 4
      %v4135 = vshll.u32 %v3915, 16
      %v4137 = vrot.slane %v4135, 5
      %v4138 = vor.u32 %v4134, %v4137
      %v4139 = vrot.slane %v4138, 4
      %v4141 = vshll.u32 %v3916, 16
      %v4143 = vrot.slane %v4141, 5
      %v4144 = vsel %vm641, %v4139, %v4143
      %v4145 = vshrl.u32 %v3916, 16
      %v4147 = vrot.slane %v4145, 4
      %v4148 = vor.u32 %v4147, %v4143
      %v4149 = vrot.slane %v4148, 4
      %v4151 = vshll.u32 %v3917, 16
      %v4153 = vrot.slane %v4151, 5
      %v4154 = vsel %vm641, %v4149, %v4153
      %v4156 = vshrl.u32 %v3918, 16
      %v4158 = vrot.slane %v4156, 4
      %v4159 = vshll.u32 %v3918, 16
      %v4161 = vrot.slane %v4159, 5
      %v4162 = vor.u32 %v4158, %v4161
      %v4163 = vrot.slane %v4162, 4
      %v4165 = vshll.u32 %v3919, 16
      %v4167 = vrot.slane %v4165, 5
      %v4168 = vsel %vm641, %v4163, %v4167
      %v4169 = vshrl.u32 %v3919, 16
      %v4171 = vrot.slane %v4169, 4
      %v4172 = vor.u32 %v4171, %v4167
      %v4173 = vrot.slane %v4172, 4
      %v4175 = vshll.u32 %v3920, 16
      %v4177 = vrot.slane %v4175, 5
      %v4178 = vsel %vm641, %v4173, %v4177
      %v4180 = vshrl.u32 %v3921, 16
      %v4182 = vrot.slane %v4180, 4
      %v4183 = vshll.u32 %v3921, 16
      %v4185 = vrot.slane %v4183, 5
      %v4186 = vor.u32 %v4182, %v4185
      %v4187 = vrot.slane %v4186, 4
      %v4189 = vshll.u32 %v3922, 16
      %v4191 = vrot.slane %v4189, 5
      %v4192 = vsel %vm641, %v4187, %v4191
      %v4193 = vshrl.u32 %v3922, 16
      %v4195 = vrot.slane %v4193, 4
      %v4196 = vor.u32 %v4195, %v4191
      %v4197 = vrot.slane %v4196, 4
      %v4199 = vshll.u32 %v3923, 16
      %v4201 = vrot.slane %v4199, 5
      %v4202 = vsel %vm641, %v4197, %v4201
      %v4204 = vshrl.u32 %v3924, 16
      %v4206 = vrot.slane %v4204, 4
      %v4207 = vshll.u32 %v3924, 16
      %v4209 = vrot.slane %v4207, 5
      %v4210 = vor.u32 %v4206, %v4209
      %v4211 = vrot.slane %v4210, 4
      %v4213 = vshll.u32 %v3925, 16
      %v4215 = vrot.slane %v4213, 5
      %v4216 = vsel %vm641, %v4211, %v4215
      %v4217 = vshrl.u32 %v3925, 16
      %v4219 = vrot.slane %v4217, 4
      %v4220 = vor.u32 %v4219, %v4215
      %v4221 = vrot.slane %v4220, 4
      %v4223 = vshll.u32 %v3926, 16
      %v4225 = vrot.slane %v4223, 5
      %v4226 = vsel %vm641, %v4221, %v4225
      %v4228 = vshrl.u32 %v3927, 16
      %v4230 = vrot.slane %v4228, 4
      %v4231 = vshll.u32 %v3927, 16
      %v4233 = vrot.slane %v4231, 5
      %v4234 = vor.u32 %v4230, %v4233
      %v4235 = vrot.slane %v4234, 4
      %v4237 = vshll.u32 %v3928, 16
      %v4239 = vrot.slane %v4237, 5
      %v4240 = vsel %vm641, %v4235, %v4239
      %v4241 = vshrl.u32 %v3928, 16
      %v4243 = vrot.slane %v4241, 4
      %v4244 = vor.u32 %v4243, %v4239
      %v4245 = vrot.slane %v4244, 4
      %v4247 = vshll.u32 %v3929, 16
      %v4249 = vrot.slane %v4247, 5
      %v4250 = vsel %vm641, %v4245, %v4249
      %v4252 = vshrl.u32 %v3930, 16
      %v4254 = vrot.slane %v4252, 4
      %v4255 = vshll.u32 %v3930, 16
      %v4257 = vrot.slane %v4255, 5
      %v4258 = vor.u32 %v4254, %v4257
      %v4259 = vrot.slane %v4258, 4
      %v4261 = vshll.u32 %v3931, 16
      %v4263 = vrot.slane %v4261, 5
      %v4264 = vsel %vm641, %v4259, %v4263
      %v4265 = vshrl.u32 %v3931, 16
      %v4267 = vrot.slane %v4265, 4
      %v4268 = vor.u32 %v4267, %v4263
      %v4269 = vrot.slane %v4268, 4
      %v4271 = vshll.u32 %v3932, 16
      %v4273 = vrot.slane %v4271, 5
      %v4274 = vsel %vm641, %v4269, %v4273
      %v4276 = vshrl.u32 %v3933, 16
      %v4278 = vrot.slane %v4276, 4
      %v4279 = vshll.u32 %v3933, 16
      %v4281 = vrot.slane %v4279, 5
      %v4282 = vor.u32 %v4278, %v4281
      %v4283 = vrot.slane %v4282, 4
      %v4285 = vshll.u32 %v3934, 16
      %v4287 = vrot.slane %v4285, 5
      %v4288 = vsel %vm641, %v4283, %v4287
      %v4289 = vshrl.u32 %v3934, 16
      %v4291 = vrot.slane %v4289, 4
      %v4292 = vor.u32 %v4291, %v4287
      %v4293 = vrot.slane %v4292, 4
      %v4295 = vshll.u32 %v3935, 16
      %v4297 = vrot.slane %v4295, 5
      %v4298 = vsel %vm641, %v4293, %v4297
      %v4300 = vshrl.u32 %v3936, 16
      %v4302 = vrot.slane %v4300, 4
      %v4303 = vshll.u32 %v3936, 16
      %v4305 = vrot.slane %v4303, 5
      %v4306 = vor.u32 %v4302, %v4305
      %v4307 = vrot.slane %v4306, 4
      %v4309 = vshll.u32 %v3937, 16
      %v4311 = vrot.slane %v4309, 5
      %v4312 = vsel %vm641, %v4307, %v4311
      %v4313 = vshrl.u32 %v3937, 16
      %v4315 = vrot.slane %v4313, 4
      %v4316 = vor.u32 %v4315, %v4311
      %v4317 = vrot.slane %v4316, 4
      %v4319 = vshll.u32 %v3938, 16
      %v4321 = vrot.slane %v4319, 5
      %v4322 = vsel %vm641, %v4317, %v4321
      %v4323 = vld [vmem:[%s177] sm:$0xff]
      %v4324 = vld [vmem:[%s177 + $0x8] sm:$0xff]
      %v4325 = vld [vmem:[%s177 + $0x10] sm:$0xff]
      %v4326 = vld [vmem:[%s177 + $0x18] sm:$0xff]
      %v4327 = vld [vmem:[%s177 + $0x20] sm:$0xff]
      %v4328 = vld [vmem:[%s177 + $0x28] sm:$0xff]
      %v4329 = vld [vmem:[%s177 + $0x30] sm:$0xff]
      %v4330 = vld [vmem:[%s177 + $0x38] sm:$0xff]
      %v4331 = vld [vmem:[%s177 + $0x40] sm:$0xff]
      %v4332 = vld [vmem:[%s177 + $0x48] sm:$0xff]
      %v4333 = vld [vmem:[%s177 + $0x50] sm:$0xff]
      %v4334 = vld [vmem:[%s177 + $0x58] sm:$0xff]
      %v4335 = vld [vmem:[%s177 + $0x60] sm:$0xff]
      %v4336 = vld [vmem:[%s177 + $0x68] sm:$0xff]
      %v4337 = vld [vmem:[%s177 + $0x70] sm:$0xff]
      %v4338 = vld [vmem:[%s177 + $0x78] sm:$0xff]
      %v4339 = vld [vmem:[%s177 + $0x80] sm:$0xff]
      %v4340 = vld [vmem:[%s177 + $0x88] sm:$0xff]
      %v4341 = vld [vmem:[%s177 + $0x90] sm:$0xff]
      %v4342 = vld [vmem:[%s177 + $0x98] sm:$0xff]
      %v4343 = vld [vmem:[%s177 + $0xa0] sm:$0xff]
      %v4344 = vld [vmem:[%s177 + $0xa8] sm:$0xff]
      %v4345 = vld [vmem:[%s177 + $0xb0] sm:$0xff]
      %v4346 = vld [vmem:[%s177 + $0xb8] sm:$0xff]
      %v4347 = vld [vmem:[%s177 + $0xc0] sm:$0xff]
      %v4348 = vld [vmem:[%s177 + $0xc8] sm:$0xff]
      %v4349 = vld [vmem:[%s177 + $0xd0] sm:$0xff]
      %v4350 = vld [vmem:[%s177 + $0xd8] sm:$0xff]
      %v4351 = vld [vmem:[%s177 + $0xe0] sm:$0xff]
      %v4352 = vld [vmem:[%s177 + $0xe8] sm:$0xff]
      %v4353 = vld [vmem:[%s177 + $0xf0] sm:$0xff]
      %v4354 = vld [vmem:[%s177 + $0xf8] sm:$0xff]
      %s4355 = scalar_lea.vmem %s1, 448
      %v4356 = vld [vmem:[%s4355] sm:$0xf]
      %v4357 = vld [vmem:[%s4355 + $0x4] sm:$0xf]
      %v4358 = vld [vmem:[%s4355 + $0x8] sm:$0xf]
      %v4359 = vld [vmem:[%s4355 + $0xc] sm:$0xf]
      %v4360 = vld [vmem:[%s4355 + $0x10] sm:$0xf]
      %v4361 = vld [vmem:[%s4355 + $0x14] sm:$0xf]
      %v4362 = vld [vmem:[%s4355 + $0x18] sm:$0xf]
      %v4363 = vld [vmem:[%s4355 + $0x1c] sm:$0xf]
      %v4364 = vld [vmem:[%s4355 + $0x20] sm:$0xf]
      %v4365 = vld [vmem:[%s4355 + $0x24] sm:$0xf]
      %v4366 = vld [vmem:[%s4355 + $0x28] sm:$0xf]
      %v4367 = vld [vmem:[%s4355 + $0x2c] sm:$0xf]
      %v4368 = vld [vmem:[%s4355 + $0x30] sm:$0xf]
      %v4369 = vld [vmem:[%s4355 + $0x34] sm:$0xf]
      %v4370 = vld [vmem:[%s4355 + $0x38] sm:$0xf]
      %v4371 = vld [vmem:[%s4355 + $0x3c] sm:$0xf]
      %v4372 = vunpack.c.l.b16 %v3952
      %v4373 = vunpack.c.l.b16 %v3962
      %v4374 = vunpack.c.l.b16 %v3976
      %v4375 = vunpack.c.l.b16 %v3986
      %v4376 = vunpack.c.l.b16 %v4000
      %v4377 = vunpack.c.l.b16 %v4010
      %v4378 = vunpack.c.l.b16 %v4024
      %v4379 = vunpack.c.l.b16 %v4034
      %v4380 = vunpack.c.l.b16 %v4048
      %v4381 = vunpack.c.l.b16 %v4058
      %v4382 = vunpack.c.l.b16 %v4072
      %v4383 = vunpack.c.l.b16 %v4082
      %v4384 = vunpack.c.l.b16 %v4096
      %v4385 = vunpack.c.l.b16 %v4106
      %v4386 = vunpack.c.l.b16 %v4120
      %v4387 = vunpack.c.l.b16 %v4130
      %v4388 = vunpack.c.l.b16 %v4144
      %v4389 = vunpack.c.l.b16 %v4154
      %v4390 = vunpack.c.l.b16 %v4168
      %v4391 = vunpack.c.l.b16 %v4178
      %v4392 = vunpack.c.l.b16 %v4192
      %v4393 = vunpack.c.l.b16 %v4202
      %v4394 = vunpack.c.l.b16 %v4216
      %v4395 = vunpack.c.l.b16 %v4226
      %v4396 = vunpack.c.l.b16 %v4240
      %v4397 = vunpack.c.l.b16 %v4250
      %v4398 = vunpack.c.l.b16 %v4264
      %v4399 = vunpack.c.l.b16 %v4274
      %v4400 = vunpack.c.l.b16 %v4288
      %v4401 = vunpack.c.l.b16 %v4298
      %v4402 = vunpack.c.l.b16 %v4312
      %v4403 = vunpack.c.l.b16 %v4322
      %v4404 = vpack.c.b16 %v4373, %v4372
      %v4405 = vpack.c.b16 %v4375, %v4374
      %v4406 = vpack.c.b16 %v4377, %v4376
      %v4407 = vpack.c.b16 %v4379, %v4378
      %v4408 = vpack.c.b16 %v4381, %v4380
      %v4409 = vpack.c.b16 %v4383, %v4382
      %v4410 = vpack.c.b16 %v4385, %v4384
      %v4411 = vpack.c.b16 %v4387, %v4386
      %v4412 = vpack.c.b16 %v4389, %v4388
      %v4413 = vpack.c.b16 %v4391, %v4390
      %v4414 = vpack.c.b16 %v4393, %v4392
      %v4415 = vpack.c.b16 %v4395, %v4394
      %v4416 = vpack.c.b16 %v4397, %v4396
      %v4417 = vpack.c.b16 %v4399, %v4398
      %v4418 = vpack.c.b16 %v4401, %v4400
      %v4419 = vpack.c.b16 %v4403, %v4402
      %v4452 = vunpack.c.l.b16 %v4356
      %v4453 = vunpack.c.l.b16 %v4357
      %v4454 = vunpack.c.l.b16 %v4358
      %v4455 = vunpack.c.l.b16 %v4359
      %v4456 = vunpack.c.l.b16 %v4360
      %v4457 = vunpack.c.l.b16 %v4361
      %v4458 = vunpack.c.l.b16 %v4362
      %v4459 = vunpack.c.l.b16 %v4363
      %v4460 = vunpack.c.l.b16 %v4364
      %v4461 = vunpack.c.l.b16 %v4365
      %v4462 = vunpack.c.l.b16 %v4366
      %v4463 = vunpack.c.l.b16 %v4367
      %v4464 = vunpack.c.l.b16 %v4368
      %v4465 = vunpack.c.l.b16 %v4369
      %v4466 = vunpack.c.l.b16 %v4370
      %v4467 = vunpack.c.l.b16 %v4371
      %v4468 = vpack.c.b16 %v4453, %v4452
      %v4469 = vpack.c.b16 %v4455, %v4454
      %v4470 = vpack.c.b16 %v4457, %v4456
      %v4471 = vpack.c.b16 %v4459, %v4458
      %v4472 = vpack.c.b16 %v4461, %v4460
      %v4473 = vpack.c.b16 %v4463, %v4462
      %v4474 = vpack.c.b16 %v4465, %v4464
      %v4475 = vpack.c.b16 %v4467, %v4466
      %4484 = vmatpush.bf16.msra.mxu0 %v4475
      %4485 = vmatpush.bf16.msra.mxu0 %v4474
      %4486 = vmatpush.bf16.msra.mxu0 %v4473
      %4487 = vmatpush.bf16.msra.mxu0 %v4472
      %4488 = vmatpush.bf16.msra.mxu0 %v4471
      %4489 = vmatpush.bf16.msra.mxu0 %v4470
      %4490 = vmatpush.bf16.msra.mxu0 %v4469
      %4491 = vmatpush.bf16.msra.mxu0 %v4468
      %4492 = vmatmul.bf16.gmra.mxu0 %v4404
      %v4493 = vpop.f32.mrf.mxu0
      %v4494 = vadd.f32 0.0, %v4493
      %v4495 = vpop.f32.mrf.mxu0
      %v4496 = vadd.f32 0.0, %v4495
      %4497 = vmatmul.bf16.gmra.mxu0 %v4405
      %v4498 = vpop.f32.mrf.mxu0
      %v4499 = vadd.f32 0.0, %v4498
      %v4500 = vpop.f32.mrf.mxu0
      %v4501 = vadd.f32 0.0, %v4500
      %4502 = vmatmul.bf16.gmra.mxu0 %v4406
      %v4503 = vpop.f32.mrf.mxu0
      %v4504 = vadd.f32 0.0, %v4503
      %v4505 = vpop.f32.mrf.mxu0
      %v4506 = vadd.f32 0.0, %v4505
      %4507 = vmatmul.bf16.gmra.mxu0 %v4407
      %v4508 = vpop.f32.mrf.mxu0
      %v4509 = vadd.f32 0.0, %v4508
      %v4510 = vpop.f32.mrf.mxu0
      %v4511 = vadd.f32 0.0, %v4510
      %4512 = vmatmul.bf16.gmra.mxu0 %v4408
      %v4513 = vpop.f32.mrf.mxu0
      %v4514 = vadd.f32 0.0, %v4513
      %v4515 = vpop.f32.mrf.mxu0
      %v4516 = vadd.f32 0.0, %v4515
      %4517 = vmatmul.bf16.gmra.mxu0 %v4409
      %v4518 = vpop.f32.mrf.mxu0
      %v4519 = vadd.f32 0.0, %v4518
      %v4520 = vpop.f32.mrf.mxu0
      %v4521 = vadd.f32 0.0, %v4520
      %4522 = vmatmul.bf16.gmra.mxu0 %v4410
      %v4523 = vpop.f32.mrf.mxu0
      %v4524 = vadd.f32 0.0, %v4523
      %v4525 = vpop.f32.mrf.mxu0
      %v4526 = vadd.f32 0.0, %v4525
      %4527 = vmatmul.bf16.gmra.mxu0 %v4411
      %v4528 = vpop.f32.mrf.mxu0
      %v4529 = vadd.f32 0.0, %v4528
      %v4530 = vpop.f32.mrf.mxu0
      %v4531 = vadd.f32 0.0, %v4530
      %4532 = vmatmul.bf16.gmra.mxu0 %v4412
      %v4533 = vpop.f32.mrf.mxu0
      %v4534 = vadd.f32 0.0, %v4533
      %v4535 = vpop.f32.mrf.mxu0
      %v4536 = vadd.f32 0.0, %v4535
      %4537 = vmatmul.bf16.gmra.mxu0 %v4413
      %v4538 = vpop.f32.mrf.mxu0
      %v4539 = vadd.f32 0.0, %v4538
      %v4540 = vpop.f32.mrf.mxu0
      %v4541 = vadd.f32 0.0, %v4540
      %4542 = vmatmul.bf16.gmra.mxu0 %v4414
      %v4543 = vpop.f32.mrf.mxu0
      %v4544 = vadd.f32 0.0, %v4543
      %v4545 = vpop.f32.mrf.mxu0
      %v4546 = vadd.f32 0.0, %v4545
      %4547 = vmatmul.bf16.gmra.mxu0 %v4415
      %v4548 = vpop.f32.mrf.mxu0
      %v4549 = vadd.f32 0.0, %v4548
      %v4550 = vpop.f32.mrf.mxu0
      %v4551 = vadd.f32 0.0, %v4550
      %4552 = vmatmul.bf16.gmra.mxu0 %v4416
      %v4553 = vpop.f32.mrf.mxu0
      %v4554 = vadd.f32 0.0, %v4553
      %v4555 = vpop.f32.mrf.mxu0
      %v4556 = vadd.f32 0.0, %v4555
      %4557 = vmatmul.bf16.gmra.mxu0 %v4417
      %v4558 = vpop.f32.mrf.mxu0
      %v4559 = vadd.f32 0.0, %v4558
      %v4560 = vpop.f32.mrf.mxu0
      %v4561 = vadd.f32 0.0, %v4560
      %4562 = vmatmul.bf16.gmra.mxu0 %v4418
      %v4563 = vpop.f32.mrf.mxu0
      %v4564 = vadd.f32 0.0, %v4563
      %v4565 = vpop.f32.mrf.mxu0
      %v4566 = vadd.f32 0.0, %v4565
      %4567 = vmatmul.bf16.gmra.mxu0 %v4419
      %v4568 = vpop.f32.mrf.mxu0
      %v4569 = vadd.f32 0.0, %v4568
      %v4570 = vpop.f32.mrf.mxu0
      %v4571 = vadd.f32 0.0, %v4570
      %4572 = vdwg.mxu0
      %v4573 = vadd.f32 %v4323, %v4494
      %v4574 = vadd.f32 %v4324, %v4496
      %v4575 = vadd.f32 %v4325, %v4499
      %v4576 = vadd.f32 %v4326, %v4501
      %v4577 = vadd.f32 %v4327, %v4504
      %v4578 = vadd.f32 %v4328, %v4506
      %v4579 = vadd.f32 %v4329, %v4509
      %v4580 = vadd.f32 %v4330, %v4511
      %v4581 = vadd.f32 %v4331, %v4514
      %v4582 = vadd.f32 %v4332, %v4516
      %v4583 = vadd.f32 %v4333, %v4519
      %v4584 = vadd.f32 %v4334, %v4521
      %v4585 = vadd.f32 %v4335, %v4524
      %v4586 = vadd.f32 %v4336, %v4526
      %v4587 = vadd.f32 %v4337, %v4529
      %v4588 = vadd.f32 %v4338, %v4531
      %v4589 = vadd.f32 %v4339, %v4534
      %v4590 = vadd.f32 %v4340, %v4536
      %v4591 = vadd.f32 %v4341, %v4539
      %v4592 = vadd.f32 %v4342, %v4541
      %v4593 = vadd.f32 %v4343, %v4544
      %v4594 = vadd.f32 %v4344, %v4546
      %v4595 = vadd.f32 %v4345, %v4549
      %v4596 = vadd.f32 %v4346, %v4551
      %v4597 = vadd.f32 %v4347, %v4554
      %v4598 = vadd.f32 %v4348, %v4556
      %v4599 = vadd.f32 %v4349, %v4559
      %v4600 = vadd.f32 %v4350, %v4561
      %v4601 = vadd.f32 %v4351, %v4564
      %v4602 = vadd.f32 %v4352, %v4566
      %v4603 = vadd.f32 %v4353, %v4569
      %v4604 = vadd.f32 %v4354, %v4571
      %4605 = vst [vmem:[%s177] sm:$0xff] %v4573
      %4606 = vst [vmem:[%s177 + $0x8] sm:$0xff] %v4574
      %4607 = vst [vmem:[%s177 + $0x10] sm:$0xff] %v4575
      %4608 = vst [vmem:[%s177 + $0x18] sm:$0xff] %v4576
      %4609 = vst [vmem:[%s177 + $0x20] sm:$0xff] %v4577
      %4610 = vst [vmem:[%s177 + $0x28] sm:$0xff] %v4578
      %4611 = vst [vmem:[%s177 + $0x30] sm:$0xff] %v4579
      %4612 = vst [vmem:[%s177 + $0x38] sm:$0xff] %v4580
      %4613 = vst [vmem:[%s177 + $0x40] sm:$0xff] %v4581
      %4614 = vst [vmem:[%s177 + $0x48] sm:$0xff] %v4582
      %4615 = vst [vmem:[%s177 + $0x50] sm:$0xff] %v4583
      %4616 = vst [vmem:[%s177 + $0x58] sm:$0xff] %v4584
      %4617 = vst [vmem:[%s177 + $0x60] sm:$0xff] %v4585
      %4618 = vst [vmem:[%s177 + $0x68] sm:$0xff] %v4586
      %4619 = vst [vmem:[%s177 + $0x70] sm:$0xff] %v4587
      %4620 = vst [vmem:[%s177 + $0x78] sm:$0xff] %v4588
      %4621 = vst [vmem:[%s177 + $0x80] sm:$0xff] %v4589
      %4622 = vst [vmem:[%s177 + $0x88] sm:$0xff] %v4590
      %4623 = vst [vmem:[%s177 + $0x90] sm:$0xff] %v4591
      %4624 = vst [vmem:[%s177 + $0x98] sm:$0xff] %v4592
      %4625 = vst [vmem:[%s177 + $0xa0] sm:$0xff] %v4593
      %4626 = vst [vmem:[%s177 + $0xa8] sm:$0xff] %v4594
      %4627 = vst [vmem:[%s177 + $0xb0] sm:$0xff] %v4595
      %4628 = vst [vmem:[%s177 + $0xb8] sm:$0xff] %v4596
      %4629 = vst [vmem:[%s177 + $0xc0] sm:$0xff] %v4597
      %4630 = vst [vmem:[%s177 + $0xc8] sm:$0xff] %v4598
      %4631 = vst [vmem:[%s177 + $0xd0] sm:$0xff] %v4599
      %4632 = vst [vmem:[%s177 + $0xd8] sm:$0xff] %v4600
      %4633 = vst [vmem:[%s177 + $0xe0] sm:$0xff] %v4601
      %4634 = vst [vmem:[%s177 + $0xe8] sm:$0xff] %v4602
      %4635 = vst [vmem:[%s177 + $0xf0] sm:$0xff] %v4603
      %4636 = vst [vmem:[%s177 + $0xf8] sm:$0xff] %v4604
      %v4637 = vld [vmem:[%s3512] sm:$0xe]
      %v4638 = vld [vmem:[%s3512 + $0x4] sm:$0xf]
      %v4639 = vld [vmem:[%s3512 + $0x8] sm:$0x1]
      %v4640 = vld [vmem:[%s3512 + $0xc] sm:$0xe]
      %v4641 = vld [vmem:[%s3512 + $0x10] sm:$0xf]
      %v4642 = vld [vmem:[%s3512 + $0x14] sm:$0x1]
      %v4643 = vld [vmem:[%s3512 + $0x18] sm:$0xe]
      %v4644 = vld [vmem:[%s3512 + $0x1c] sm:$0xf]
      %v4645 = vld [vmem:[%s3512 + $0x20] sm:$0x1]
      %v4646 = vld [vmem:[%s3512 + $0x24] sm:$0xe]
      %v4647 = vld [vmem:[%s3512 + $0x28] sm:$0xf]
      %v4648 = vld [vmem:[%s3512 + $0x2c] sm:$0x1]
      %v4649 = vld [vmem:[%s3512 + $0x30] sm:$0xe]
      %v4650 = vld [vmem:[%s3512 + $0x34] sm:$0xf]
      %v4651 = vld [vmem:[%s3512 + $0x38] sm:$0x1]
      %v4652 = vld [vmem:[%s3512 + $0x3c] sm:$0xe]
      %v4653 = vld [vmem:[%s3512 + $0x40] sm:$0xf]
      %v4654 = vld [vmem:[%s3512 + $0x44] sm:$0x1]
      %v4655 = vld [vmem:[%s3512 + $0x48] sm:$0xe]
      %v4656 = vld [vmem:[%s3512 + $0x4c] sm:$0xf]
      %v4657 = vld [vmem:[%s3512 + $0x50] sm:$0x1]
      %v4658 = vld [vmem:[%s3512 + $0x54] sm:$0xe]
      %v4659 = vld [vmem:[%s3512 + $0x58] sm:$0xf]
      %v4660 = vld [vmem:[%s3512 + $0x5c] sm:$0x1]
      %v4661 = vld [vmem:[%s3512 + $0x60] sm:$0xe]
      %v4662 = vld [vmem:[%s3512 + $0x64] sm:$0xf]
      %v4663 = vld [vmem:[%s3512 + $0x68] sm:$0x1]
      %v4664 = vld [vmem:[%s3512 + $0x6c] sm:$0xe]
      %v4665 = vld [vmem:[%s3512 + $0x70] sm:$0xf]
      %v4666 = vld [vmem:[%s3512 + $0x74] sm:$0x1]
      %v4667 = vld [vmem:[%s3512 + $0x78] sm:$0xe]
      %v4668 = vld [vmem:[%s3512 + $0x7c] sm:$0xf]
      %v4669 = vld [vmem:[%s3512 + $0x80] sm:$0x1]
      %v4670 = vld [vmem:[%s3512 + $0x84] sm:$0xe]
      %v4671 = vld [vmem:[%s3512 + $0x88] sm:$0xf]
      %v4672 = vld [vmem:[%s3512 + $0x8c] sm:$0x1]
      %v4673 = vld [vmem:[%s3512 + $0x90] sm:$0xe]
      %v4674 = vld [vmem:[%s3512 + $0x94] sm:$0xf]
      %v4675 = vld [vmem:[%s3512 + $0x98] sm:$0x1]
      %v4676 = vld [vmem:[%s3512 + $0x9c] sm:$0xe]
      %v4677 = vld [vmem:[%s3512 + $0xa0] sm:$0xf]
      %v4678 = vld [vmem:[%s3512 + $0xa4] sm:$0x1]
      %v4679 = vld [vmem:[%s3512 + $0xa8] sm:$0xe]
      %v4680 = vld [vmem:[%s3512 + $0xac] sm:$0xf]
      %v4681 = vld [vmem:[%s3512 + $0xb0] sm:$0x1]
      %v4682 = vld [vmem:[%s3512 + $0xb4] sm:$0xe]
      %v4683 = vld [vmem:[%s3512 + $0xb8] sm:$0xf]
      %v4684 = vld [vmem:[%s3512 + $0xbc] sm:$0x1]
      %v4733 = vrot.slane %v4637, 5
      %v4734 = vrot.slane %v4733, 4
      %v4735 = vrot.slane %v4638, 5
      %v4736 = vsel %vm1438, %v4734, %v4735
      %v4737 = vrot.slane %v4735, 4
      %v4738 = vrot.slane %v4639, 5
      %v4739 = vsel %vm1438, %v4737, %v4738
      %v4740 = vrot.slane %v4640, 5
      %v4741 = vrot.slane %v4740, 4
      %v4742 = vrot.slane %v4641, 5
      %v4743 = vsel %vm1438, %v4741, %v4742
      %v4744 = vrot.slane %v4742, 4
      %v4745 = vrot.slane %v4642, 5
      %v4746 = vsel %vm1438, %v4744, %v4745
      %v4747 = vrot.slane %v4643, 5
      %v4748 = vrot.slane %v4747, 4
      %v4749 = vrot.slane %v4644, 5
      %v4750 = vsel %vm1438, %v4748, %v4749
      %v4751 = vrot.slane %v4749, 4
      %v4752 = vrot.slane %v4645, 5
      %v4753 = vsel %vm1438, %v4751, %v4752
      %v4754 = vrot.slane %v4646, 5
      %v4755 = vrot.slane %v4754, 4
      %v4756 = vrot.slane %v4647, 5
      %v4757 = vsel %vm1438, %v4755, %v4756
      %v4758 = vrot.slane %v4756, 4
      %v4759 = vrot.slane %v4648, 5
      %v4760 = vsel %vm1438, %v4758, %v4759
      %v4761 = vrot.slane %v4649, 5
      %v4762 = vrot.slane %v4761, 4
      %v4763 = vrot.slane %v4650, 5
      %v4764 = vsel %vm1438, %v4762, %v4763
      %v4765 = vrot.slane %v4763, 4
      %v4766 = vrot.slane %v4651, 5
      %v4767 = vsel %vm1438, %v4765, %v4766
      %v4768 = vrot.slane %v4652, 5
      %v4769 = vrot.slane %v4768, 4
      %v4770 = vrot.slane %v4653, 5
      %v4771 = vsel %vm1438, %v4769, %v4770
      %v4772 = vrot.slane %v4770, 4
      %v4773 = vrot.slane %v4654, 5
      %v4774 = vsel %vm1438, %v4772, %v4773
      %v4775 = vrot.slane %v4655, 5
      %v4776 = vrot.slane %v4775, 4
      %v4777 = vrot.slane %v4656, 5
      %v4778 = vsel %vm1438, %v4776, %v4777
      %v4779 = vrot.slane %v4777, 4
      %v4780 = vrot.slane %v4657, 5
      %v4781 = vsel %vm1438, %v4779, %v4780
      %v4782 = vrot.slane %v4658, 5
      %v4783 = vrot.slane %v4782, 4
      %v4784 = vrot.slane %v4659, 5
      %v4785 = vsel %vm1438, %v4783, %v4784
      %v4786 = vrot.slane %v4784, 4
      %v4787 = vrot.slane %v4660, 5
      %v4788 = vsel %vm1438, %v4786, %v4787
      %v4789 = vrot.slane %v4661, 5
      %v4790 = vrot.slane %v4789, 4
      %v4791 = vrot.slane %v4662, 5
      %v4792 = vsel %vm1438, %v4790, %v4791
      %v4793 = vrot.slane %v4791, 4
      %v4794 = vrot.slane %v4663, 5
      %v4795 = vsel %vm1438, %v4793, %v4794
      %v4796 = vrot.slane %v4664, 5
      %v4797 = vrot.slane %v4796, 4
      %v4798 = vrot.slane %v4665, 5
      %v4799 = vsel %vm1438, %v4797, %v4798
      %v4800 = vrot.slane %v4798, 4
      %v4801 = vrot.slane %v4666, 5
      %v4802 = vsel %vm1438, %v4800, %v4801
      %v4803 = vrot.slane %v4667, 5
      %v4804 = vrot.slane %v4803, 4
      %v4805 = vrot.slane %v4668, 5
      %v4806 = vsel %vm1438, %v4804, %v4805
      %v4807 = vrot.slane %v4805, 4
      %v4808 = vrot.slane %v4669, 5
      %v4809 = vsel %vm1438, %v4807, %v4808
      %v4810 = vrot.slane %v4670, 5
      %v4811 = vrot.slane %v4810, 4
      %v4812 = vrot.slane %v4671, 5
      %v4813 = vsel %vm1438, %v4811, %v4812
      %v4814 = vrot.slane %v4812, 4
      %v4815 = vrot.slane %v4672, 5
      %v4816 = vsel %vm1438, %v4814, %v4815
      %v4817 = vrot.slane %v4673, 5
      %v4818 = vrot.slane %v4817, 4
      %v4819 = vrot.slane %v4674, 5
      %v4820 = vsel %vm1438, %v4818, %v4819
      %v4821 = vrot.slane %v4819, 4
      %v4822 = vrot.slane %v4675, 5
      %v4823 = vsel %vm1438, %v4821, %v4822
      %v4824 = vrot.slane %v4676, 5
      %v4825 = vrot.slane %v4824, 4
      %v4826 = vrot.slane %v4677, 5
      %v4827 = vsel %vm1438, %v4825, %v4826
      %v4828 = vrot.slane %v4826, 4
      %v4829 = vrot.slane %v4678, 5
      %v4830 = vsel %vm1438, %v4828, %v4829
      %v4831 = vrot.slane %v4679, 5
      %v4832 = vrot.slane %v4831, 4
      %v4833 = vrot.slane %v4680, 5
      %v4834 = vsel %vm1438, %v4832, %v4833
      %v4835 = vrot.slane %v4833, 4
      %v4836 = vrot.slane %v4681, 5
      %v4837 = vsel %vm1438, %v4835, %v4836
      %v4838 = vrot.slane %v4682, 5
      %v4839 = vrot.slane %v4838, 4
      %v4840 = vrot.slane %v4683, 5
      %v4841 = vsel %vm1438, %v4839, %v4840
      %v4842 = vrot.slane %v4840, 4
      %v4843 = vrot.slane %v4684, 5
      %v4844 = vsel %vm1438, %v4842, %v4843
      %v4845 = vld [vmem:[%s177] sm:$0xff]
      %v4846 = vld [vmem:[%s177 + $0x8] sm:$0xff]
      %v4847 = vld [vmem:[%s177 + $0x10] sm:$0xff]
      %v4848 = vld [vmem:[%s177 + $0x18] sm:$0xff]
      %v4849 = vld [vmem:[%s177 + $0x20] sm:$0xff]
      %v4850 = vld [vmem:[%s177 + $0x28] sm:$0xff]
      %v4851 = vld [vmem:[%s177 + $0x30] sm:$0xff]
      %v4852 = vld [vmem:[%s177 + $0x38] sm:$0xff]
      %v4853 = vld [vmem:[%s177 + $0x40] sm:$0xff]
      %v4854 = vld [vmem:[%s177 + $0x48] sm:$0xff]
      %v4855 = vld [vmem:[%s177 + $0x50] sm:$0xff]
      %v4856 = vld [vmem:[%s177 + $0x58] sm:$0xff]
      %v4857 = vld [vmem:[%s177 + $0x60] sm:$0xff]
      %v4858 = vld [vmem:[%s177 + $0x68] sm:$0xff]
      %v4859 = vld [vmem:[%s177 + $0x70] sm:$0xff]
      %v4860 = vld [vmem:[%s177 + $0x78] sm:$0xff]
      %v4861 = vld [vmem:[%s177 + $0x80] sm:$0xff]
      %v4862 = vld [vmem:[%s177 + $0x88] sm:$0xff]
      %v4863 = vld [vmem:[%s177 + $0x90] sm:$0xff]
      %v4864 = vld [vmem:[%s177 + $0x98] sm:$0xff]
      %v4865 = vld [vmem:[%s177 + $0xa0] sm:$0xff]
      %v4866 = vld [vmem:[%s177 + $0xa8] sm:$0xff]
      %v4867 = vld [vmem:[%s177 + $0xb0] sm:$0xff]
      %v4868 = vld [vmem:[%s177 + $0xb8] sm:$0xff]
      %v4869 = vld [vmem:[%s177 + $0xc0] sm:$0xff]
      %v4870 = vld [vmem:[%s177 + $0xc8] sm:$0xff]
      %v4871 = vld [vmem:[%s177 + $0xd0] sm:$0xff]
      %v4872 = vld [vmem:[%s177 + $0xd8] sm:$0xff]
      %v4873 = vld [vmem:[%s177 + $0xe0] sm:$0xff]
      %v4874 = vld [vmem:[%s177 + $0xe8] sm:$0xff]
      %v4875 = vld [vmem:[%s177 + $0xf0] sm:$0xff]
      %v4876 = vld [vmem:[%s177 + $0xf8] sm:$0xff]
      %s4877 = scalar_lea.vmem %s1, 512
      %v4878 = vld [vmem:[%s4877] sm:$0xf]
      %v4879 = vld [vmem:[%s4877 + $0x4] sm:$0xf]
      %v4880 = vld [vmem:[%s4877 + $0x8] sm:$0xf]
      %v4881 = vld [vmem:[%s4877 + $0xc] sm:$0xf]
      %v4882 = vld [vmem:[%s4877 + $0x10] sm:$0xf]
      %v4883 = vld [vmem:[%s4877 + $0x14] sm:$0xf]
      %v4884 = vld [vmem:[%s4877 + $0x18] sm:$0xf]
      %v4885 = vld [vmem:[%s4877 + $0x1c] sm:$0xf]
      %v4886 = vld [vmem:[%s4877 + $0x20] sm:$0xf]
      %v4887 = vld [vmem:[%s4877 + $0x24] sm:$0xf]
      %v4888 = vld [vmem:[%s4877 + $0x28] sm:$0xf]
      %v4889 = vld [vmem:[%s4877 + $0x2c] sm:$0xf]
      %v4890 = vld [vmem:[%s4877 + $0x30] sm:$0xf]
      %v4891 = vld [vmem:[%s4877 + $0x34] sm:$0xf]
      %v4892 = vld [vmem:[%s4877 + $0x38] sm:$0xf]
      %v4893 = vld [vmem:[%s4877 + $0x3c] sm:$0xf]
      %v4894 = vunpack.c.l.b16 %v4736
      %v4895 = vunpack.c.l.b16 %v4739
      %v4896 = vunpack.c.l.b16 %v4743
      %v4897 = vunpack.c.l.b16 %v4746
      %v4898 = vunpack.c.l.b16 %v4750
      %v4899 = vunpack.c.l.b16 %v4753
      %v4900 = vunpack.c.l.b16 %v4757
      %v4901 = vunpack.c.l.b16 %v4760
      %v4902 = vunpack.c.l.b16 %v4764
      %v4903 = vunpack.c.l.b16 %v4767
      %v4904 = vunpack.c.l.b16 %v4771
      %v4905 = vunpack.c.l.b16 %v4774
      %v4906 = vunpack.c.l.b16 %v4778
      %v4907 = vunpack.c.l.b16 %v4781
      %v4908 = vunpack.c.l.b16 %v4785
      %v4909 = vunpack.c.l.b16 %v4788
      %v4910 = vunpack.c.l.b16 %v4792
      %v4911 = vunpack.c.l.b16 %v4795
      %v4912 = vunpack.c.l.b16 %v4799
      %v4913 = vunpack.c.l.b16 %v4802
      %v4914 = vunpack.c.l.b16 %v4806
      %v4915 = vunpack.c.l.b16 %v4809
      %v4916 = vunpack.c.l.b16 %v4813
      %v4917 = vunpack.c.l.b16 %v4816
      %v4918 = vunpack.c.l.b16 %v4820
      %v4919 = vunpack.c.l.b16 %v4823
      %v4920 = vunpack.c.l.b16 %v4827
      %v4921 = vunpack.c.l.b16 %v4830
      %v4922 = vunpack.c.l.b16 %v4834
      %v4923 = vunpack.c.l.b16 %v4837
      %v4924 = vunpack.c.l.b16 %v4841
      %v4925 = vunpack.c.l.b16 %v4844
      %v4926 = vpack.c.b16 %v4895, %v4894
      %v4927 = vpack.c.b16 %v4897, %v4896
      %v4928 = vpack.c.b16 %v4899, %v4898
      %v4929 = vpack.c.b16 %v4901, %v4900
      %v4930 = vpack.c.b16 %v4903, %v4902
      %v4931 = vpack.c.b16 %v4905, %v4904
      %v4932 = vpack.c.b16 %v4907, %v4906
      %v4933 = vpack.c.b16 %v4909, %v4908
      %v4934 = vpack.c.b16 %v4911, %v4910
      %v4935 = vpack.c.b16 %v4913, %v4912
      %v4936 = vpack.c.b16 %v4915, %v4914
      %v4937 = vpack.c.b16 %v4917, %v4916
      %v4938 = vpack.c.b16 %v4919, %v4918
      %v4939 = vpack.c.b16 %v4921, %v4920
      %v4940 = vpack.c.b16 %v4923, %v4922
      %v4941 = vpack.c.b16 %v4925, %v4924
      %v4974 = vunpack.c.l.b16 %v4878
      %v4975 = vunpack.c.l.b16 %v4879
      %v4976 = vunpack.c.l.b16 %v4880
      %v4977 = vunpack.c.l.b16 %v4881
      %v4978 = vunpack.c.l.b16 %v4882
      %v4979 = vunpack.c.l.b16 %v4883
      %v4980 = vunpack.c.l.b16 %v4884
      %v4981 = vunpack.c.l.b16 %v4885
      %v4982 = vunpack.c.l.b16 %v4886
      %v4983 = vunpack.c.l.b16 %v4887
      %v4984 = vunpack.c.l.b16 %v4888
      %v4985 = vunpack.c.l.b16 %v4889
      %v4986 = vunpack.c.l.b16 %v4890
      %v4987 = vunpack.c.l.b16 %v4891
      %v4988 = vunpack.c.l.b16 %v4892
      %v4989 = vunpack.c.l.b16 %v4893
      %v4990 = vpack.c.b16 %v4975, %v4974
      %v4991 = vpack.c.b16 %v4977, %v4976
      %v4992 = vpack.c.b16 %v4979, %v4978
      %v4993 = vpack.c.b16 %v4981, %v4980
      %v4994 = vpack.c.b16 %v4983, %v4982
      %v4995 = vpack.c.b16 %v4985, %v4984
      %v4996 = vpack.c.b16 %v4987, %v4986
      %v4997 = vpack.c.b16 %v4989, %v4988
      %5006 = vmatpush.bf16.msra.mxu0 %v4997
      %5007 = vmatpush.bf16.msra.mxu0 %v4996
      %5008 = vmatpush.bf16.msra.mxu0 %v4995
      %5009 = vmatpush.bf16.msra.mxu0 %v4994
      %5010 = vmatpush.bf16.msra.mxu0 %v4993
      %5011 = vmatpush.bf16.msra.mxu0 %v4992
      %5012 = vmatpush.bf16.msra.mxu0 %v4991
      %5013 = vmatpush.bf16.msra.mxu0 %v4990
      %5014 = vmatmul.bf16.gmra.mxu0 %v4926
      %v5015 = vpop.f32.mrf.mxu0
      %v5016 = vadd.f32 0.0, %v5015
      %v5017 = vpop.f32.mrf.mxu0
      %v5018 = vadd.f32 0.0, %v5017
      %5019 = vmatmul.bf16.gmra.mxu0 %v4927
      %v5020 = vpop.f32.mrf.mxu0
      %v5021 = vadd.f32 0.0, %v5020
      %v5022 = vpop.f32.mrf.mxu0
      %v5023 = vadd.f32 0.0, %v5022
      %5024 = vmatmul.bf16.gmra.mxu0 %v4928
      %v5025 = vpop.f32.mrf.mxu0
      %v5026 = vadd.f32 0.0, %v5025
      %v5027 = vpop.f32.mrf.mxu0
      %v5028 = vadd.f32 0.0, %v5027
      %5029 = vmatmul.bf16.gmra.mxu0 %v4929
      %v5030 = vpop.f32.mrf.mxu0
      %v5031 = vadd.f32 0.0, %v5030
      %v5032 = vpop.f32.mrf.mxu0
      %v5033 = vadd.f32 0.0, %v5032
      %5034 = vmatmul.bf16.gmra.mxu0 %v4930
      %v5035 = vpop.f32.mrf.mxu0
      %v5036 = vadd.f32 0.0, %v5035
      %v5037 = vpop.f32.mrf.mxu0
      %v5038 = vadd.f32 0.0, %v5037
      %5039 = vmatmul.bf16.gmra.mxu0 %v4931
      %v5040 = vpop.f32.mrf.mxu0
      %v5041 = vadd.f32 0.0, %v5040
      %v5042 = vpop.f32.mrf.mxu0
      %v5043 = vadd.f32 0.0, %v5042
      %5044 = vmatmul.bf16.gmra.mxu0 %v4932
      %v5045 = vpop.f32.mrf.mxu0
      %v5046 = vadd.f32 0.0, %v5045
      %v5047 = vpop.f32.mrf.mxu0
      %v5048 = vadd.f32 0.0, %v5047
      %5049 = vmatmul.bf16.gmra.mxu0 %v4933
      %v5050 = vpop.f32.mrf.mxu0
      %v5051 = vadd.f32 0.0, %v5050
      %v5052 = vpop.f32.mrf.mxu0
      %v5053 = vadd.f32 0.0, %v5052
      %5054 = vmatmul.bf16.gmra.mxu0 %v4934
      %v5055 = vpop.f32.mrf.mxu0
      %v5056 = vadd.f32 0.0, %v5055
      %v5057 = vpop.f32.mrf.mxu0
      %v5058 = vadd.f32 0.0, %v5057
      %5059 = vmatmul.bf16.gmra.mxu0 %v4935
      %v5060 = vpop.f32.mrf.mxu0
      %v5061 = vadd.f32 0.0, %v5060
      %v5062 = vpop.f32.mrf.mxu0
      %v5063 = vadd.f32 0.0, %v5062
      %5064 = vmatmul.bf16.gmra.mxu0 %v4936
      %v5065 = vpop.f32.mrf.mxu0
      %v5066 = vadd.f32 0.0, %v5065
      %v5067 = vpop.f32.mrf.mxu0
      %v5068 = vadd.f32 0.0, %v5067
      %5069 = vmatmul.bf16.gmra.mxu0 %v4937
      %v5070 = vpop.f32.mrf.mxu0
      %v5071 = vadd.f32 0.0, %v5070
      %v5072 = vpop.f32.mrf.mxu0
      %v5073 = vadd.f32 0.0, %v5072
      %5074 = vmatmul.bf16.gmra.mxu0 %v4938
      %v5075 = vpop.f32.mrf.mxu0
      %v5076 = vadd.f32 0.0, %v5075
      %v5077 = vpop.f32.mrf.mxu0
      %v5078 = vadd.f32 0.0, %v5077
      %5079 = vmatmul.bf16.gmra.mxu0 %v4939
      %v5080 = vpop.f32.mrf.mxu0
      %v5081 = vadd.f32 0.0, %v5080
      %v5082 = vpop.f32.mrf.mxu0
      %v5083 = vadd.f32 0.0, %v5082
      %5084 = vmatmul.bf16.gmra.mxu0 %v4940
      %v5085 = vpop.f32.mrf.mxu0
      %v5086 = vadd.f32 0.0, %v5085
      %v5087 = vpop.f32.mrf.mxu0
      %v5088 = vadd.f32 0.0, %v5087
      %5089 = vmatmul.bf16.gmra.mxu0 %v4941
      %v5090 = vpop.f32.mrf.mxu0
      %v5091 = vadd.f32 0.0, %v5090
      %v5092 = vpop.f32.mrf.mxu0
      %v5093 = vadd.f32 0.0, %v5092
      %5094 = vdwg.mxu0
      %v5095 = vadd.f32 %v4845, %v5016
      %v5096 = vadd.f32 %v4846, %v5018
      %v5097 = vadd.f32 %v4847, %v5021
      %v5098 = vadd.f32 %v4848, %v5023
      %v5099 = vadd.f32 %v4849, %v5026
      %v5100 = vadd.f32 %v4850, %v5028
      %v5101 = vadd.f32 %v4851, %v5031
      %v5102 = vadd.f32 %v4852, %v5033
      %v5103 = vadd.f32 %v4853, %v5036
      %v5104 = vadd.f32 %v4854, %v5038
      %v5105 = vadd.f32 %v4855, %v5041
      %v5106 = vadd.f32 %v4856, %v5043
      %v5107 = vadd.f32 %v4857, %v5046
      %v5108 = vadd.f32 %v4858, %v5048
      %v5109 = vadd.f32 %v4859, %v5051
      %v5110 = vadd.f32 %v4860, %v5053
      %v5111 = vadd.f32 %v4861, %v5056
      %v5112 = vadd.f32 %v4862, %v5058
      %v5113 = vadd.f32 %v4863, %v5061
      %v5114 = vadd.f32 %v4864, %v5063
      %v5115 = vadd.f32 %v4865, %v5066
      %v5116 = vadd.f32 %v4866, %v5068
      %v5117 = vadd.f32 %v4867, %v5071
      %v5118 = vadd.f32 %v4868, %v5073
      %v5119 = vadd.f32 %v4869, %v5076
      %v5120 = vadd.f32 %v4870, %v5078
      %v5121 = vadd.f32 %v4871, %v5081
      %v5122 = vadd.f32 %v4872, %v5083
      %v5123 = vadd.f32 %v4873, %v5086
      %v5124 = vadd.f32 %v4874, %v5088
      %v5125 = vadd.f32 %v4875, %v5091
      %v5126 = vadd.f32 %v4876, %v5093
      %5127 = vst [vmem:[%s177] sm:$0xff] %v5095
      %5128 = vst [vmem:[%s177 + $0x8] sm:$0xff] %v5096
      %5129 = vst [vmem:[%s177 + $0x10] sm:$0xff] %v5097
      %5130 = vst [vmem:[%s177 + $0x18] sm:$0xff] %v5098
      %5131 = vst [vmem:[%s177 + $0x20] sm:$0xff] %v5099
      %5132 = vst [vmem:[%s177 + $0x28] sm:$0xff] %v5100
      %5133 = vst [vmem:[%s177 + $0x30] sm:$0xff] %v5101
      %5134 = vst [vmem:[%s177 + $0x38] sm:$0xff] %v5102
      %5135 = vst [vmem:[%s177 + $0x40] sm:$0xff] %v5103
      %5136 = vst [vmem:[%s177 + $0x48] sm:$0xff] %v5104
      %5137 = vst [vmem:[%s177 + $0x50] sm:$0xff] %v5105
      %5138 = vst [vmem:[%s177 + $0x58] sm:$0xff] %v5106
      %5139 = vst [vmem:[%s177 + $0x60] sm:$0xff] %v5107
      %5140 = vst [vmem:[%s177 + $0x68] sm:$0xff] %v5108
      %5141 = vst [vmem:[%s177 + $0x70] sm:$0xff] %v5109
      %5142 = vst [vmem:[%s177 + $0x78] sm:$0xff] %v5110
      %5143 = vst [vmem:[%s177 + $0x80] sm:$0xff] %v5111
      %5144 = vst [vmem:[%s177 + $0x88] sm:$0xff] %v5112
      %5145 = vst [vmem:[%s177 + $0x90] sm:$0xff] %v5113
      %5146 = vst [vmem:[%s177 + $0x98] sm:$0xff] %v5114
      %5147 = vst [vmem:[%s177 + $0xa0] sm:$0xff] %v5115
      %5148 = vst [vmem:[%s177 + $0xa8] sm:$0xff] %v5116
      %5149 = vst [vmem:[%s177 + $0xb0] sm:$0xff] %v5117
      %5150 = vst [vmem:[%s177 + $0xb8] sm:$0xff] %v5118
      %5151 = vst [vmem:[%s177 + $0xc0] sm:$0xff] %v5119
      %5152 = vst [vmem:[%s177 + $0xc8] sm:$0xff] %v5120
      %5153 = vst [vmem:[%s177 + $0xd0] sm:$0xff] %v5121
      %5154 = vst [vmem:[%s177 + $0xd8] sm:$0xff] %v5122
      %5155 = vst [vmem:[%s177 + $0xe0] sm:$0xff] %v5123
      %5156 = vst [vmem:[%s177 + $0xe8] sm:$0xff] %v5124
      %5157 = vst [vmem:[%s177 + $0xf0] sm:$0xff] %v5125
      %5158 = vst [vmem:[%s177 + $0xf8] sm:$0xff] %v5126
      %v5159 = vld [vmem:[%s177] sm:$0xff]
      %v5160 = vld [vmem:[%s177 + $0x8] sm:$0xff]
      %v5161 = vld [vmem:[%s177 + $0x10] sm:$0xff]
      %v5162 = vld [vmem:[%s177 + $0x18] sm:$0xff]
      %v5163 = vld [vmem:[%s177 + $0x20] sm:$0xff]
      %v5164 = vld [vmem:[%s177 + $0x28] sm:$0xff]
      %v5165 = vld [vmem:[%s177 + $0x30] sm:$0xff]
      %v5166 = vld [vmem:[%s177 + $0x38] sm:$0xff]
      %v5167 = vld [vmem:[%s177 + $0x40] sm:$0xff]
      %v5168 = vld [vmem:[%s177 + $0x48] sm:$0xff]
      %v5169 = vld [vmem:[%s177 + $0x50] sm:$0xff]
      %v5170 = vld [vmem:[%s177 + $0x58] sm:$0xff]
      %v5171 = vld [vmem:[%s177 + $0x60] sm:$0xff]
      %v5172 = vld [vmem:[%s177 + $0x68] sm:$0xff]
      %v5173 = vld [vmem:[%s177 + $0x70] sm:$0xff]
      %v5174 = vld [vmem:[%s177 + $0x78] sm:$0xff]
      %v5175 = vld [vmem:[%s177 + $0x80] sm:$0xff]
      %v5176 = vld [vmem:[%s177 + $0x88] sm:$0xff]
      %v5177 = vld [vmem:[%s177 + $0x90] sm:$0xff]
      %v5178 = vld [vmem:[%s177 + $0x98] sm:$0xff]
      %v5179 = vld [vmem:[%s177 + $0xa0] sm:$0xff]
      %v5180 = vld [vmem:[%s177 + $0xa8] sm:$0xff]
      %v5181 = vld [vmem:[%s177 + $0xb0] sm:$0xff]
      %v5182 = vld [vmem:[%s177 + $0xb8] sm:$0xff]
      %v5183 = vld [vmem:[%s177 + $0xc0] sm:$0xff]
      %v5184 = vld [vmem:[%s177 + $0xc8] sm:$0xff]
      %v5185 = vld [vmem:[%s177 + $0xd0] sm:$0xff]
      %v5186 = vld [vmem:[%s177 + $0xd8] sm:$0xff]
      %v5187 = vld [vmem:[%s177 + $0xe0] sm:$0xff]
      %v5188 = vld [vmem:[%s177 + $0xe8] sm:$0xff]
      %v5189 = vld [vmem:[%s177 + $0xf0] sm:$0xff]
      %v5190 = vld [vmem:[%s177 + $0xf8] sm:$0xff]
      %v5191 = vadd.f32 %v5159, %v5160
      %v5192 = vadd.f32 %v5191, %v5161
      %v5193 = vadd.f32 %v5192, %v5162
      %v5194 = vadd.f32 %v5193, %v5163
      %v5195 = vadd.f32 %v5194, %v5164
      %v5196 = vadd.f32 %v5195, %v5165
      %v5197 = vadd.f32 %v5196, %v5166
      %v5198 = vadd.f32 %v5197, %v5167
      %v5199 = vadd.f32 %v5198, %v5168
      %v5200 = vadd.f32 %v5199, %v5169
      %v5201 = vadd.f32 %v5200, %v5170
      %v5202 = vadd.f32 %v5201, %v5171
      %v5203 = vadd.f32 %v5202, %v5172
      %v5204 = vadd.f32 %v5203, %v5173
      %v5205 = vadd.f32 %v5204, %v5174
      %v5206 = vadd.f32 %v5205, %v5175
      %v5207 = vadd.f32 %v5206, %v5176
      %v5208 = vadd.f32 %v5207, %v5177
      %v5209 = vadd.f32 %v5208, %v5178
      %v5210 = vadd.f32 %v5209, %v5179
      %v5211 = vadd.f32 %v5210, %v5180
      %v5212 = vadd.f32 %v5211, %v5181
      %v5213 = vadd.f32 %v5212, %v5182
      %v5214 = vadd.f32 %v5213, %v5183
      %v5215 = vadd.f32 %v5214, %v5184
      %v5216 = vadd.f32 %v5215, %v5185
      %v5217 = vadd.f32 %v5216, %v5186
      %v5218 = vadd.f32 %v5217, %v5187
      %v5219 = vadd.f32 %v5218, %v5188
      %v5220 = vadd.f32 %v5219, %v5189
      %v5221 = vadd.f32 %v5220, %v5190
      %v5222 = vrot.slane %v5221, 4
      %v5223 = vadd.f32 %v5221, %v5222
      %v5224 = vrot.slane %v5223, 2
      %v5225 = vadd.f32 %v5223, %v5224
      %v5226 = vrot.slane %v5225, 1
      %v5227 = vadd.f32 %v5225, %v5226
      %v5228 = vmul.f32 %v5159, %v5159
      %v5229 = vmul.f32 %v5160, %v5160
      %v5230 = vmul.f32 %v5161, %v5161
      %v5231 = vmul.f32 %v5162, %v5162
      %v5232 = vmul.f32 %v5163, %v5163
      %v5233 = vmul.f32 %v5164, %v5164
      %v5234 = vmul.f32 %v5165, %v5165
      %v5235 = vmul.f32 %v5166, %v5166
      %v5236 = vmul.f32 %v5167, %v5167
      %v5237 = vmul.f32 %v5168, %v5168
      %v5238 = vmul.f32 %v5169, %v5169
      %v5239 = vmul.f32 %v5170, %v5170
      %v5240 = vmul.f32 %v5171, %v5171
      %v5241 = vmul.f32 %v5172, %v5172
      %v5242 = vmul.f32 %v5173, %v5173
      %v5243 = vmul.f32 %v5174, %v5174
      %v5244 = vmul.f32 %v5175, %v5175
      %v5245 = vmul.f32 %v5176, %v5176
      %v5246 = vmul.f32 %v5177, %v5177
      %v5247 = vmul.f32 %v5178, %v5178
      %v5248 = vmul.f32 %v5179, %v5179
      %v5249 = vmul.f32 %v5180, %v5180
      %v5250 = vmul.f32 %v5181, %v5181
      %v5251 = vmul.f32 %v5182, %v5182
      %v5252 = vmul.f32 %v5183, %v5183
      %v5253 = vmul.f32 %v5184, %v5184
      %v5254 = vmul.f32 %v5185, %v5185
      %v5255 = vmul.f32 %v5186, %v5186
      %v5256 = vmul.f32 %v5187, %v5187
      %v5257 = vmul.f32 %v5188, %v5188
      %v5258 = vmul.f32 %v5189, %v5189
      %v5259 = vmul.f32 %v5190, %v5190
      %v5260 = vadd.f32 %v5228, %v5229
      %v5261 = vadd.f32 %v5260, %v5230
      %v5262 = vadd.f32 %v5261, %v5231
      %v5263 = vadd.f32 %v5262, %v5232
      %v5264 = vadd.f32 %v5263, %v5233
      %v5265 = vadd.f32 %v5264, %v5234
      %v5266 = vadd.f32 %v5265, %v5235
      %v5267 = vadd.f32 %v5266, %v5236
      %v5268 = vadd.f32 %v5267, %v5237
      %v5269 = vadd.f32 %v5268, %v5238
      %v5270 = vadd.f32 %v5269, %v5239
      %v5271 = vadd.f32 %v5270, %v5240
      %v5272 = vadd.f32 %v5271, %v5241
      %v5273 = vadd.f32 %v5272, %v5242
      %v5274 = vadd.f32 %v5273, %v5243
      %v5275 = vadd.f32 %v5274, %v5244
      %v5276 = vadd.f32 %v5275, %v5245
      %v5277 = vadd.f32 %v5276, %v5246
      %v5278 = vadd.f32 %v5277, %v5247
      %v5279 = vadd.f32 %v5278, %v5248
      %v5280 = vadd.f32 %v5279, %v5249
      %v5281 = vadd.f32 %v5280, %v5250
      %v5282 = vadd.f32 %v5281, %v5251
      %v5283 = vadd.f32 %v5282, %v5252
      %v5284 = vadd.f32 %v5283, %v5253
      %v5285 = vadd.f32 %v5284, %v5254
      %v5286 = vadd.f32 %v5285, %v5255
      %v5287 = vadd.f32 %v5286, %v5256
      %v5288 = vadd.f32 %v5287, %v5257
      %v5289 = vadd.f32 %v5288, %v5258
      %v5290 = vadd.f32 %v5289, %v5259
      %v5291 = vrot.slane %v5290, 4
      %v5292 = vadd.f32 %v5290, %v5291
      %v5293 = vrot.slane %v5292, 2
      %v5294 = vadd.f32 %v5292, %v5293
      %v5295 = vrot.slane %v5294, 1
      %v5296 = vadd.f32 %v5294, %v5295
      %vm5297 = vcmask 1040384
      %v5298 = vsel %vm5297, %v5227, %v5296
      %5299 = vst [vmem:[%s181] sm:$0x3] %v5298
      %p5300 = scmp.lt.s32.totalorder %s15, 1
      %s5301 = scalar_select %p5300, %s15, 1
      %s5302 = smul.addr %s5301, 32
      %s5303 = smul.addr %s5302, 8
      %s5304 = scalar_lea.vmem %s2, %s5303
      %p5305 = scmp.lt.s32.totalorder %s15, 1
      %s5306 = scalar_select %p5305, %s15, 1
      %s5307 = smul.addr %s5306, 2
      %s5308 = scalar_lea.vmem %s3, %s5307
      // Predicated region
      $region29: #{basic_block_forward.4} parent=27 // pred_check
        %p5309 = pneg %p80
      $region30: #{basic_block_forward.4} parent=27 // pred_check_branch
        %5311 = sbr.rel (%p5309) target = $region32
      $region31: #{basic_block_forward.4} parent=27 // pred_region
        _
      $region32: #{basic_block_forward.4} parent=27 // pred_fallthru
        _
      // Predicated region
      $region33: #{basic_block_forward.4} parent=27 // pred_check
        %p5312 = pneg %p106
      $region34: #{basic_block_forward.4} parent=27 // pred_check_branch
        %5314 = sbr.rel (%p5312) target = $region36
      $region35: #{basic_block_forward.4} parent=27 // pred_region
        _
      $region36: #{basic_block_forward.4} parent=27 // pred_fallthru
        _
    $region28: #{basic_block_forward.4} parent=5 // pred_fallthru
      _
    %p5315 = scmp.le.s32.totalorder 2, %s10
    // Predicated region
    $region37: #{basic_block_forward.4} parent=5 // pred_check
      %p5316 = pneg %p5315
    $region38: #{basic_block_forward.4} parent=5 // pred_check_branch
      %5318 = sbr.rel (%p5316) target = $region40
    $region39: #{basic_block_forward.4} parent=5 // pred_region
      %s5319 = ssub.s32 %s10, 2
      // Predicated region
      $region41: #{basic_block_forward.4} parent=39 // pred_check
        %p5320 = pneg %p86
      $region42: #{basic_block_forward.4} parent=39 // pred_check_branch
        %5322 = sbr.rel (%p5320) target = $region44
      $region43: #{basic_block_forward.4} parent=39 // pred_region
        %p5323 = scmp.lt.s32.totalorder %s16, 1
        %s5324 = scalar_select %p5323, %s16, 1
        %s5325 = smul.addr %s5324, 32
        %s5326 = smul.addr %s5325, 8
        %s5327 = scalar_lea.vmem %s2, %s5326
      $region44: #{basic_block_forward.4} parent=39 // pred_fallthru
        _
      // Predicated region
      $region45: #{basic_block_forward.4} parent=39 // pred_check
        %p5328 = pneg %p112
      $region46: #{basic_block_forward.4} parent=39 // pred_check_branch
        %5330 = sbr.rel (%p5328) target = $region48
      $region47: #{basic_block_forward.4} parent=39 // pred_region
        %p5331 = scmp.lt.s32.totalorder %s16, 1
        %s5332 = scalar_select %p5331, %s16, 1
        %s5333 = smul.addr %s5332, 2
        %s5334 = scalar_lea.vmem %s3, %s5333
      $region48: #{basic_block_forward.4} parent=39 // pred_fallthru
        _
    $region40: #{basic_block_forward.4} parent=5 // pred_fallthru
      _
  $region6: #{basic_block_forward.4} parent=0 // loop_footer
    %s14 = sadd.s32 1, %s10
  $region7: #{basic_block_forward.4} parent=0 // loop_footer_branch
    %9 = sbr.rel target = $region3
  $region8: #{basic_block_forward.4} parent=0 // loop_exit
    _

</llo_original>
